<compile_context>
chip_gen: v6e
topology: v6e:2x2x1
jax: 0.10.0
libtpu: 0.0.40
codegen_flags: <defaults>
</compile_context>

<pallas_src>
import jax
import jax.numpy as jnp
from jax.experimental import pallas as pl
from jax.experimental.pallas import tpu as pltpu

OBS_DIM = 97
ACTION_DIM = 9
MAX_ACTION = 0.397
HIDDEN = (512, 512, 256, 128)
EPS = 1e-5

OBS_PAD = 128    # 97 -> 128
ACT_PAD = 128    # 9  -> 128

_DIMS = (OBS_DIM,) + HIDDEN + (ACTION_DIM,)
_DIMS_PAD = (OBS_PAD,) + HIDDEN + (ACT_PAD,)

# Static lane offsets of each padded bias segment inside the concatenated bias
# array: [0, 512, 1024, 1280, 1408] (all 128-aligned), total 1536 lanes.
_BIAS_OFFS = []
_off = 0
for _d in _DIMS_PAD[1:]:
    _BIAS_OFFS.append(_off)
    _off += _d
_BIAS_TOTAL = _off  # 1536


def _bc_kernel(x_ref, w1, w2, w3, w4, w5, b_ref, o_ref):
    """Fused 5-layer MLP forward for one batch tile.

    BN is pre-folded into each Linear; matmuls are bf16 x bf16 -> f32 (MXU),
    bias/ReLU epilogue in f32, recast to bf16 as the next matmul's LHS.
    Final tanh in f32, stored as bf16.
    """
    h = x_ref[...]                                          # (TM, 128) bf16

    def _bias(li):
        off = _BIAS_OFFS[li]
        return b_ref[:, off:off + _DIMS_PAD[li + 1]]        # (1, d_out) f32

    def _layer(h, w, li):
        acc = jnp.dot(h, w[...], preferred_element_type=jnp.float32) + _bias(li)
        return jnp.maximum(acc, 0.0).astype(jnp.bfloat16)

    h = _layer(h, w1, 0)
    h = _layer(h, w2, 1)
    h = _layer(h, w3, 2)
    h = _layer(h, w4, 3)

    acc = jnp.dot(h, w5[...], preferred_element_type=jnp.float32) + _bias(4)
    o_ref[...] = (MAX_ACTION * jnp.tanh(acc)).astype(jnp.bfloat16)


def _round_up(n, m):
    return ((n + m - 1) // m) * m


def _choose_tiling(B, tm):
    """Pick (B_pad, TM, grid): TM multiple of 16, grid >= 2 when batch allows
    (v7x megacore), tiles balanced to minimize padded rows."""
    b16 = _round_up(B, 16)
    tm_cap = min(tm, b16)
    if tm_cap >= b16 and b16 >= 32:
        # grid would be 1 -> split in two so v7x's second TC isn't idle.
        tm_cap = _round_up(pl.cdiv(b16, 2), 16)
    grid = pl.cdiv(b16, tm_cap)
    tm_final = _round_up(pl.cdiv(b16, grid), 16)  # balanced tiles, minimal pad
    b_pad = grid * tm_final
    return b_pad, tm_final, grid


def _build_call(B_pad, TM, grid, *, buffered):
    x_spec = pl.BlockSpec((TM, OBS_PAD), lambda i: (i, 0))
    out_spec = pl.BlockSpec((TM, ACT_PAD), lambda i: (i, 0))

    def _resident(shape):
        # Constant index_map -> fetched once, stays VMEM-resident.
        if buffered:
            return pl.BlockSpec(shape, lambda i: (0, 0),
                                pipeline_mode=pl.Buffered(1))
        return pl.BlockSpec(shape, lambda i: (0, 0))

    w_specs = [_resident((_DIMS_PAD[li], _DIMS_PAD[li + 1])) for li in range(5)]
    b_spec = _resident((1, _BIAS_TOTAL))

    mac = sum(_DIMS_PAD[i] * _DIMS_PAD[i + 1] for i in range(5))   # 507904
    weight_bytes = 2 * mac                                          # bf16
    cost = pl.CostEstimate(
        flops=2 * B_pad * mac,
        transcendentals=B_pad * ACT_PAD,
        bytes_accessed=(weight_bytes + 4 * _BIAS_TOTAL
                        + 2 * B_pad * OBS_PAD + 2 * B_pad * ACT_PAD),
    )

    return pl.pallas_call(
        _bc_kernel,
        out_shape=jax.ShapeDtypeStruct((B_pad, ACT_PAD), jnp.bfloat16),
        grid=(grid,),
        in_specs=[x_spec] + w_specs + [b_spec],
        out_specs=out_spec,
        compiler_params=pltpu.CompilerParams(
            dimension_semantics=("parallel",),
        ),
        cost_estimate=cost,
    )


def bc_forward(x, kernel_params, *, tm=512):
    """x: (B, OBS_DIM) float32. Returns (B, ACTION_DIM) float32."""
    B = x.shape[0]
    B_pad, TM, grid = _choose_tiling(B, tm)

    # Zero-pad obs features to 128 and cast to bf16 (single wrapper op).
    x_p = jnp.zeros((B_pad, OBS_PAD), jnp.bfloat16)
    x_p = x_p.at[:B, :OBS_DIM].set(x.astype(jnp.bfloat16))

    try:
        out = _build_call(B_pad, TM, grid, buffered=True)(x_p, *kernel_params)
    except Exception:
        # Fallback for jax versions without BlockSpec(pipeline_mode=...);
        # default double-buffered resident params (~2 MiB VMEM, still tiny).
        out = _build_call(B_pad, TM, grid, buffered=False)(x_p, *kernel_params)

    return out[:B, :ACTION_DIM].astype(jnp.float32)


def make_raw_params(key):
    """Deterministic raw (un-folded, un-padded) params matching the PyTorch
    module: per layer dict with Linear w/b and (layers 1-4) BN gamma/beta and
    non-trivial running mean/var (inference semantics)."""
    keys = jax.random.split(key, 5 * 4)
    ki = 0
    layers = []
    for li in range(5):
        d_in, d_out = _DIMS[li], _DIMS[li + 1]
        w = 0.05 * jax.random.normal(keys[ki], (d_in, d_out), jnp.float32); ki += 1
        b = 0.05 * jax.random.normal(keys[ki], (d_out,), jnp.float32); ki += 1
        layer = {"w": w, "b": b}
        if li < 4:
            layer["gamma"] = 1.0 + 0.1 * jax.random.normal(
                keys[ki], (d_out,), jnp.float32); ki += 1
            layer["beta"] = 0.1 * jax.random.normal(
                keys[ki], (d_out,), jnp.float32); ki += 1
            layer["mean"] = 0.05 * jnp.sin(jnp.arange(d_out, dtype=jnp.float32))
            layer["var"] = 1.0 + 0.25 * jnp.cos(
                jnp.arange(d_out, dtype=jnp.float32)) ** 2
        else:
            ki += 2  # deterministic key consumption
        layers.append(layer)
    return layers


def fold_params(raw_layers):
    """Fold BN into each Linear, pad to TPU-friendly dims, cast weights to bf16,
    concatenate biases.  Returns (w1..w5 bf16, bias_cat f32 (1,1536))."""
    ws, bs = [], []
    for li, layer in enumerate(raw_layers):
        d_in, d_out = _DIMS[li], _DIMS[li + 1]
        d_in_p, d_out_p = _DIMS_PAD[li], _DIMS_PAD[li + 1]
        w, b = layer["w"], layer["b"]
        if li < 4:
            scale = layer["gamma"] / jnp.sqrt(layer["var"] + EPS)
            shift = layer["beta"] - layer["mean"] * scale
            w = w * scale[None, :]
            b = b * scale + shift
        w_p = jnp.zeros((d_in_p, d_out_p), jnp.float32).at[:d_in, :d_out].set(w)
        b_p = jnp.zeros((d_out_p,), jnp.float32).at[:d_out].set(b)
        ws.append(w_p.astype(jnp.bfloat16))   # bf16 matmul operand
        bs.append(b_p)                        # f32 bias (added in f32 acc)
    bias_cat = jnp.concatenate(bs)[None, :]   # (1, 1536) f32
    return tuple(ws) + (bias_cat,)


def bc_reference(x, raw_layers):
    """Pure-JAX f32 reference with the original Linear -> BN -> ReLU math."""
    h = x
    for li, layer in enumerate(raw_layers):
        h = h @ layer["w"] + layer["b"]
        if li < 4:
            h = (h - layer["mean"]) / jnp.sqrt(layer["var"] + EPS)
            h = h * layer["gamma"] + layer["beta"]
            h = jnp.maximum(h, 0.0)
    return MAX_ACTION * jnp.tanh(h)


if __name__ == "__main__":
    key = jax.random.PRNGKey(0)
    k_param, k_x = jax.random.split(key)

    raw = make_raw_params(k_param)
    kernel_params = fold_params(raw)

    # Small-batch path (grid = 1).
    B = 8
    x = jax.random.normal(k_x, (B, OBS_DIM), jnp.float32)
    out = jax.block_until_ready(bc_forward(x, kernel_params))
    ref = bc_reference(x, raw)
    assert out.shape == (B, ACTION_DIM)
    assert bool(jnp.all(jnp.isfinite(out)))
    max_err = float(jnp.max(jnp.abs(out - ref)))
    # bf16 matmuls + bf16 output store + BN folding vs full-f32 reference.
    assert max_err < 3e-2, f"mismatch vs reference (B=8): max abs err {max_err}"

    # Multi-tile path (grid >= 2, exercises megacore sharding + row padding).
    B2 = 40
    x2 = jax.random.normal(jax.random.PRNGKey(1), (B2, OBS_DIM), jnp.float32)
    out2 = jax.block_until_ready(bc_forward(x2, kernel_params))
    ref2 = bc_reference(x2, raw)
    assert out2.shape == (B2, ACTION_DIM)
    max_err2 = float(jnp.max(jnp.abs(out2 - ref2)))
    assert max_err2 < 3e-2, f"mismatch vs reference (B=40): max abs err {max_err2}"

    print("KERNEL_OK")
</pallas_src>

<mosaic_0001>
module attributes {stable_mosaic.version = 11 : i64} {
  func.func @_bc_kernel(%arg0: i32, %arg1: memref<16x128xbf16, #tpu.memory_space<vmem>>, %arg2: memref<128x512xbf16, #tpu.memory_space<vmem>>, %arg3: memref<512x512xbf16, #tpu.memory_space<vmem>>, %arg4: memref<512x256xbf16, #tpu.memory_space<vmem>>, %arg5: memref<256x128xbf16, #tpu.memory_space<vmem>>, %arg6: memref<128x128xbf16, #tpu.memory_space<vmem>>, %arg7: memref<1x1536xf32, #tpu.memory_space<vmem>>, %arg8: memref<16x128xbf16, #tpu.memory_space<vmem>>) attributes {dimension_semantics = [#tpu.dimension_semantics<parallel>], iteration_bounds = array<i64: 1>, scalar_prefetch = 0 : i64, scratch_operands = 0 : i64, tpu.core_type = #tpu.core_type<tc>, window_params = [{transform_indices = @transform_0, window_bounds = array<i64: 16, 128>}, {pipeline_mode = #tpu.pipeline_mode<synchronous>, transform_indices = @transform_1, window_bounds = array<i64: 128, 512>}, {pipeline_mode = #tpu.pipeline_mode<synchronous>, transform_indices = @transform_2, window_bounds = array<i64: 512, 512>}, {pipeline_mode = #tpu.pipeline_mode<synchronous>, transform_indices = @transform_3, window_bounds = array<i64: 512, 256>}, {pipeline_mode = #tpu.pipeline_mode<synchronous>, transform_indices = @transform_4, window_bounds = array<i64: 256, 128>}, {pipeline_mode = #tpu.pipeline_mode<synchronous>, transform_indices = @transform_5, window_bounds = array<i64: 128, 128>}, {pipeline_mode = #tpu.pipeline_mode<synchronous>, transform_indices = @transform_6, window_bounds = array<i64: 1, 1536>}, {transform_indices = @transform_7, window_bounds = array<i64: 16, 128>}]} {
    %c0 = arith.constant 0 : index
    %c0_0 = arith.constant 0 : index
    %0 = vector.load %arg1[%c0, %c0_0] : memref<16x128xbf16, #tpu.memory_space<vmem>>, vector<16x128xbf16>
    %c0_1 = arith.constant 0 : index
    %c0_2 = arith.constant 0 : index
    %1 = vector.load %arg2[%c0_1, %c0_2] : memref<128x512xbf16, #tpu.memory_space<vmem>>, vector<128x512xbf16>
    %cst = arith.constant dense<0.000000e+00> : vector<16x512xf32>
    %2 = tpu.matmul %0, %1, %cst {dimension_numbers = #tpu.dot_dimension_numbers<[1], [0], [0], [1], [0, 0, 1, 1], [], []>} : vector<16x128xbf16>, vector<128x512xbf16>, vector<16x512xf32> -> vector<16x512xf32>
    %c0_3 = arith.constant 0 : index
    %c0_4 = arith.constant 0 : index
    %3 = vector.load %arg7[%c0_3, %c0_4] : memref<1x1536xf32, #tpu.memory_space<vmem>>, vector<1x512xf32>
    %4 = vector.broadcast %3 : vector<1x512xf32> to vector<16x512xf32>
    %5 = arith.addf %2, %4 : vector<16x512xf32>
    %cst_5 = arith.constant 0.000000e+00 : f32
    %6 = vector.broadcast %cst_5 : f32 to vector<16x512xf32>
    %7 = arith.maximumf %5, %6 : vector<16x512xf32>
    %8 = arith.truncf %7 : vector<16x512xf32> to vector<16x512xbf16>
    %c0_6 = arith.constant 0 : index
    %c0_7 = arith.constant 0 : index
    %9 = vector.load %arg3[%c0_6, %c0_7] : memref<512x512xbf16, #tpu.memory_space<vmem>>, vector<512x512xbf16>
    %cst_8 = arith.constant dense<0.000000e+00> : vector<16x512xf32>
    %10 = tpu.matmul %8, %9, %cst_8 {dimension_numbers = #tpu.dot_dimension_numbers<[1], [0], [0], [1], [0, 0, 1, 1], [], []>} : vector<16x512xbf16>, vector<512x512xbf16>, vector<16x512xf32> -> vector<16x512xf32>
    %c0_9 = arith.constant 0 : index
    %c512 = arith.constant 512 : index
    %11 = vector.load %arg7[%c0_9, %c512] : memref<1x1536xf32, #tpu.memory_space<vmem>>, vector<1x512xf32>
    %12 = vector.broadcast %11 : vector<1x512xf32> to vector<16x512xf32>
    %13 = arith.addf %10, %12 : vector<16x512xf32>
    %cst_10 = arith.constant 0.000000e+00 : f32
    %14 = vector.broadcast %cst_10 : f32 to vector<16x512xf32>
    %15 = arith.maximumf %13, %14 : vector<16x512xf32>
    %16 = arith.truncf %15 : vector<16x512xf32> to vector<16x512xbf16>
    %c0_11 = arith.constant 0 : index
    %c0_12 = arith.constant 0 : index
    %17 = vector.load %arg4[%c0_11, %c0_12] : memref<512x256xbf16, #tpu.memory_space<vmem>>, vector<512x256xbf16>
    %cst_13 = arith.constant dense<0.000000e+00> : vector<16x256xf32>
    %18 = tpu.matmul %16, %17, %cst_13 {dimension_numbers = #tpu.dot_dimension_numbers<[1], [0], [0], [1], [0, 0, 1, 1], [], []>} : vector<16x512xbf16>, vector<512x256xbf16>, vector<16x256xf32> -> vector<16x256xf32>
    %c0_14 = arith.constant 0 : index
    %c1024 = arith.constant 1024 : index
    %19 = vector.load %arg7[%c0_14, %c1024] : memref<1x1536xf32, #tpu.memory_space<vmem>>, vector<1x256xf32>
    %20 = vector.broadcast %19 : vector<1x256xf32> to vector<16x256xf32>
    %21 = arith.addf %18, %20 : vector<16x256xf32>
    %cst_15 = arith.constant 0.000000e+00 : f32
    %22 = vector.broadcast %cst_15 : f32 to vector<16x256xf32>
    %23 = arith.maximumf %21, %22 : vector<16x256xf32>
    %24 = arith.truncf %23 : vector<16x256xf32> to vector<16x256xbf16>
    %c0_16 = arith.constant 0 : index
    %c0_17 = arith.constant 0 : index
    %25 = vector.load %arg5[%c0_16, %c0_17] : memref<256x128xbf16, #tpu.memory_space<vmem>>, vector<256x128xbf16>
    %cst_18 = arith.constant dense<0.000000e+00> : vector<16x128xf32>
    %26 = tpu.matmul %24, %25, %cst_18 {dimension_numbers = #tpu.dot_dimension_numbers<[1], [0], [0], [1], [0, 0, 1, 1], [], []>} : vector<16x256xbf16>, vector<256x128xbf16>, vector<16x128xf32> -> vector<16x128xf32>
    %c0_19 = arith.constant 0 : index
    %c1280 = arith.constant 1280 : index
    %27 = vector.load %arg7[%c0_19, %c1280] : memref<1x1536xf32, #tpu.memory_space<vmem>>, vector<1x128xf32>
    %28 = vector.broadcast %27 : vector<1x128xf32> to vector<16x128xf32>
    %29 = arith.addf %26, %28 : vector<16x128xf32>
    %cst_20 = arith.constant 0.000000e+00 : f32
    %30 = vector.broadcast %cst_20 : f32 to vector<16x128xf32>
    %31 = arith.maximumf %29, %30 : vector<16x128xf32>
    %32 = arith.truncf %31 : vector<16x128xf32> to vector<16x128xbf16>
    %c0_21 = arith.constant 0 : index
    %c0_22 = arith.constant 0 : index
    %33 = vector.load %arg6[%c0_21, %c0_22] : memref<128x128xbf16, #tpu.memory_space<vmem>>, vector<128x128xbf16>
    %cst_23 = arith.constant dense<0.000000e+00> : vector<16x128xf32>
    %34 = tpu.matmul %32, %33, %cst_23 {dimension_numbers = #tpu.dot_dimension_numbers<[1], [0], [0], [1], [0, 0, 1, 1], [], []>} : vector<16x128xbf16>, vector<128x128xbf16>, vector<16x128xf32> -> vector<16x128xf32>
    %c0_24 = arith.constant 0 : index
    %c1408 = arith.constant 1408 : index
    %35 = vector.load %arg7[%c0_24, %c1408] : memref<1x1536xf32, #tpu.memory_space<vmem>>, vector<1x128xf32>
    %36 = vector.broadcast %35 : vector<1x128xf32> to vector<16x128xf32>
    %37 = arith.addf %34, %36 : vector<16x128xf32>
    %38 = math.tanh %37 : vector<16x128xf32>
    %cst_25 = arith.constant 3.970000e-01 : f32
    %39 = vector.broadcast %cst_25 : f32 to vector<16x128xf32>
    %40 = arith.mulf %39, %38 : vector<16x128xf32>
    %41 = arith.truncf %40 : vector<16x128xf32> to vector<16x128xbf16>
    %c0_26 = arith.constant 0 : index
    %c0_27 = arith.constant 0 : index
    %42 = vector.load %arg8[%c0_26, %c0_27] : memref<16x128xbf16, #tpu.memory_space<vmem>>, vector<16x128xbf16>
    tpu.vector_store %arg8[%c0_26, %c0_27], %41 {strides = array<i32>} : memref<16x128xbf16, #tpu.memory_space<vmem>>, vector<16x128xbf16>,
    return
  }
  func.func @transform_0(%arg0: i32) -> (i32, i32) {
    %c0_i32 = arith.constant 0 : i32
    %c0_i32_0 = arith.constant 0 : i32
    return %arg0, %c0_i32 : i32, i32
  }
  func.func @transform_1(%arg0: i32) -> (i32, i32) {
    %c0_i32 = arith.constant 0 : i32
    %c0_i32_0 = arith.constant 0 : i32
    %c0_i32_1 = arith.constant 0 : i32
    return %c0_i32, %c0_i32_0 : i32, i32
  }
  func.func @transform_2(%arg0: i32) -> (i32, i32) {
    %c0_i32 = arith.constant 0 : i32
    %c0_i32_0 = arith.constant 0 : i32
    %c0_i32_1 = arith.constant 0 : i32
    return %c0_i32, %c0_i32_0 : i32, i32
  }
  func.func @transform_3(%arg0: i32) -> (i32, i32) {
    %c0_i32 = arith.constant 0 : i32
    %c0_i32_0 = arith.constant 0 : i32
    %c0_i32_1 = arith.constant 0 : i32
    return %c0_i32, %c0_i32_0 : i32, i32
  }
  func.func @transform_4(%arg0: i32) -> (i32, i32) {
    %c0_i32 = arith.constant 0 : i32
    %c0_i32_0 = arith.constant 0 : i32
    %c0_i32_1 = arith.constant 0 : i32
    return %c0_i32, %c0_i32_0 : i32, i32
  }
  func.func @transform_5(%arg0: i32) -> (i32, i32) {
    %c0_i32 = arith.constant 0 : i32
    %c0_i32_0 = arith.constant 0 : i32
    %c0_i32_1 = arith.constant 0 : i32
    return %c0_i32, %c0_i32_0 : i32, i32
  }
  func.func @transform_6(%arg0: i32) -> (i32, i32) {
    %c0_i32 = arith.constant 0 : i32
    %c0_i32_0 = arith.constant 0 : i32
    %c0_i32_1 = arith.constant 0 : i32
    return %c0_i32, %c0_i32_0 : i32, i32
  }
  func.func @transform_7(%arg0: i32) -> (i32, i32) {
    %c0_i32 = arith.constant 0 : i32
    %c0_i32_0 = arith.constant 0 : i32
    return %arg0, %c0_i32 : i32, i32
  }
}

module attributes {stable_mosaic.version = 11 : i64} {
  func.func @_bc_kernel(%arg0: i32, %arg1: memref<16x128xbf16, #tpu.memory_space<vmem>>, %arg2: memref<128x512xbf16, #tpu.memory_space<vmem>>, %arg3: memref<512x512xbf16, #tpu.memory_space<vmem>>, %arg4: memref<512x256xbf16, #tpu.memory_space<vmem>>, %arg5: memref<256x128xbf16, #tpu.memory_space<vmem>>, %arg6: memref<128x128xbf16, #tpu.memory_space<vmem>>, %arg7: memref<1x1536xf32, #tpu.memory_space<vmem>>, %arg8: memref<16x128xbf16, #tpu.memory_space<vmem>>) attributes {dimension_semantics = [#tpu.dimension_semantics<parallel>], iteration_bounds = array<i64: 1>, scalar_prefetch = 0 : i64, scratch_operands = 0 : i64, tpu.core_type = #tpu.core_type<tc>, window_params = [{transform_indices = @transform_0, window_bounds = array<i64: 16, 128>}, {pipeline_mode = #tpu.pipeline_mode<synchronous>, transform_indices = @transform_1, window_bounds = array<i64: 128, 512>}, {pipeline_mode = #tpu.pipeline_mode<synchronous>, transform_indices = @transform_2, window_bounds = array<i64: 512, 512>}, {pipeline_mode = #tpu.pipeline_mode<synchronous>, transform_indices = @transform_3, window_bounds = array<i64: 512, 256>}, {pipeline_mode = #tpu.pipeline_mode<synchronous>, transform_indices = @transform_4, window_bounds = array<i64: 256, 128>}, {pipeline_mode = #tpu.pipeline_mode<synchronous>, transform_indices = @transform_5, window_bounds = array<i64: 128, 128>}, {pipeline_mode = #tpu.pipeline_mode<synchronous>, transform_indices = @transform_6, window_bounds = array<i64: 1, 1536>}, {transform_indices = @transform_7, window_bounds = array<i64: 16, 128>}]} {
    %c0 = arith.constant 0 : index
    %c0_0 = arith.constant 0 : index
    %0 = vector.load %arg1[%c0, %c0_0] : memref<16x128xbf16, #tpu.memory_space<vmem>>, vector<16x128xbf16>
    %c0_1 = arith.constant 0 : index
    %c0_2 = arith.constant 0 : index
    %1 = vector.load %arg2[%c0_1, %c0_2] : memref<128x512xbf16, #tpu.memory_space<vmem>>, vector<128x512xbf16>
    %cst = arith.constant dense<0.000000e+00> : vector<16x512xf32>
    %2 = tpu.matmul %0, %1, %cst {dimension_numbers = #tpu.dot_dimension_numbers<[1], [0], [0], [1], [0, 0, 1, 1], [], []>} : vector<16x128xbf16>, vector<128x512xbf16>, vector<16x512xf32> -> vector<16x512xf32>
    %c0_3 = arith.constant 0 : index
    %c0_4 = arith.constant 0 : index
    %3 = vector.load %arg7[%c0_3, %c0_4] : memref<1x1536xf32, #tpu.memory_space<vmem>>, vector<1x512xf32>
    %4 = vector.broadcast %3 : vector<1x512xf32> to vector<16x512xf32>
    %5 = arith.addf %2, %4 : vector<16x512xf32>
    %cst_5 = arith.constant 0.000000e+00 : f32
    %6 = vector.broadcast %cst_5 : f32 to vector<16x512xf32>
    %7 = arith.maximumf %5, %6 : vector<16x512xf32>
    %8 = arith.truncf %7 : vector<16x512xf32> to vector<16x512xbf16>
    %c0_6 = arith.constant 0 : index
    %c0_7 = arith.constant 0 : index
    %9 = vector.load %arg3[%c0_6, %c0_7] : memref<512x512xbf16, #tpu.memory_space<vmem>>, vector<512x512xbf16>
    %cst_8 = arith.constant dense<0.000000e+00> : vector<16x512xf32>
    %10 = tpu.matmul %8, %9, %cst_8 {dimension_numbers = #tpu.dot_dimension_numbers<[1], [0], [0], [1], [0, 0, 1, 1], [], []>} : vector<16x512xbf16>, vector<512x512xbf16>, vector<16x512xf32> -> vector<16x512xf32>
    %c0_9 = arith.constant 0 : index
    %c512 = arith.constant 512 : index
    %11 = vector.load %arg7[%c0_9, %c512] : memref<1x1536xf32, #tpu.memory_space<vmem>>, vector<1x512xf32>
    %12 = vector.broadcast %11 : vector<1x512xf32> to vector<16x512xf32>
    %13 = arith.addf %10, %12 : vector<16x512xf32>
    %cst_10 = arith.constant 0.000000e+00 : f32
    %14 = vector.broadcast %cst_10 : f32 to vector<16x512xf32>
    %15 = arith.maximumf %13, %14 : vector<16x512xf32>
    %16 = arith.truncf %15 : vector<16x512xf32> to vector<16x512xbf16>
    %c0_11 = arith.constant 0 : index
    %c0_12 = arith.constant 0 : index
    %17 = vector.load %arg4[%c0_11, %c0_12] : memref<512x256xbf16, #tpu.memory_space<vmem>>, vector<512x256xbf16>
    %cst_13 = arith.constant dense<0.000000e+00> : vector<16x256xf32>
    %18 = tpu.matmul %16, %17, %cst_13 {dimension_numbers = #tpu.dot_dimension_numbers<[1], [0], [0], [1], [0, 0, 1, 1], [], []>} : vector<16x512xbf16>, vector<512x256xbf16>, vector<16x256xf32> -> vector<16x256xf32>
    %c0_14 = arith.constant 0 : index
    %c1024 = arith.constant 1024 : index
    %19 = vector.load %arg7[%c0_14, %c1024] : memref<1x1536xf32, #tpu.memory_space<vmem>>, vector<1x256xf32>
    %20 = vector.broadcast %19 : vector<1x256xf32> to vector<16x256xf32>
    %21 = arith.addf %18, %20 : vector<16x256xf32>
    %cst_15 = arith.constant 0.000000e+00 : f32
    %22 = vector.broadcast %cst_15 : f32 to vector<16x256xf32>
    %23 = arith.maximumf %21, %22 : vector<16x256xf32>
    %24 = arith.truncf %23 : vector<16x256xf32> to vector<16x256xbf16>
    %c0_16 = arith.constant 0 : index
    %c0_17 = arith.constant 0 : index
    %25 = vector.load %arg5[%c0_16, %c0_17] : memref<256x128xbf16, #tpu.memory_space<vmem>>, vector<256x128xbf16>
    %cst_18 = arith.constant dense<0.000000e+00> : vector<16x128xf32>
    %26 = tpu.matmul %24, %25, %cst_18 {dimension_numbers = #tpu.dot_dimension_numbers<[1], [0], [0], [1], [0, 0, 1, 1], [], []>} : vector<16x256xbf16>, vector<256x128xbf16>, vector<16x128xf32> -> vector<16x128xf32>
    %c0_19 = arith.constant 0 : index
    %c1280 = arith.constant 1280 : index
    %27 = vector.load %arg7[%c0_19, %c1280] : memref<1x1536xf32, #tpu.memory_space<vmem>>, vector<1x128xf32>
    %28 = vector.broadcast %27 : vector<1x128xf32> to vector<16x128xf32>
    %29 = arith.addf %26, %28 : vector<16x128xf32>
    %cst_20 = arith.constant 0.000000e+00 : f32
    %30 = vector.broadcast %cst_20 : f32 to vector<16x128xf32>
    %31 = arith.maximumf %29, %30 : vector<16x128xf32>
    %32 = arith.truncf %31 : vector<16x128xf32> to vector<16x128xbf16>
    %c0_21 = arith.constant 0 : index
    %c0_22 = arith.constant 0 : index
    %33 = vector.load %arg6[%c0_21, %c0_22] : memref<128x128xbf16, #tpu.memory_space<vmem>>, vector<128x128xbf16>
    %cst_23 = arith.constant dense<0.000000e+00> : vector<16x128xf32>
    %34 = tpu.matmul %32, %33, %cst_23 {dimension_numbers = #tpu.dot_dimension_numbers<[1], [0], [0], [1], [0, 0, 1, 1], [], []>} : vector<16x128xbf16>, vector<128x128xbf16>, vector<16x128xf32> -> vector<16x128xf32>
    %c0_24 = arith.constant 0 : index
    %c1408 = arith.constant 1408 : index
    %35 = vector.load %arg7[%c0_24, %c1408] : memref<1x1536xf32, #tpu.memory_space<vmem>>, vector<1x128xf32>
    %36 = vector.broadcast %35 : vector<1x128xf32> to vector<16x128xf32>
    %37 = arith.addf %34, %36 : vector<16x128xf32>
    %38 = math.tanh %37 : vector<16x128xf32>
    %cst_25 = arith.constant 3.970000e-01 : f32
    %39 = vector.broadcast %cst_25 : f32 to vector<16x128xf32>
    %40 = arith.mulf %39, %38 : vector<16x128xf32>
    %41 = arith.truncf %40 : vector<16x128xf32> to vector<16x128xbf16>
    %c0_26 = arith.constant 0 : index
    %c0_27 = arith.constant 0 : index
    %42 = vector.load %arg8[%c0_26, %c0_27] : memref<16x128xbf16, #tpu.memory_space<vmem>>, vector<16x128xbf16>
    tpu.vector_store %arg8[%c0_26, %c0_27], %41 {strides = array<i32>} : memref<16x128xbf16, #tpu.memory_space<vmem>>, vector<16x128xbf16>,
    return
  }
  func.func @transform_0(%arg0: i32) -> (i32, i32) {
    %c0_i32 = arith.constant 0 : i32
    %c0_i32_0 = arith.constant 0 : i32
    return %arg0, %c0_i32 : i32, i32
  }
  func.func @transform_1(%arg0: i32) -> (i32, i32) {
    %c0_i32 = arith.constant 0 : i32
    %c0_i32_0 = arith.constant 0 : i32
    %c0_i32_1 = arith.constant 0 : i32
    return %c0_i32, %c0_i32_0 : i32, i32
  }
  func.func @transform_2(%arg0: i32) -> (i32, i32) {
    %c0_i32 = arith.constant 0 : i32
    %c0_i32_0 = arith.constant 0 : i32
    %c0_i32_1 = arith.constant 0 : i32
    return %c0_i32, %c0_i32_0 : i32, i32
  }
  func.func @transform_3(%arg0: i32) -> (i32, i32) {
    %c0_i32 = arith.constant 0 : i32
    %c0_i32_0 = arith.constant 0 : i32
    %c0_i32_1 = arith.constant 0 : i32
    return %c0_i32, %c0_i32_0 : i32, i32
  }
  func.func @transform_4(%arg0: i32) -> (i32, i32) {
    %c0_i32 = arith.constant 0 : i32
    %c0_i32_0 = arith.constant 0 : i32
    %c0_i32_1 = arith.constant 0 : i32
    return %c0_i32, %c0_i32_0 : i32, i32
  }
  func.func @transform_5(%arg0: i32) -> (i32, i32) {
    %c0_i32 = arith.constant 0 : i32
    %c0_i32_0 = arith.constant 0 : i32
    %c0_i32_1 = arith.constant 0 : i32
    return %c0_i32, %c0_i32_0 : i32, i32
  }
  func.func @transform_6(%arg0: i32) -> (i32, i32) {
    %c0_i32 = arith.constant 0 : i32
    %c0_i32_0 = arith.constant 0 : i32
    %c0_i32_1 = arith.constant 0 : i32
    return %c0_i32, %c0_i32_0 : i32, i32
  }
  func.func @transform_7(%arg0: i32) -> (i32, i32) {
    %c0_i32 = arith.constant 0 : i32
    %c0_i32_0 = arith.constant 0 : i32
    return %arg0, %c0_i32 : i32, i32
  }
}

</mosaic_0001>

<llo_original>
// kernel: tpu_custom_call.1
$region0: #{tpu_custom_call.1}
  #allocation0 [shape = 'u32[]', space=smem, size = 0x4, offset = 0x4, fixed_abs, tag = 'smem constant byte address 0x4 - core index']
  #allocation1 [shape = 'u32[144,128]{1,0:T(1,128)}', space=vmem, size = 0x12000, scoped, tag = 'internal scratch']
  %s0 = inlined_call_operand.hbm [shape: bf16[16,128], index: 0, kind: input, shape index: {}]
  %s1 = inlined_call_operand.hbm [shape: bf16[128,512], index: 1, kind: input, shape index: {}]
  %s2 = inlined_call_operand.hbm [shape: bf16[512,512], index: 2, kind: input, shape index: {}]
  %s3 = inlined_call_operand.hbm [shape: bf16[512,256], index: 3, kind: input, shape index: {}]
  %s4 = inlined_call_operand.hbm [shape: bf16[256,128], index: 4, kind: input, shape index: {}]
  %s5 = inlined_call_operand.hbm [shape: bf16[128,128], index: 5, kind: input, shape index: {}]
  %s6 = inlined_call_operand.hbm [shape: f32[1,1536], index: 6, kind: input, shape index: {}]
  %s7 = inlined_call_operand.hbm [shape: bf16[16,128], index: 7, kind: output, shape index: {}]
  %s8 = sld [smem:[#allocation0]]
  $region66: #{tpu_custom_call.1} parent=0
    _
  %s10 = ssub.s32 1, %s8
  %s11 = scalar_select 0, %s10, %s8
  $region1: #{tpu_custom_call.1} parent=0
    #allocation2 [shape = 'u8[4096]{0}', space=vmem, size = 0x1000, scoped, tag = 'input window, operand 0, single buffered']
    #allocation3 [shape = 's32[1]{0}', space=sflag, size = 0x4, scoped, tag = 'scoped memory for tpu_custom_call.1']
    #allocation4 [shape = 's32[1]{0}', space=sflag, size = 0x4, scoped, tag = 'scoped memory for tpu_custom_call.1']
    #allocation5 [shape = 'u8[131072]{0}', space=vmem, size = 0x20000, scoped, tag = 'input window, operand 1, single buffered']
    #allocation6 [shape = 's32[1]{0}', space=sflag, size = 0x4, scoped, tag = 'scoped memory for tpu_custom_call.1']
    #allocation7 [shape = 'u8[524288]{0}', space=vmem, size = 0x80000, scoped, tag = 'input window, operand 2, single buffered']
    #allocation8 [shape = 'u8[262144]{0}', space=vmem, size = 0x40000, scoped, tag = 'input window, operand 3, single buffered']
    #allocation9 [shape = 's32[1]{0}', space=sflag, size = 0x4, scoped, tag = 'scoped memory for tpu_custom_call.1']
    #allocation10 [shape = 'u8[65536]{0}', space=vmem, size = 0x10000, scoped, tag = 'input window, operand 4, single buffered']
    #allocation11 [shape = 'u8[32768]{0}', space=vmem, size = 0x8000, scoped, tag = 'input window, operand 5, single buffered']
    #allocation12 [shape = 's32[1]{0}', space=sflag, size = 0x4, scoped, tag = 'scoped memory for tpu_custom_call.1']
    #allocation13 [shape = 'u8[6144]{0}', space=vmem, size = 0x1800, scoped, tag = 'input window, operand 6, single buffered']
    #allocation14 [shape = 'u8[4096]{0}', space=vmem, size = 0x1000, scoped, tag = 'output window, operand 0, single buffered']
    %12 = vsyncpa [#allocation3], 0
    %13 = vsyncpa [#allocation6], 0
    %14 = vsyncpa [#allocation9], 0
    %15 = vsyncpa [#allocation12], 0
    %16 = vsyncpa [#allocation4], 0
    // Predicated region
    $region2: #{tpu_custom_call.1} parent=1 // pred_check
      _
    $region3: #{tpu_custom_call.1} parent=1 // pred_check_branch
      %18 = sbr.rel (0) target = $region5
    $region4: #{tpu_custom_call.1} parent=1 // pred_region
      %s20 = ssub.s32 128, 128
      %21 = vsyncadd [#allocation3], %s20
      %s22 = sshll.u32 [#allocation2], 4
      %s23 = int_to_ptr.vmem [resolvable:$true] %s22
      %28 = dma.hbm_to_vmem [thread:$0]  %s0, 128, %s23, [#allocation3], 64, 64, 4
    $region5: #{tpu_custom_call.1} parent=1 // pred_fallthru
      _
    // Predicated region
    $region6: #{tpu_custom_call.1} parent=1 // pred_check
      _
    $region7: #{tpu_custom_call.1} parent=1 // pred_check_branch
      %30 = sbr.rel (0) target = $region9
    $region8: #{tpu_custom_call.1} parent=1 // pred_region
      %s32 = ssub.s32 4096, 4096
      %33 = vsyncadd [#allocation6], %s32
      %s34 = sshll.u32 [#allocation5], 4
      %s35 = int_to_ptr.vmem [resolvable:$true] %s34
      %40 = dma.hbm_to_vmem [thread:$0]  %s1, 4096, %s35, [#allocation6], 256, 256, 16
    $region9: #{tpu_custom_call.1} parent=1 // pred_fallthru
      _
    // Predicated region
    $region10: #{tpu_custom_call.1} parent=1 // pred_check
      _
    $region11: #{tpu_custom_call.1} parent=1 // pred_check_branch
      %42 = sbr.rel (0) target = $region13
    $region12: #{tpu_custom_call.1} parent=1 // pred_region
      %s44 = ssub.s32 16384, 16384
      %45 = vsyncadd [#allocation6], %s44
      %s46 = sshll.u32 [#allocation7], 4
      %s47 = int_to_ptr.vmem [resolvable:$true] %s46
      %52 = dma.hbm_to_vmem [thread:$0]  %s2, 16384, %s47, [#allocation6], 256, 256, 16
    $region13: #{tpu_custom_call.1} parent=1 // pred_fallthru
      _
    // Predicated region
    $region14: #{tpu_custom_call.1} parent=1 // pred_check
      _
    $region15: #{tpu_custom_call.1} parent=1 // pred_check_branch
      %54 = sbr.rel (0) target = $region17
    $region16: #{tpu_custom_call.1} parent=1 // pred_region
      %s56 = ssub.s32 8192, 8192
      %57 = vsyncadd [#allocation9], %s56
      %s58 = sshll.u32 [#allocation8], 4
      %s59 = int_to_ptr.vmem [resolvable:$true] %s58
      %64 = dma.hbm_to_vmem [thread:$0]  %s3, 8192, %s59, [#allocation9], 128, 128, 8
    $region17: #{tpu_custom_call.1} parent=1 // pred_fallthru
      _
    // Predicated region
    $region18: #{tpu_custom_call.1} parent=1 // pred_check
      _
    $region19: #{tpu_custom_call.1} parent=1 // pred_check_branch
      %66 = sbr.rel (0) target = $region21
    $region20: #{tpu_custom_call.1} parent=1 // pred_region
      %s68 = ssub.s32 2048, 2048
      %69 = vsyncadd [#allocation9], %s68
      %s70 = sshll.u32 [#allocation10], 4
      %s71 = int_to_ptr.vmem [resolvable:$true] %s70
      %76 = dma.hbm_to_vmem [thread:$0]  %s4, 2048, %s71, [#allocation9], 64, 64, 4
    $region21: #{tpu_custom_call.1} parent=1 // pred_fallthru
      _
    // Predicated region
    $region22: #{tpu_custom_call.1} parent=1 // pred_check
      _
    $region23: #{tpu_custom_call.1} parent=1 // pred_check_branch
      %78 = sbr.rel (0) target = $region25
    $region24: #{tpu_custom_call.1} parent=1 // pred_region
      %s80 = ssub.s32 1024, 1024
      %81 = vsyncadd [#allocation12], %s80
      %s82 = sshll.u32 [#allocation11], 4
      %s83 = int_to_ptr.vmem [resolvable:$true] %s82
      %88 = dma.hbm_to_vmem [thread:$0]  %s5, 1024, %s83, [#allocation12], 64, 64, 4
    $region25: #{tpu_custom_call.1} parent=1 // pred_fallthru
      _
    // Predicated region
    $region26: #{tpu_custom_call.1} parent=1 // pred_check
      _
    $region27: #{tpu_custom_call.1} parent=1 // pred_check_branch
      %90 = sbr.rel (0) target = $region29
    $region28: #{tpu_custom_call.1} parent=1 // pred_region
      %s92 = ssub.s32 192, 192
      %93 = vsyncadd [#allocation12], %s92
      %s95 = sshll.u32 [#allocation13], 4
      %s96 = int_to_ptr.vmem [resolvable:$true] %s95
      %98 = dma.hbm_to_vmem [thread:$0]  %s6, 192, %s96, [#allocation12]
    $region29: #{tpu_custom_call.1} parent=1 // pred_fallthru
      _
    // Predicated region
    $region30: #{tpu_custom_call.1} parent=1 // pred_check
      _
    $region31: #{tpu_custom_call.1} parent=1 // pred_check_branch
      %100 = sbr.rel (0) target = $region33
    $region32: #{tpu_custom_call.1} parent=1 // pred_region
      %101 = dma.done [#allocation3], 128
    $region33: #{tpu_custom_call.1} parent=1 // pred_fallthru
      _
    // Predicated region
    $region34: #{tpu_custom_call.1} parent=1 // pred_check
      _
    $region35: #{tpu_custom_call.1} parent=1 // pred_check_branch
      %103 = sbr.rel (0) target = $region37
    $region36: #{tpu_custom_call.1} parent=1 // pred_region
      %104 = dma.done [#allocation6], 4096
    $region37: #{tpu_custom_call.1} parent=1 // pred_fallthru
      _
    // Predicated region
    $region38: #{tpu_custom_call.1} parent=1 // pred_check
      _
    $region39: #{tpu_custom_call.1} parent=1 // pred_check_branch
      %106 = sbr.rel (0) target = $region41
    $region40: #{tpu_custom_call.1} parent=1 // pred_region
      %107 = dma.done [#allocation6], 16384
    $region41: #{tpu_custom_call.1} parent=1 // pred_fallthru
      _
    // Predicated region
    $region42: #{tpu_custom_call.1} parent=1 // pred_check
      _
    $region43: #{tpu_custom_call.1} parent=1 // pred_check_branch
      %109 = sbr.rel (0) target = $region45
    $region44: #{tpu_custom_call.1} parent=1 // pred_region
      %110 = dma.done [#allocation9], 8192
    $region45: #{tpu_custom_call.1} parent=1 // pred_fallthru
      _
    // Predicated region
    $region46: #{tpu_custom_call.1} parent=1 // pred_check
      _
    $region47: #{tpu_custom_call.1} parent=1 // pred_check_branch
      %112 = sbr.rel (0) target = $region49
    $region48: #{tpu_custom_call.1} parent=1 // pred_region
      %113 = dma.done [#allocation9], 2048
    $region49: #{tpu_custom_call.1} parent=1 // pred_fallthru
      _
    // Predicated region
    $region50: #{tpu_custom_call.1} parent=1 // pred_check
      _
    $region51: #{tpu_custom_call.1} parent=1 // pred_check_branch
      %115 = sbr.rel (0) target = $region53
    $region52: #{tpu_custom_call.1} parent=1 // pred_region
      %116 = dma.done [#allocation12], 1024
    $region53: #{tpu_custom_call.1} parent=1 // pred_fallthru
      _
    // Predicated region
    $region54: #{tpu_custom_call.1} parent=1 // pred_check
      _
    $region55: #{tpu_custom_call.1} parent=1 // pred_check_branch
      %118 = sbr.rel (0) target = $region57
    $region56: #{tpu_custom_call.1} parent=1 // pred_region
      %119 = dma.done [#allocation12], 192
    $region57: #{tpu_custom_call.1} parent=1 // pred_fallthru
      _
    %v121 = vld [vmem:[#allocation2] sm:$0xf]
    %v122 = vld [vmem:[#allocation2 + $0x4] sm:$0xf]
    %v123 = vld [vmem:[#allocation5] sm:$0xff]
    %v124 = vld [vmem:[#allocation5 + $0x8] sm:$0xff]
    %v125 = vld [vmem:[#allocation5 + $0x10] sm:$0xff]
    %v126 = vld [vmem:[#allocation5 + $0x18] sm:$0xff]
    %v127 = vld [vmem:[#allocation5 + $0x20] sm:$0xff]
    %v128 = vld [vmem:[#allocation5 + $0x28] sm:$0xff]
    %v129 = vld [vmem:[#allocation5 + $0x30] sm:$0xff]
    %v130 = vld [vmem:[#allocation5 + $0x38] sm:$0xff]
    %v131 = vld [vmem:[#allocation5 + $0x40] sm:$0xff]
    %v132 = vld [vmem:[#allocation5 + $0x48] sm:$0xff]
    %v133 = vld [vmem:[#allocation5 + $0x50] sm:$0xff]
    %v134 = vld [vmem:[#allocation5 + $0x58] sm:$0xff]
    %v135 = vld [vmem:[#allocation5 + $0x60] sm:$0xff]
    %v136 = vld [vmem:[#allocation5 + $0x68] sm:$0xff]
    %v137 = vld [vmem:[#allocation5 + $0x70] sm:$0xff]
    %v138 = vld [vmem:[#allocation5 + $0x78] sm:$0xff]
    %v139 = vld [vmem:[#allocation5 + $0x80] sm:$0xff]
    %v140 = vld [vmem:[#allocation5 + $0x88] sm:$0xff]
    %v141 = vld [vmem:[#allocation5 + $0x90] sm:$0xff]
    %v142 = vld [vmem:[#allocation5 + $0x98] sm:$0xff]
    %v143 = vld [vmem:[#allocation5 + $0xa0] sm:$0xff]
    %v144 = vld [vmem:[#allocation5 + $0xa8] sm:$0xff]
    %v145 = vld [vmem:[#allocation5 + $0xb0] sm:$0xff]
    %v146 = vld [vmem:[#allocation5 + $0xb8] sm:$0xff]
    %v147 = vld [vmem:[#allocation5 + $0xc0] sm:$0xff]
    %v148 = vld [vmem:[#allocation5 + $0xc8] sm:$0xff]
    %v149 = vld [vmem:[#allocation5 + $0xd0] sm:$0xff]
    %v150 = vld [vmem:[#allocation5 + $0xd8] sm:$0xff]
    %v151 = vld [vmem:[#allocation5 + $0xe0] sm:$0xff]
    %v152 = vld [vmem:[#allocation5 + $0xe8] sm:$0xff]
    %v153 = vld [vmem:[#allocation5 + $0xf0] sm:$0xff]
    %v154 = vld [vmem:[#allocation5 + $0xf8] sm:$0xff]
    %v155 = vld [vmem:[#allocation13] sm:$0xf]
    %v157 = vlaneseq
    %v158 = vshrl.u32 %v157, 7
    %v159 = vsub.s32 0, %v158
    %v160 = vrot.slane %v155, %v159
    %v161 = vlaneseq
    %v162 = vshrl.u32 %v161, 7
    %v163 = vsub.s32 1, %v162
    %v164 = vrot.slane %v155, %v163
    %v165 = vlaneseq
    %v166 = vshrl.u32 %v165, 7
    %v167 = vsub.s32 2, %v166
    %v168 = vrot.slane %v155, %v167
    %v169 = vlaneseq
    %v170 = vshrl.u32 %v169, 7
    %v171 = vsub.s32 3, %v170
    %v172 = vrot.slane %v155, %v171
    %v179 = vunpack.c.l.b16 %v121
    %v180 = vunpack.c.l.b16 %v122
    %v181 = vpack.c.b16 %v180, %v179
    %v215 = vunpack.c.l.b16 %v123
    %v216 = vunpack.c.h.b16 %v123
    %v217 = vunpack.c.l.b16 %v124
    %v218 = vunpack.c.h.b16 %v124
    %v219 = vunpack.c.l.b16 %v125
    %v220 = vunpack.c.h.b16 %v125
    %v221 = vunpack.c.l.b16 %v126
    %v222 = vunpack.c.h.b16 %v126
    %v223 = vunpack.c.l.b16 %v127
    %v224 = vunpack.c.h.b16 %v127
    %v225 = vunpack.c.l.b16 %v128
    %v226 = vunpack.c.h.b16 %v128
    %v227 = vunpack.c.l.b16 %v129
    %v228 = vunpack.c.h.b16 %v129
    %v229 = vunpack.c.l.b16 %v130
    %v230 = vunpack.c.h.b16 %v130
    %v231 = vunpack.c.l.b16 %v131
    %v232 = vunpack.c.h.b16 %v131
    %v233 = vunpack.c.l.b16 %v132
    %v234 = vunpack.c.h.b16 %v132
    %v235 = vunpack.c.l.b16 %v133
    %v236 = vunpack.c.h.b16 %v133
    %v237 = vunpack.c.l.b16 %v134
    %v238 = vunpack.c.h.b16 %v134
    %v239 = vunpack.c.l.b16 %v135
    %v240 = vunpack.c.h.b16 %v135
    %v241 = vunpack.c.l.b16 %v136
    %v242 = vunpack.c.h.b16 %v136
    %v243 = vunpack.c.l.b16 %v137
    %v244 = vunpack.c.h.b16 %v137
    %v245 = vunpack.c.l.b16 %v138
    %v246 = vunpack.c.h.b16 %v138
    %v247 = vunpack.c.l.b16 %v139
    %v248 = vunpack.c.h.b16 %v139
    %v249 = vunpack.c.l.b16 %v140
    %v250 = vunpack.c.h.b16 %v140
    %v251 = vunpack.c.l.b16 %v141
    %v252 = vunpack.c.h.b16 %v141
    %v253 = vunpack.c.l.b16 %v142
    %v254 = vunpack.c.h.b16 %v142
    %v255 = vunpack.c.l.b16 %v143
    %v256 = vunpack.c.h.b16 %v143
    %v257 = vunpack.c.l.b16 %v144
    %v258 = vunpack.c.h.b16 %v144
    %v259 = vunpack.c.l.b16 %v145
    %v260 = vunpack.c.h.b16 %v145
    %v261 = vunpack.c.l.b16 %v146
    %v262 = vunpack.c.h.b16 %v146
    %v263 = vunpack.c.l.b16 %v147
    %v264 = vunpack.c.h.b16 %v147
    %v265 = vunpack.c.l.b16 %v148
    %v266 = vunpack.c.h.b16 %v148
    %v267 = vunpack.c.l.b16 %v149
    %v268 = vunpack.c.h.b16 %v149
    %v269 = vunpack.c.l.b16 %v150
    %v270 = vunpack.c.h.b16 %v150
    %v271 = vunpack.c.l.b16 %v151
    %v272 = vunpack.c.h.b16 %v151
    %v273 = vunpack.c.l.b16 %v152
    %v274 = vunpack.c.h.b16 %v152
    %v275 = vunpack.c.l.b16 %v153
    %v276 = vunpack.c.h.b16 %v153
    %v277 = vunpack.c.l.b16 %v154
    %v278 = vunpack.c.h.b16 %v154
    %v279 = vpack.c.b16 %v219, %v215
    %v280 = vpack.c.b16 %v220, %v216
    %v281 = vpack.c.b16 %v221, %v217
    %v282 = vpack.c.b16 %v222, %v218
    %v283 = vpack.c.b16 %v227, %v223
    %v284 = vpack.c.b16 %v228, %v224
    %v285 = vpack.c.b16 %v229, %v225
    %v286 = vpack.c.b16 %v230, %v226
    %v287 = vpack.c.b16 %v235, %v231
    %v288 = vpack.c.b16 %v236, %v232
    %v289 = vpack.c.b16 %v237, %v233
    %v290 = vpack.c.b16 %v238, %v234
    %v291 = vpack.c.b16 %v243, %v239
    %v292 = vpack.c.b16 %v244, %v240
    %v293 = vpack.c.b16 %v245, %v241
    %v294 = vpack.c.b16 %v246, %v242
    %v295 = vpack.c.b16 %v251, %v247
    %v296 = vpack.c.b16 %v252, %v248
    %v297 = vpack.c.b16 %v253, %v249
    %v298 = vpack.c.b16 %v254, %v250
    %v299 = vpack.c.b16 %v259, %v255
    %v300 = vpack.c.b16 %v260, %v256
    %v301 = vpack.c.b16 %v261, %v257
    %v302 = vpack.c.b16 %v262, %v258
    %v303 = vpack.c.b16 %v267, %v263
    %v304 = vpack.c.b16 %v268, %v264
    %v305 = vpack.c.b16 %v269, %v265
    %v306 = vpack.c.b16 %v270, %v266
    %v307 = vpack.c.b16 %v275, %v271
    %v308 = vpack.c.b16 %v276, %v272
    %v309 = vpack.c.b16 %v277, %v273
    %v310 = vpack.c.b16 %v278, %v274
    %343 = vmatprep.subr.bf16.mxu0 %v308
    %344 = vmatpush1.bf16.msra.mxu0 %v307
    %345 = vmatprep.subr.bf16.mxu0 %v304
    %346 = vmatpush1.bf16.msra.mxu0 %v303
    %347 = vmatprep.subr.bf16.mxu0 %v300
    %348 = vmatpush1.bf16.msra.mxu0 %v299
    %349 = vmatprep.subr.bf16.mxu0 %v296
    %350 = vmatpush1.bf16.msra.mxu0 %v295
    %351 = vmatprep.subr.bf16.mxu0 %v292
    %352 = vmatpush1.bf16.msra.mxu0 %v291
    %353 = vmatprep.subr.bf16.mxu0 %v288
    %354 = vmatpush1.bf16.msra.mxu0 %v287
    %355 = vmatprep.subr.bf16.mxu0 %v284
    %356 = vmatpush1.bf16.msra.mxu0 %v283
    %357 = vmatprep.subr.bf16.mxu0 %v280
    %358 = vmatpush1.bf16.msra.mxu0 %v279
    %359 = vmatprep.subr.bf16.mxu0 0
    %360 = vmatpush2.bf16.msra.mxu0 0
    %361 = vmatprep.subr.bf16.mxu0 0
    %362 = vmatpush2.bf16.msra.mxu0 0
    %363 = vmatprep.subr.bf16.mxu0 0
    %364 = vmatpush2.bf16.msra.mxu0 0
    %365 = vmatprep.subr.bf16.mxu0 0
    %366 = vmatpush2.bf16.msra.mxu0 0
    %367 = vmatprep.subr.bf16.mxu0 0
    %368 = vmatpush2.bf16.msra.mxu0 0
    %369 = vmatprep.subr.bf16.mxu0 0
    %370 = vmatpush2.bf16.msra.mxu0 0
    %371 = vmatprep.subr.bf16.mxu0 0
    %372 = vmatpush2.bf16.msra.mxu0 0
    %373 = vmatprep.subr.bf16.mxu0 0
    %374 = vmatpush2.bf16.msra.mxu0 0
    %375 = vmatprep.mubr.bf16.mxu0 0
    %376 = vmatmul.mubr.bf16.gmra.mxu0 %v181
    %v377 = vpop.f32.mrf.mxu0
    %v378 = vadd.f32 %v160, %v377
    %v379 = vpop.f32.mrf.mxu0
    %v380 = vadd.f32 %v164, %v379
    %v381 = vpop.f32.mrf.mxu0
    %v382 = vadd.f32 %v160, %v381
    %v383 = vpop.f32.mrf.mxu0
    %v384 = vadd.f32 %v164, %v383
    %385 = vdwg.mxu0
    %386 = vmatprep.subr.bf16.mxu0 %v310
    %387 = vmatpush1.bf16.msra.mxu0 %v309
    %388 = vmatprep.subr.bf16.mxu0 %v306
    %389 = vmatpush1.bf16.msra.mxu0 %v305
    %390 = vmatprep.subr.bf16.mxu0 %v302
    %391 = vmatpush1.bf16.msra.mxu0 %v301
    %392 = vmatprep.subr.bf16.mxu0 %v298
    %393 = vmatpush1.bf16.msra.mxu0 %v297
    %394 = vmatprep.subr.bf16.mxu0 %v294
    %395 = vmatpush1.bf16.msra.mxu0 %v293
    %396 = vmatprep.subr.bf16.mxu0 %v290
    %397 = vmatpush1.bf16.msra.mxu0 %v289
    %398 = vmatprep.subr.bf16.mxu0 %v286
    %399 = vmatpush1.bf16.msra.mxu0 %v285
    %400 = vmatprep.subr.bf16.mxu0 %v282
    %401 = vmatpush1.bf16.msra.mxu0 %v281
    %402 = vmatprep.subr.bf16.mxu0 0
    %403 = vmatpush2.bf16.msra.mxu0 0
    %404 = vmatprep.subr.bf16.mxu0 0
    %405 = vmatpush2.bf16.msra.mxu0 0
    %406 = vmatprep.subr.bf16.mxu0 0
    %407 = vmatpush2.bf16.msra.mxu0 0
    %408 = vmatprep.subr.bf16.mxu0 0
    %409 = vmatpush2.bf16.msra.mxu0 0
    %410 = vmatprep.subr.bf16.mxu0 0
    %411 = vmatpush2.bf16.msra.mxu0 0
    %412 = vmatprep.subr.bf16.mxu0 0
    %413 = vmatpush2.bf16.msra.mxu0 0
    %414 = vmatprep.subr.bf16.mxu0 0
    %415 = vmatpush2.bf16.msra.mxu0 0
    %416 = vmatprep.subr.bf16.mxu0 0
    %417 = vmatpush2.bf16.msra.mxu0 0
    %418 = vmatprep.mubr.bf16.mxu0 0
    %419 = vmatmul.mubr.bf16.gmra.mxu0 %v181
    %v420 = vpop.f32.mrf.mxu0
    %v421 = vadd.f32 %v168, %v420
    %v422 = vpop.f32.mrf.mxu0
    %v423 = vadd.f32 %v172, %v422
    %v424 = vpop.f32.mrf.mxu0
    %v425 = vadd.f32 %v168, %v424
    %v426 = vpop.f32.mrf.mxu0
    %v427 = vadd.f32 %v172, %v426
    %428 = vdwg.mxu0
    %v429 = vmax.f32 %v378, 0.0
    %v430 = vmax.f32 %v380, 0.0
    %v431 = vmax.f32 %v421, 0.0
    %v432 = vmax.f32 %v423, 0.0
    %v433 = vmax.f32 %v382, 0.0
    %v434 = vmax.f32 %v384, 0.0
    %v435 = vmax.f32 %v425, 0.0
    %v436 = vmax.f32 %v427, 0.0
    %v437 = vpack.c.bf16 %v433, %v429
    %v438 = vpack.c.bf16 %v434, %v430
    %v439 = vpack.c.bf16 %v435, %v431
    %v440 = vpack.c.bf16 %v436, %v432
    %v441 = vld [vmem:[#allocation7] sm:$0xff]
    %v442 = vld [vmem:[#allocation7 + $0x8] sm:$0xff]
    %v443 = vld [vmem:[#allocation7 + $0x10] sm:$0xff]
    %v444 = vld [vmem:[#allocation7 + $0x18] sm:$0xff]
    %v445 = vld [vmem:[#allocation7 + $0x20] sm:$0xff]
    %v446 = vld [vmem:[#allocation7 + $0x28] sm:$0xff]
    %v447 = vld [vmem:[#allocation7 + $0x30] sm:$0xff]
    %v448 = vld [vmem:[#allocation7 + $0x38] sm:$0xff]
    %v449 = vld [vmem:[#allocation7 + $0x40] sm:$0xff]
    %v450 = vld [vmem:[#allocation7 + $0x48] sm:$0xff]
    %v451 = vld [vmem:[#allocation7 + $0x50] sm:$0xff]
    %v452 = vld [vmem:[#allocation7 + $0x58] sm:$0xff]
    %v453 = vld [vmem:[#allocation7 + $0x60] sm:$0xff]
    %v454 = vld [vmem:[#allocation7 + $0x68] sm:$0xff]
    %v455 = vld [vmem:[#allocation7 + $0x70] sm:$0xff]
    %v456 = vld [vmem:[#allocation7 + $0x78] sm:$0xff]
    %v457 = vld [vmem:[#allocation7 + $0x80] sm:$0xff]
    %v458 = vld [vmem:[#allocation7 + $0x88] sm:$0xff]
    %v459 = vld [vmem:[#allocation7 + $0x90] sm:$0xff]
    %v460 = vld [vmem:[#allocation7 + $0x98] sm:$0xff]
    %v461 = vld [vmem:[#allocation7 + $0xa0] sm:$0xff]
    %v462 = vld [vmem:[#allocation7 + $0xa8] sm:$0xff]
    %v463 = vld [vmem:[#allocation7 + $0xb0] sm:$0xff]
    %v464 = vld [vmem:[#allocation7 + $0xb8] sm:$0xff]
    %v465 = vld [vmem:[#allocation7 + $0xc0] sm:$0xff]
    %v466 = vld [vmem:[#allocation7 + $0xc8] sm:$0xff]
    %v467 = vld [vmem:[#allocation7 + $0xd0] sm:$0xff]
    %v468 = vld [vmem:[#allocation7 + $0xd8] sm:$0xff]
    %v469 = vld [vmem:[#allocation7 + $0xe0] sm:$0xff]
    %v470 = vld [vmem:[#allocation7 + $0xe8] sm:$0xff]
    %v471 = vld [vmem:[#allocation7 + $0xf0] sm:$0xff]
    %v472 = vld [vmem:[#allocation7 + $0xf8] sm:$0xff]
    %v473 = vld [vmem:[#allocation7 + $0x100] sm:$0xff]
    %v474 = vld [vmem:[#allocation7 + $0x108] sm:$0xff]
    %v475 = vld [vmem:[#allocation7 + $0x110] sm:$0xff]
    %v476 = vld [vmem:[#allocation7 + $0x118] sm:$0xff]
    %v477 = vld [vmem:[#allocation7 + $0x120] sm:$0xff]
    %v478 = vld [vmem:[#allocation7 + $0x128] sm:$0xff]
    %v479 = vld [vmem:[#allocation7 + $0x130] sm:$0xff]
    %v480 = vld [vmem:[#allocation7 + $0x138] sm:$0xff]
    %v481 = vld [vmem:[#allocation7 + $0x140] sm:$0xff]
    %v482 = vld [vmem:[#allocation7 + $0x148] sm:$0xff]
    %v483 = vld [vmem:[#allocation7 + $0x150] sm:$0xff]
    %v484 = vld [vmem:[#allocation7 + $0x158] sm:$0xff]
    %v485 = vld [vmem:[#allocation7 + $0x160] sm:$0xff]
    %v486 = vld [vmem:[#allocation7 + $0x168] sm:$0xff]
    %v487 = vld [vmem:[#allocation7 + $0x170] sm:$0xff]
    %v488 = vld [vmem:[#allocation7 + $0x178] sm:$0xff]
    %v489 = vld [vmem:[#allocation7 + $0x180] sm:$0xff]
    %v490 = vld [vmem:[#allocation7 + $0x188] sm:$0xff]
    %v491 = vld [vmem:[#allocation7 + $0x190] sm:$0xff]
    %v492 = vld [vmem:[#allocation7 + $0x198] sm:$0xff]
    %v493 = vld [vmem:[#allocation7 + $0x1a0] sm:$0xff]
    %v494 = vld [vmem:[#allocation7 + $0x1a8] sm:$0xff]
    %v495 = vld [vmem:[#allocation7 + $0x1b0] sm:$0xff]
    %v496 = vld [vmem:[#allocation7 + $0x1b8] sm:$0xff]
    %v497 = vld [vmem:[#allocation7 + $0x1c0] sm:$0xff]
    %v498 = vld [vmem:[#allocation7 + $0x1c8] sm:$0xff]
    %v499 = vld [vmem:[#allocation7 + $0x1d0] sm:$0xff]
    %v500 = vld [vmem:[#allocation7 + $0x1d8] sm:$0xff]
    %v501 = vld [vmem:[#allocation7 + $0x1e0] sm:$0xff]
    %v502 = vld [vmem:[#allocation7 + $0x1e8] sm:$0xff]
    %v503 = vld [vmem:[#allocation7 + $0x1f0] sm:$0xff]
    %v504 = vld [vmem:[#allocation7 + $0x1f8] sm:$0xff]
    %v505 = vld [vmem:[#allocation7 + $0x200] sm:$0xff]
    %v506 = vld [vmem:[#allocation7 + $0x208] sm:$0xff]
    %v507 = vld [vmem:[#allocation7 + $0x210] sm:$0xff]
    %v508 = vld [vmem:[#allocation7 + $0x218] sm:$0xff]
    %v509 = vld [vmem:[#allocation7 + $0x220] sm:$0xff]
    %v510 = vld [vmem:[#allocation7 + $0x228] sm:$0xff]
    %v511 = vld [vmem:[#allocation7 + $0x230] sm:$0xff]
    %v512 = vld [vmem:[#allocation7 + $0x238] sm:$0xff]
    %v513 = vld [vmem:[#allocation7 + $0x240] sm:$0xff]
    %v514 = vld [vmem:[#allocation7 + $0x248] sm:$0xff]
    %v515 = vld [vmem:[#allocation7 + $0x250] sm:$0xff]
    %v516 = vld [vmem:[#allocation7 + $0x258] sm:$0xff]
    %v517 = vld [vmem:[#allocation7 + $0x260] sm:$0xff]
    %v518 = vld [vmem:[#allocation7 + $0x268] sm:$0xff]
    %v519 = vld [vmem:[#allocation7 + $0x270] sm:$0xff]
    %v520 = vld [vmem:[#allocation7 + $0x278] sm:$0xff]
    %v521 = vld [vmem:[#allocation7 + $0x280] sm:$0xff]
    %v522 = vld [vmem:[#allocation7 + $0x288] sm:$0xff]
    %v523 = vld [vmem:[#allocation7 + $0x290] sm:$0xff]
    %v524 = vld [vmem:[#allocation7 + $0x298] sm:$0xff]
    %v525 = vld [vmem:[#allocation7 + $0x2a0] sm:$0xff]
    %v526 = vld [vmem:[#allocation7 + $0x2a8] sm:$0xff]
    %v527 = vld [vmem:[#allocation7 + $0x2b0] sm:$0xff]
    %v528 = vld [vmem:[#allocation7 + $0x2b8] sm:$0xff]
    %v529 = vld [vmem:[#allocation7 + $0x2c0] sm:$0xff]
    %v530 = vld [vmem:[#allocation7 + $0x2c8] sm:$0xff]
    %v531 = vld [vmem:[#allocation7 + $0x2d0] sm:$0xff]
    %v532 = vld [vmem:[#allocation7 + $0x2d8] sm:$0xff]
    %v533 = vld [vmem:[#allocation7 + $0x2e0] sm:$0xff]
    %v534 = vld [vmem:[#allocation7 + $0x2e8] sm:$0xff]
    %v535 = vld [vmem:[#allocation7 + $0x2f0] sm:$0xff]
    %v536 = vld [vmem:[#allocation7 + $0x2f8] sm:$0xff]
    %v537 = vld [vmem:[#allocation7 + $0x300] sm:$0xff]
    %v538 = vld [vmem:[#allocation7 + $0x308] sm:$0xff]
    %v539 = vld [vmem:[#allocation7 + $0x310] sm:$0xff]
    %v540 = vld [vmem:[#allocation7 + $0x318] sm:$0xff]
    %v541 = vld [vmem:[#allocation7 + $0x320] sm:$0xff]
    %v542 = vld [vmem:[#allocation7 + $0x328] sm:$0xff]
    %v543 = vld [vmem:[#allocation7 + $0x330] sm:$0xff]
    %v544 = vld [vmem:[#allocation7 + $0x338] sm:$0xff]
    %v545 = vld [vmem:[#allocation7 + $0x340] sm:$0xff]
    %v546 = vld [vmem:[#allocation7 + $0x348] sm:$0xff]
    %v547 = vld [vmem:[#allocation7 + $0x350] sm:$0xff]
    %v548 = vld [vmem:[#allocation7 + $0x358] sm:$0xff]
    %v549 = vld [vmem:[#allocation7 + $0x360] sm:$0xff]
    %v550 = vld [vmem:[#allocation7 + $0x368] sm:$0xff]
    %v551 = vld [vmem:[#allocation7 + $0x370] sm:$0xff]
    %v552 = vld [vmem:[#allocation7 + $0x378] sm:$0xff]
    %v553 = vld [vmem:[#allocation7 + $0x380] sm:$0xff]
    %v554 = vld [vmem:[#allocation7 + $0x388] sm:$0xff]
    %v555 = vld [vmem:[#allocation7 + $0x390] sm:$0xff]
    %v556 = vld [vmem:[#allocation7 + $0x398] sm:$0xff]
    %v557 = vld [vmem:[#allocation7 + $0x3a0] sm:$0xff]
    %v558 = vld [vmem:[#allocation7 + $0x3a8] sm:$0xff]
    %v559 = vld [vmem:[#allocation7 + $0x3b0] sm:$0xff]
    %v560 = vld [vmem:[#allocation7 + $0x3b8] sm:$0xff]
    %v561 = vld [vmem:[#allocation7 + $0x3c0] sm:$0xff]
    %v562 = vld [vmem:[#allocation7 + $0x3c8] sm:$0xff]
    %v563 = vld [vmem:[#allocation7 + $0x3d0] sm:$0xff]
    %v564 = vld [vmem:[#allocation7 + $0x3d8] sm:$0xff]
    %v565 = vld [vmem:[#allocation7 + $0x3e0] sm:$0xff]
    %v566 = vld [vmem:[#allocation7 + $0x3e8] sm:$0xff]
    %v567 = vld [vmem:[#allocation7 + $0x3f0] sm:$0xff]
    %v568 = vld [vmem:[#allocation7 + $0x3f8] sm:$0xff]
    %v569 = vld [vmem:[#allocation13 + $0x4] sm:$0xf]
    %v571 = vlaneseq
    %v572 = vshrl.u32 %v571, 7
    %v573 = vsub.s32 0, %v572
    %v574 = vrot.slane %v569, %v573
    %v575 = vlaneseq
    %v576 = vshrl.u32 %v575, 7
    %v577 = vsub.s32 1, %v576
    %v578 = vrot.slane %v569, %v577
    %v579 = vlaneseq
    %v580 = vshrl.u32 %v579, 7
    %v581 = vsub.s32 2, %v580
    %v582 = vrot.slane %v569, %v581
    %v583 = vlaneseq
    %v584 = vshrl.u32 %v583, 7
    %v585 = vsub.s32 3, %v584
    %v586 = vrot.slane %v569, %v585
    %v719 = vunpack.c.l.b16 %v441
    %v720 = vunpack.c.h.b16 %v441
    %v721 = vunpack.c.l.b16 %v442
    %v722 = vunpack.c.h.b16 %v442
    %v723 = vunpack.c.l.b16 %v443
    %v724 = vunpack.c.h.b16 %v443
    %v725 = vunpack.c.l.b16 %v444
    %v726 = vunpack.c.h.b16 %v444
    %v727 = vunpack.c.l.b16 %v445
    %v728 = vunpack.c.h.b16 %v445
    %v729 = vunpack.c.l.b16 %v446
    %v730 = vunpack.c.h.b16 %v446
    %v731 = vunpack.c.l.b16 %v447
    %v732 = vunpack.c.h.b16 %v447
    %v733 = vunpack.c.l.b16 %v448
    %v734 = vunpack.c.h.b16 %v448
    %v735 = vunpack.c.l.b16 %v449
    %v736 = vunpack.c.h.b16 %v449
    %v737 = vunpack.c.l.b16 %v450
    %v738 = vunpack.c.h.b16 %v450
    %v739 = vunpack.c.l.b16 %v451
    %v740 = vunpack.c.h.b16 %v451
    %v741 = vunpack.c.l.b16 %v452
    %v742 = vunpack.c.h.b16 %v452
    %v743 = vunpack.c.l.b16 %v453
    %v744 = vunpack.c.h.b16 %v453
    %v745 = vunpack.c.l.b16 %v454
    %v746 = vunpack.c.h.b16 %v454
    %v747 = vunpack.c.l.b16 %v455
    %v748 = vunpack.c.h.b16 %v455
    %v749 = vunpack.c.l.b16 %v456
    %v750 = vunpack.c.h.b16 %v456
    %v751 = vunpack.c.l.b16 %v457
    %v752 = vunpack.c.h.b16 %v457
    %v753 = vunpack.c.l.b16 %v458
    %v754 = vunpack.c.h.b16 %v458
    %v755 = vunpack.c.l.b16 %v459
    %v756 = vunpack.c.h.b16 %v459
    %v757 = vunpack.c.l.b16 %v460
    %v758 = vunpack.c.h.b16 %v460
    %v759 = vunpack.c.l.b16 %v461
    %v760 = vunpack.c.h.b16 %v461
    %v761 = vunpack.c.l.b16 %v462
    %v762 = vunpack.c.h.b16 %v462
    %v763 = vunpack.c.l.b16 %v463
    %v764 = vunpack.c.h.b16 %v463
    %v765 = vunpack.c.l.b16 %v464
    %v766 = vunpack.c.h.b16 %v464
    %v767 = vunpack.c.l.b16 %v465
    %v768 = vunpack.c.h.b16 %v465
    %v769 = vunpack.c.l.b16 %v466
    %v770 = vunpack.c.h.b16 %v466
    %v771 = vunpack.c.l.b16 %v467
    %v772 = vunpack.c.h.b16 %v467
    %v773 = vunpack.c.l.b16 %v468
    %v774 = vunpack.c.h.b16 %v468
    %v775 = vunpack.c.l.b16 %v469
    %v776 = vunpack.c.h.b16 %v469
    %v777 = vunpack.c.l.b16 %v470
    %v778 = vunpack.c.h.b16 %v470
    %v779 = vunpack.c.l.b16 %v471
    %v780 = vunpack.c.h.b16 %v471
    %v781 = vunpack.c.l.b16 %v472
    %v782 = vunpack.c.h.b16 %v472
    %v783 = vunpack.c.l.b16 %v473
    %v784 = vunpack.c.h.b16 %v473
    %v785 = vunpack.c.l.b16 %v474
    %v786 = vunpack.c.h.b16 %v474
    %v787 = vunpack.c.l.b16 %v475
    %v788 = vunpack.c.h.b16 %v475
    %v789 = vunpack.c.l.b16 %v476
    %v790 = vunpack.c.h.b16 %v476
    %v791 = vunpack.c.l.b16 %v477
    %v792 = vunpack.c.h.b16 %v477
    %v793 = vunpack.c.l.b16 %v478
    %v794 = vunpack.c.h.b16 %v478
    %v795 = vunpack.c.l.b16 %v479
    %v796 = vunpack.c.h.b16 %v479
    %v797 = vunpack.c.l.b16 %v480
    %v798 = vunpack.c.h.b16 %v480
    %v799 = vunpack.c.l.b16 %v481
    %v800 = vunpack.c.h.b16 %v481
    %v801 = vunpack.c.l.b16 %v482
    %v802 = vunpack.c.h.b16 %v482
    %v803 = vunpack.c.l.b16 %v483
    %v804 = vunpack.c.h.b16 %v483
    %v805 = vunpack.c.l.b16 %v484
    %v806 = vunpack.c.h.b16 %v484
    %v807 = vunpack.c.l.b16 %v485
    %v808 = vunpack.c.h.b16 %v485
    %v809 = vunpack.c.l.b16 %v486
    %v810 = vunpack.c.h.b16 %v486
    %v811 = vunpack.c.l.b16 %v487
    %v812 = vunpack.c.h.b16 %v487
    %v813 = vunpack.c.l.b16 %v488
    %v814 = vunpack.c.h.b16 %v488
    %v815 = vunpack.c.l.b16 %v489
    %v816 = vunpack.c.h.b16 %v489
    %v817 = vunpack.c.l.b16 %v490
    %v818 = vunpack.c.h.b16 %v490
    %v819 = vunpack.c.l.b16 %v491
    %v820 = vunpack.c.h.b16 %v491
    %v821 = vunpack.c.l.b16 %v492
    %v822 = vunpack.c.h.b16 %v492
    %v823 = vunpack.c.l.b16 %v493
    %v824 = vunpack.c.h.b16 %v493
    %v825 = vunpack.c.l.b16 %v494
    %v826 = vunpack.c.h.b16 %v494
    %v827 = vunpack.c.l.b16 %v495
    %v828 = vunpack.c.h.b16 %v495
    %v829 = vunpack.c.l.b16 %v496
    %v830 = vunpack.c.h.b16 %v496
    %v831 = vunpack.c.l.b16 %v497
    %v832 = vunpack.c.h.b16 %v497
    %v833 = vunpack.c.l.b16 %v498
    %v834 = vunpack.c.h.b16 %v498
    %v835 = vunpack.c.l.b16 %v499
    %v836 = vunpack.c.h.b16 %v499
    %v837 = vunpack.c.l.b16 %v500
    %v838 = vunpack.c.h.b16 %v500
    %v839 = vunpack.c.l.b16 %v501
    %v840 = vunpack.c.h.b16 %v501
    %v841 = vunpack.c.l.b16 %v502
    %v842 = vunpack.c.h.b16 %v502
    %v843 = vunpack.c.l.b16 %v503
    %v844 = vunpack.c.h.b16 %v503
    %v845 = vunpack.c.l.b16 %v504
    %v846 = vunpack.c.h.b16 %v504
    %v847 = vunpack.c.l.b16 %v505
    %v848 = vunpack.c.h.b16 %v505
    %v849 = vunpack.c.l.b16 %v506
    %v850 = vunpack.c.h.b16 %v506
    %v851 = vunpack.c.l.b16 %v507
    %v852 = vunpack.c.h.b16 %v507
    %v853 = vunpack.c.l.b16 %v508
    %v854 = vunpack.c.h.b16 %v508
    %v855 = vunpack.c.l.b16 %v509
    %v856 = vunpack.c.h.b16 %v509
    %v857 = vunpack.c.l.b16 %v510
    %v858 = vunpack.c.h.b16 %v510
    %v859 = vunpack.c.l.b16 %v511
    %v860 = vunpack.c.h.b16 %v511
    %v861 = vunpack.c.l.b16 %v512
    %v862 = vunpack.c.h.b16 %v512
    %v863 = vunpack.c.l.b16 %v513
    %v864 = vunpack.c.h.b16 %v513
    %v865 = vunpack.c.l.b16 %v514
    %v866 = vunpack.c.h.b16 %v514
    %v867 = vunpack.c.l.b16 %v515
    %v868 = vunpack.c.h.b16 %v515
    %v869 = vunpack.c.l.b16 %v516
    %v870 = vunpack.c.h.b16 %v516
    %v871 = vunpack.c.l.b16 %v517
    %v872 = vunpack.c.h.b16 %v517
    %v873 = vunpack.c.l.b16 %v518
    %v874 = vunpack.c.h.b16 %v518
    %v875 = vunpack.c.l.b16 %v519
    %v876 = vunpack.c.h.b16 %v519
    %v877 = vunpack.c.l.b16 %v520
    %v878 = vunpack.c.h.b16 %v520
    %v879 = vunpack.c.l.b16 %v521
    %v880 = vunpack.c.h.b16 %v521
    %v881 = vunpack.c.l.b16 %v522
    %v882 = vunpack.c.h.b16 %v522
    %v883 = vunpack.c.l.b16 %v523
    %v884 = vunpack.c.h.b16 %v523
    %v885 = vunpack.c.l.b16 %v524
    %v886 = vunpack.c.h.b16 %v524
    %v887 = vunpack.c.l.b16 %v525
    %v888 = vunpack.c.h.b16 %v525
    %v889 = vunpack.c.l.b16 %v526
    %v890 = vunpack.c.h.b16 %v526
    %v891 = vunpack.c.l.b16 %v527
    %v892 = vunpack.c.h.b16 %v527
    %v893 = vunpack.c.l.b16 %v528
    %v894 = vunpack.c.h.b16 %v528
    %v895 = vunpack.c.l.b16 %v529
    %v896 = vunpack.c.h.b16 %v529
    %v897 = vunpack.c.l.b16 %v530
    %v898 = vunpack.c.h.b16 %v530
    %v899 = vunpack.c.l.b16 %v531
    %v900 = vunpack.c.h.b16 %v531
    %v901 = vunpack.c.l.b16 %v532
    %v902 = vunpack.c.h.b16 %v532
    %v903 = vunpack.c.l.b16 %v533
    %v904 = vunpack.c.h.b16 %v533
    %v905 = vunpack.c.l.b16 %v534
    %v906 = vunpack.c.h.b16 %v534
    %v907 = vunpack.c.l.b16 %v535
    %v908 = vunpack.c.h.b16 %v535
    %v909 = vunpack.c.l.b16 %v536
    %v910 = vunpack.c.h.b16 %v536
    %v911 = vunpack.c.l.b16 %v537
    %v912 = vunpack.c.h.b16 %v537
    %v913 = vunpack.c.l.b16 %v538
    %v914 = vunpack.c.h.b16 %v538
    %v915 = vunpack.c.l.b16 %v539
    %v916 = vunpack.c.h.b16 %v539
    %v917 = vunpack.c.l.b16 %v540
    %v918 = vunpack.c.h.b16 %v540
    %v919 = vunpack.c.l.b16 %v541
    %v920 = vunpack.c.h.b16 %v541
    %v921 = vunpack.c.l.b16 %v542
    %v922 = vunpack.c.h.b16 %v542
    %v923 = vunpack.c.l.b16 %v543
    %v924 = vunpack.c.h.b16 %v543
    %v925 = vunpack.c.l.b16 %v544
    %v926 = vunpack.c.h.b16 %v544
    %v927 = vunpack.c.l.b16 %v545
    %v928 = vunpack.c.h.b16 %v545
    %v929 = vunpack.c.l.b16 %v546
    %v930 = vunpack.c.h.b16 %v546
    %v931 = vunpack.c.l.b16 %v547
    %v932 = vunpack.c.h.b16 %v547
    %v933 = vunpack.c.l.b16 %v548
    %v934 = vunpack.c.h.b16 %v548
    %v935 = vunpack.c.l.b16 %v549
    %v936 = vunpack.c.h.b16 %v549
    %v937 = vunpack.c.l.b16 %v550
    %v938 = vunpack.c.h.b16 %v550
    %v939 = vunpack.c.l.b16 %v551
    %v940 = vunpack.c.h.b16 %v551
    %v941 = vunpack.c.l.b16 %v552
    %v942 = vunpack.c.h.b16 %v552
    %v943 = vunpack.c.l.b16 %v553
    %v944 = vunpack.c.h.b16 %v553
    %v945 = vunpack.c.l.b16 %v554
    %v946 = vunpack.c.h.b16 %v554
    %v947 = vunpack.c.l.b16 %v555
    %v948 = vunpack.c.h.b16 %v555
    %v949 = vunpack.c.l.b16 %v556
    %v950 = vunpack.c.h.b16 %v556
    %v951 = vunpack.c.l.b16 %v557
    %v952 = vunpack.c.h.b16 %v557
    %v953 = vunpack.c.l.b16 %v558
    %v954 = vunpack.c.h.b16 %v558
    %v955 = vunpack.c.l.b16 %v559
    %v956 = vunpack.c.h.b16 %v559
    %v957 = vunpack.c.l.b16 %v560
    %v958 = vunpack.c.h.b16 %v560
    %v959 = vunpack.c.l.b16 %v561
    %v960 = vunpack.c.h.b16 %v561
    %v961 = vunpack.c.l.b16 %v562
    %v962 = vunpack.c.h.b16 %v562
    %v963 = vunpack.c.l.b16 %v563
    %v964 = vunpack.c.h.b16 %v563
    %v965 = vunpack.c.l.b16 %v564
    %v966 = vunpack.c.h.b16 %v564
    %v967 = vunpack.c.l.b16 %v565
    %v968 = vunpack.c.h.b16 %v565
    %v969 = vunpack.c.l.b16 %v566
    %v970 = vunpack.c.h.b16 %v566
    %v971 = vunpack.c.l.b16 %v567
    %v972 = vunpack.c.h.b16 %v567
    %v973 = vunpack.c.l.b16 %v568
    %v974 = vunpack.c.h.b16 %v568
    %v975 = vpack.c.b16 %v723, %v719
    %v976 = vpack.c.b16 %v724, %v720
    %v977 = vpack.c.b16 %v725, %v721
    %v978 = vpack.c.b16 %v726, %v722
    %v979 = vpack.c.b16 %v731, %v727
    %v980 = vpack.c.b16 %v732, %v728
    %v981 = vpack.c.b16 %v733, %v729
    %v982 = vpack.c.b16 %v734, %v730
    %v983 = vpack.c.b16 %v739, %v735
    %v984 = vpack.c.b16 %v740, %v736
    %v985 = vpack.c.b16 %v741, %v737
    %v986 = vpack.c.b16 %v742, %v738
    %v987 = vpack.c.b16 %v747, %v743
    %v988 = vpack.c.b16 %v748, %v744
    %v989 = vpack.c.b16 %v749, %v745
    %v990 = vpack.c.b16 %v750, %v746
    %v991 = vpack.c.b16 %v755, %v751
    %v992 = vpack.c.b16 %v756, %v752
    %v993 = vpack.c.b16 %v757, %v753
    %v994 = vpack.c.b16 %v758, %v754
    %v995 = vpack.c.b16 %v763, %v759
    %v996 = vpack.c.b16 %v764, %v760
    %v997 = vpack.c.b16 %v765, %v761
    %v998 = vpack.c.b16 %v766, %v762
    %v999 = vpack.c.b16 %v771, %v767
    %v1000 = vpack.c.b16 %v772, %v768
    %v1001 = vpack.c.b16 %v773, %v769
    %v1002 = vpack.c.b16 %v774, %v770
    %v1003 = vpack.c.b16 %v779, %v775
    %v1004 = vpack.c.b16 %v780, %v776
    %v1005 = vpack.c.b16 %v781, %v777
    %v1006 = vpack.c.b16 %v782, %v778
    %v1007 = vpack.c.b16 %v787, %v783
    %v1008 = vpack.c.b16 %v788, %v784
    %v1009 = vpack.c.b16 %v789, %v785
    %v1010 = vpack.c.b16 %v790, %v786
    %v1011 = vpack.c.b16 %v795, %v791
    %v1012 = vpack.c.b16 %v796, %v792
    %v1013 = vpack.c.b16 %v797, %v793
    %v1014 = vpack.c.b16 %v798, %v794
    %v1015 = vpack.c.b16 %v803, %v799
    %v1016 = vpack.c.b16 %v804, %v800
    %v1017 = vpack.c.b16 %v805, %v801
    %v1018 = vpack.c.b16 %v806, %v802
    %v1019 = vpack.c.b16 %v811, %v807
    %v1020 = vpack.c.b16 %v812, %v808
    %v1021 = vpack.c.b16 %v813, %v809
    %v1022 = vpack.c.b16 %v814, %v810
    %v1023 = vpack.c.b16 %v819, %v815
    %v1024 = vpack.c.b16 %v820, %v816
    %v1025 = vpack.c.b16 %v821, %v817
    %v1026 = vpack.c.b16 %v822, %v818
    %v1027 = vpack.c.b16 %v827, %v823
    %v1028 = vpack.c.b16 %v828, %v824
    %v1029 = vpack.c.b16 %v829, %v825
    %v1030 = vpack.c.b16 %v830, %v826
    %v1031 = vpack.c.b16 %v835, %v831
    %v1032 = vpack.c.b16 %v836, %v832
    %v1033 = vpack.c.b16 %v837, %v833
    %v1034 = vpack.c.b16 %v838, %v834
    %v1035 = vpack.c.b16 %v843, %v839
    %v1036 = vpack.c.b16 %v844, %v840
    %v1037 = vpack.c.b16 %v845, %v841
    %v1038 = vpack.c.b16 %v846, %v842
    %v1039 = vpack.c.b16 %v851, %v847
    %v1040 = vpack.c.b16 %v852, %v848
    %v1041 = vpack.c.b16 %v853, %v849
    %v1042 = vpack.c.b16 %v854, %v850
    %v1043 = vpack.c.b16 %v859, %v855
    %v1044 = vpack.c.b16 %v860, %v856
    %v1045 = vpack.c.b16 %v861, %v857
    %v1046 = vpack.c.b16 %v862, %v858
    %v1047 = vpack.c.b16 %v867, %v863
    %v1048 = vpack.c.b16 %v868, %v864
    %v1049 = vpack.c.b16 %v869, %v865
    %v1050 = vpack.c.b16 %v870, %v866
    %v1051 = vpack.c.b16 %v875, %v871
    %v1052 = vpack.c.b16 %v876, %v872
    %v1053 = vpack.c.b16 %v877, %v873
    %v1054 = vpack.c.b16 %v878, %v874
    %v1055 = vpack.c.b16 %v883, %v879
    %v1056 = vpack.c.b16 %v884, %v880
    %v1057 = vpack.c.b16 %v885, %v881
    %v1058 = vpack.c.b16 %v886, %v882
    %v1059 = vpack.c.b16 %v891, %v887
    %v1060 = vpack.c.b16 %v892, %v888
    %v1061 = vpack.c.b16 %v893, %v889
    %v1062 = vpack.c.b16 %v894, %v890
    %v1063 = vpack.c.b16 %v899, %v895
    %v1064 = vpack.c.b16 %v900, %v896
    %v1065 = vpack.c.b16 %v901, %v897
    %v1066 = vpack.c.b16 %v902, %v898
    %v1067 = vpack.c.b16 %v907, %v903
    %v1068 = vpack.c.b16 %v908, %v904
    %v1069 = vpack.c.b16 %v909, %v905
    %v1070 = vpack.c.b16 %v910, %v906
    %v1071 = vpack.c.b16 %v915, %v911
    %v1072 = vpack.c.b16 %v916, %v912
    %v1073 = vpack.c.b16 %v917, %v913
    %v1074 = vpack.c.b16 %v918, %v914
    %v1075 = vpack.c.b16 %v923, %v919
    %v1076 = vpack.c.b16 %v924, %v920
    %v1077 = vpack.c.b16 %v925, %v921
    %v1078 = vpack.c.b16 %v926, %v922
    %v1079 = vpack.c.b16 %v931, %v927
    %v1080 = vpack.c.b16 %v932, %v928
    %v1081 = vpack.c.b16 %v933, %v929
    %v1082 = vpack.c.b16 %v934, %v930
    %v1083 = vpack.c.b16 %v939, %v935
    %v1084 = vpack.c.b16 %v940, %v936
    %v1085 = vpack.c.b16 %v941, %v937
    %v1086 = vpack.c.b16 %v942, %v938
    %v1087 = vpack.c.b16 %v947, %v943
    %v1088 = vpack.c.b16 %v948, %v944
    %v1089 = vpack.c.b16 %v949, %v945
    %v1090 = vpack.c.b16 %v950, %v946
    %v1091 = vpack.c.b16 %v955, %v951
    %v1092 = vpack.c.b16 %v956, %v952
    %v1093 = vpack.c.b16 %v957, %v953
    %v1094 = vpack.c.b16 %v958, %v954
    %v1095 = vpack.c.b16 %v963, %v959
    %v1096 = vpack.c.b16 %v964, %v960
    %v1097 = vpack.c.b16 %v965, %v961
    %v1098 = vpack.c.b16 %v966, %v962
    %v1099 = vpack.c.b16 %v971, %v967
    %v1100 = vpack.c.b16 %v972, %v968
    %v1101 = vpack.c.b16 %v973, %v969
    %v1102 = vpack.c.b16 %v974, %v970
    %1231 = vmatprep.subr.bf16.mxu0 %v1004
    %1232 = vmatpush1.bf16.msra.mxu0 %v1003
    %1233 = vmatprep.subr.bf16.mxu0 %v1000
    %1234 = vmatpush1.bf16.msra.mxu0 %v999
    %1235 = vmatprep.subr.bf16.mxu0 %v996
    %1236 = vmatpush1.bf16.msra.mxu0 %v995
    %1237 = vmatprep.subr.bf16.mxu0 %v992
    %1238 = vmatpush1.bf16.msra.mxu0 %v991
    %1239 = vmatprep.subr.bf16.mxu0 %v988
    %1240 = vmatpush1.bf16.msra.mxu0 %v987
    %1241 = vmatprep.subr.bf16.mxu0 %v984
    %1242 = vmatpush1.bf16.msra.mxu0 %v983
    %1243 = vmatprep.subr.bf16.mxu0 %v980
    %1244 = vmatpush1.bf16.msra.mxu0 %v979
    %1245 = vmatprep.subr.bf16.mxu0 %v976
    %1246 = vmatpush1.bf16.msra.mxu0 %v975
    %1247 = vmatprep.subr.bf16.mxu0 %v1036
    %1248 = vmatpush2.bf16.msra.mxu0 %v1035
    %1249 = vmatprep.subr.bf16.mxu0 %v1032
    %1250 = vmatpush2.bf16.msra.mxu0 %v1031
    %1251 = vmatprep.subr.bf16.mxu0 %v1028
    %1252 = vmatpush2.bf16.msra.mxu0 %v1027
    %1253 = vmatprep.subr.bf16.mxu0 %v1024
    %1254 = vmatpush2.bf16.msra.mxu0 %v1023
    %1255 = vmatprep.subr.bf16.mxu0 %v1020
    %1256 = vmatpush2.bf16.msra.mxu0 %v1019
    %1257 = vmatprep.subr.bf16.mxu0 %v1016
    %1258 = vmatpush2.bf16.msra.mxu0 %v1015
    %1259 = vmatprep.subr.bf16.mxu0 %v1012
    %1260 = vmatpush2.bf16.msra.mxu0 %v1011
    %1261 = vmatprep.subr.bf16.mxu0 %v1008
    %1262 = vmatpush2.bf16.msra.mxu0 %v1007
    %1263 = vmatprep.mubr.bf16.mxu0 %v438
    %1264 = vmatmul.mubr.bf16.gmra.mxu0 %v437
    %v1265 = vpop.f32.mrf.mxu0
    %v1266 = vadd.f32 %v574, %v1265
    %v1267 = vpop.f32.mrf.mxu0
    %v1268 = vadd.f32 %v578, %v1267
    %v1269 = vpop.f32.mrf.mxu0
    %v1270 = vadd.f32 %v574, %v1269
    %v1271 = vpop.f32.mrf.mxu0
    %v1272 = vadd.f32 %v578, %v1271
    %1273 = vdwg.mxu0
    %1274 = vmatprep.subr.bf16.mxu0 %v1068
    %1275 = vmatpush1.bf16.msra.mxu0 %v1067
    %1276 = vmatprep.subr.bf16.mxu0 %v1064
    %1277 = vmatpush1.bf16.msra.mxu0 %v1063
    %1278 = vmatprep.subr.bf16.mxu0 %v1060
    %1279 = vmatpush1.bf16.msra.mxu0 %v1059
    %1280 = vmatprep.subr.bf16.mxu0 %v1056
    %1281 = vmatpush1.bf16.msra.mxu0 %v1055
    %1282 = vmatprep.subr.bf16.mxu0 %v1052
    %1283 = vmatpush1.bf16.msra.mxu0 %v1051
    %1284 = vmatprep.subr.bf16.mxu0 %v1048
    %1285 = vmatpush1.bf16.msra.mxu0 %v1047
    %1286 = vmatprep.subr.bf16.mxu0 %v1044
    %1287 = vmatpush1.bf16.msra.mxu0 %v1043
    %1288 = vmatprep.subr.bf16.mxu0 %v1040
    %1289 = vmatpush1.bf16.msra.mxu0 %v1039
    %1290 = vmatprep.subr.bf16.mxu0 %v1100
    %1291 = vmatpush2.bf16.msra.mxu0 %v1099
    %1292 = vmatprep.subr.bf16.mxu0 %v1096
    %1293 = vmatpush2.bf16.msra.mxu0 %v1095
    %1294 = vmatprep.subr.bf16.mxu0 %v1092
    %1295 = vmatpush2.bf16.msra.mxu0 %v1091
    %1296 = vmatprep.subr.bf16.mxu0 %v1088
    %1297 = vmatpush2.bf16.msra.mxu0 %v1087
    %1298 = vmatprep.subr.bf16.mxu0 %v1084
    %1299 = vmatpush2.bf16.msra.mxu0 %v1083
    %1300 = vmatprep.subr.bf16.mxu0 %v1080
    %1301 = vmatpush2.bf16.msra.mxu0 %v1079
    %1302 = vmatprep.subr.bf16.mxu0 %v1076
    %1303 = vmatpush2.bf16.msra.mxu0 %v1075
    %1304 = vmatprep.subr.bf16.mxu0 %v1072
    %1305 = vmatpush2.bf16.msra.mxu0 %v1071
    %1306 = vmatprep.mubr.bf16.mxu0 %v440
    %1307 = vmatmul.mubr.bf16.gmra.mxu0 %v439
    %v1308 = vpop.f32.mrf.mxu0
    %v1309 = vadd.f32 %v1266, %v1308
    %v1310 = vpop.f32.mrf.mxu0
    %v1311 = vadd.f32 %v1268, %v1310
    %v1312 = vpop.f32.mrf.mxu0
    %v1313 = vadd.f32 %v1270, %v1312
    %v1314 = vpop.f32.mrf.mxu0
    %v1315 = vadd.f32 %v1272, %v1314
    %1316 = vdwg.mxu0
    %1317 = vmatprep.subr.bf16.mxu0 %v1006
    %1318 = vmatpush1.bf16.msra.mxu0 %v1005
    %1319 = vmatprep.subr.bf16.mxu0 %v1002
    %1320 = vmatpush1.bf16.msra.mxu0 %v1001
    %1321 = vmatprep.subr.bf16.mxu0 %v998
    %1322 = vmatpush1.bf16.msra.mxu0 %v997
    %1323 = vmatprep.subr.bf16.mxu0 %v994
    %1324 = vmatpush1.bf16.msra.mxu0 %v993
    %1325 = vmatprep.subr.bf16.mxu0 %v990
    %1326 = vmatpush1.bf16.msra.mxu0 %v989
    %1327 = vmatprep.subr.bf16.mxu0 %v986
    %1328 = vmatpush1.bf16.msra.mxu0 %v985
    %1329 = vmatprep.subr.bf16.mxu0 %v982
    %1330 = vmatpush1.bf16.msra.mxu0 %v981
    %1331 = vmatprep.subr.bf16.mxu0 %v978
    %1332 = vmatpush1.bf16.msra.mxu0 %v977
    %1333 = vmatprep.subr.bf16.mxu0 %v1038
    %1334 = vmatpush2.bf16.msra.mxu0 %v1037
    %1335 = vmatprep.subr.bf16.mxu0 %v1034
    %1336 = vmatpush2.bf16.msra.mxu0 %v1033
    %1337 = vmatprep.subr.bf16.mxu0 %v1030
    %1338 = vmatpush2.bf16.msra.mxu0 %v1029
    %1339 = vmatprep.subr.bf16.mxu0 %v1026
    %1340 = vmatpush2.bf16.msra.mxu0 %v1025
    %1341 = vmatprep.subr.bf16.mxu0 %v1022
    %1342 = vmatpush2.bf16.msra.mxu0 %v1021
    %1343 = vmatprep.subr.bf16.mxu0 %v1018
    %1344 = vmatpush2.bf16.msra.mxu0 %v1017
    %1345 = vmatprep.subr.bf16.mxu0 %v1014
    %1346 = vmatpush2.bf16.msra.mxu0 %v1013
    %1347 = vmatprep.subr.bf16.mxu0 %v1010
    %1348 = vmatpush2.bf16.msra.mxu0 %v1009
    %1349 = vmatprep.mubr.bf16.mxu0 %v438
    %1350 = vmatmul.mubr.bf16.gmra.mxu0 %v437
    %v1351 = vpop.f32.mrf.mxu0
    %v1352 = vadd.f32 %v582, %v1351
    %v1353 = vpop.f32.mrf.mxu0
    %v1354 = vadd.f32 %v586, %v1353
    %v1355 = vpop.f32.mrf.mxu0
    %v1356 = vadd.f32 %v582, %v1355
    %v1357 = vpop.f32.mrf.mxu0
    %v1358 = vadd.f32 %v586, %v1357
    %1359 = vdwg.mxu0
    %1360 = vmatprep.subr.bf16.mxu0 %v1070
    %1361 = vmatpush1.bf16.msra.mxu0 %v1069
    %1362 = vmatprep.subr.bf16.mxu0 %v1066
    %1363 = vmatpush1.bf16.msra.mxu0 %v1065
    %1364 = vmatprep.subr.bf16.mxu0 %v1062
    %1365 = vmatpush1.bf16.msra.mxu0 %v1061
    %1366 = vmatprep.subr.bf16.mxu0 %v1058
    %1367 = vmatpush1.bf16.msra.mxu0 %v1057
    %1368 = vmatprep.subr.bf16.mxu0 %v1054
    %1369 = vmatpush1.bf16.msra.mxu0 %v1053
    %1370 = vmatprep.subr.bf16.mxu0 %v1050
    %1371 = vmatpush1.bf16.msra.mxu0 %v1049
    %1372 = vmatprep.subr.bf16.mxu0 %v1046
    %1373 = vmatpush1.bf16.msra.mxu0 %v1045
    %1374 = vmatprep.subr.bf16.mxu0 %v1042
    %1375 = vmatpush1.bf16.msra.mxu0 %v1041
    %1376 = vmatprep.subr.bf16.mxu0 %v1102
    %1377 = vmatpush2.bf16.msra.mxu0 %v1101
    %1378 = vmatprep.subr.bf16.mxu0 %v1098
    %1379 = vmatpush2.bf16.msra.mxu0 %v1097
    %1380 = vmatprep.subr.bf16.mxu0 %v1094
    %1381 = vmatpush2.bf16.msra.mxu0 %v1093
    %1382 = vmatprep.subr.bf16.mxu0 %v1090
    %1383 = vmatpush2.bf16.msra.mxu0 %v1089
    %1384 = vmatprep.subr.bf16.mxu0 %v1086
    %1385 = vmatpush2.bf16.msra.mxu0 %v1085
    %1386 = vmatprep.subr.bf16.mxu0 %v1082
    %1387 = vmatpush2.bf16.msra.mxu0 %v1081
    %1388 = vmatprep.subr.bf16.mxu0 %v1078
    %1389 = vmatpush2.bf16.msra.mxu0 %v1077
    %1390 = vmatprep.subr.bf16.mxu0 %v1074
    %1391 = vmatpush2.bf16.msra.mxu0 %v1073
    %1392 = vmatprep.mubr.bf16.mxu0 %v440
    %1393 = vmatmul.mubr.bf16.gmra.mxu0 %v439
    %v1394 = vpop.f32.mrf.mxu0
    %v1395 = vadd.f32 %v1352, %v1394
    %v1396 = vpop.f32.mrf.mxu0
    %v1397 = vadd.f32 %v1354, %v1396
    %v1398 = vpop.f32.mrf.mxu0
    %v1399 = vadd.f32 %v1356, %v1398
    %v1400 = vpop.f32.mrf.mxu0
    %v1401 = vadd.f32 %v1358, %v1400
    %1402 = vdwg.mxu0
    %v1403 = vmax.f32 %v1309, 0.0
    %v1404 = vmax.f32 %v1311, 0.0
    %v1405 = vmax.f32 %v1395, 0.0
    %v1406 = vmax.f32 %v1397, 0.0
    %v1407 = vmax.f32 %v1313, 0.0
    %v1408 = vmax.f32 %v1315, 0.0
    %v1409 = vmax.f32 %v1399, 0.0
    %v1410 = vmax.f32 %v1401, 0.0
    %v1411 = vpack.c.bf16 %v1407, %v1403
    %v1412 = vpack.c.bf16 %v1408, %v1404
    %v1413 = vpack.c.bf16 %v1409, %v1405
    %v1414 = vpack.c.bf16 %v1410, %v1406
    %v1415 = vld [vmem:[#allocation8] sm:$0xff]
    %v1416 = vld [vmem:[#allocation8 + $0x8] sm:$0xff]
    %v1417 = vld [vmem:[#allocation8 + $0x10] sm:$0xff]
    %v1418 = vld [vmem:[#allocation8 + $0x18] sm:$0xff]
    %v1419 = vld [vmem:[#allocation8 + $0x20] sm:$0xff]
    %v1420 = vld [vmem:[#allocation8 + $0x28] sm:$0xff]
    %v1421 = vld [vmem:[#allocation8 + $0x30] sm:$0xff]
    %v1422 = vld [vmem:[#allocation8 + $0x38] sm:$0xff]
    %v1423 = vld [vmem:[#allocation8 + $0x40] sm:$0xff]
    %v1424 = vld [vmem:[#allocation8 + $0x48] sm:$0xff]
    %v1425 = vld [vmem:[#allocation8 + $0x50] sm:$0xff]
    %v1426 = vld [vmem:[#allocation8 + $0x58] sm:$0xff]
    %v1427 = vld [vmem:[#allocation8 + $0x60] sm:$0xff]
    %v1428 = vld [vmem:[#allocation8 + $0x68] sm:$0xff]
    %v1429 = vld [vmem:[#allocation8 + $0x70] sm:$0xff]
    %v1430 = vld [vmem:[#allocation8 + $0x78] sm:$0xff]
    %v1431 = vld [vmem:[#allocation8 + $0x80] sm:$0xff]
    %v1432 = vld [vmem:[#allocation8 + $0x88] sm:$0xff]
    %v1433 = vld [vmem:[#allocation8 + $0x90] sm:$0xff]
    %v1434 = vld [vmem:[#allocation8 + $0x98] sm:$0xff]
    %v1435 = vld [vmem:[#allocation8 + $0xa0] sm:$0xff]
    %v1436 = vld [vmem:[#allocation8 + $0xa8] sm:$0xff]
    %v1437 = vld [vmem:[#allocation8 + $0xb0] sm:$0xff]
    %v1438 = vld [vmem:[#allocation8 + $0xb8] sm:$0xff]
    %v1439 = vld [vmem:[#allocation8 + $0xc0] sm:$0xff]
    %v1440 = vld [vmem:[#allocation8 + $0xc8] sm:$0xff]
    %v1441 = vld [vmem:[#allocation8 + $0xd0] sm:$0xff]
    %v1442 = vld [vmem:[#allocation8 + $0xd8] sm:$0xff]
    %v1443 = vld [vmem:[#allocation8 + $0xe0] sm:$0xff]
    %v1444 = vld [vmem:[#allocation8 + $0xe8] sm:$0xff]
    %v1445 = vld [vmem:[#allocation8 + $0xf0] sm:$0xff]
    %v1446 = vld [vmem:[#allocation8 + $0xf8] sm:$0xff]
    %v1447 = vld [vmem:[#allocation8 + $0x100] sm:$0xff]
    %v1448 = vld [vmem:[#allocation8 + $0x108] sm:$0xff]
    %v1449 = vld [vmem:[#allocation8 + $0x110] sm:$0xff]
    %v1450 = vld [vmem:[#allocation8 + $0x118] sm:$0xff]
    %v1451 = vld [vmem:[#allocation8 + $0x120] sm:$0xff]
    %v1452 = vld [vmem:[#allocation8 + $0x128] sm:$0xff]
    %v1453 = vld [vmem:[#allocation8 + $0x130] sm:$0xff]
    %v1454 = vld [vmem:[#allocation8 + $0x138] sm:$0xff]
    %v1455 = vld [vmem:[#allocation8 + $0x140] sm:$0xff]
    %v1456 = vld [vmem:[#allocation8 + $0x148] sm:$0xff]
    %v1457 = vld [vmem:[#allocation8 + $0x150] sm:$0xff]
    %v1458 = vld [vmem:[#allocation8 + $0x158] sm:$0xff]
    %v1459 = vld [vmem:[#allocation8 + $0x160] sm:$0xff]
    %v1460 = vld [vmem:[#allocation8 + $0x168] sm:$0xff]
    %v1461 = vld [vmem:[#allocation8 + $0x170] sm:$0xff]
    %v1462 = vld [vmem:[#allocation8 + $0x178] sm:$0xff]
    %v1463 = vld [vmem:[#allocation8 + $0x180] sm:$0xff]
    %v1464 = vld [vmem:[#allocation8 + $0x188] sm:$0xff]
    %v1465 = vld [vmem:[#allocation8 + $0x190] sm:$0xff]
    %v1466 = vld [vmem:[#allocation8 + $0x198] sm:$0xff]
    %v1467 = vld [vmem:[#allocation8 + $0x1a0] sm:$0xff]
    %v1468 = vld [vmem:[#allocation8 + $0x1a8] sm:$0xff]
    %v1469 = vld [vmem:[#allocation8 + $0x1b0] sm:$0xff]
    %v1470 = vld [vmem:[#allocation8 + $0x1b8] sm:$0xff]
    %v1471 = vld [vmem:[#allocation8 + $0x1c0] sm:$0xff]
    %v1472 = vld [vmem:[#allocation8 + $0x1c8] sm:$0xff]
    %v1473 = vld [vmem:[#allocation8 + $0x1d0] sm:$0xff]
    %v1474 = vld [vmem:[#allocation8 + $0x1d8] sm:$0xff]
    %v1475 = vld [vmem:[#allocation8 + $0x1e0] sm:$0xff]
    %v1476 = vld [vmem:[#allocation8 + $0x1e8] sm:$0xff]
    %v1477 = vld [vmem:[#allocation8 + $0x1f0] sm:$0xff]
    %v1478 = vld [vmem:[#allocation8 + $0x1f8] sm:$0xff]
    %v1479 = vld [vmem:[#allocation13 + $0x8] sm:$0x3]
    %v1481 = vlaneseq
    %v1482 = vshrl.u32 %v1481, 7
    %v1483 = vsub.s32 0, %v1482
    %v1484 = vrot.slane %v1479, %v1483
    %v1485 = vlaneseq
    %v1486 = vshrl.u32 %v1485, 7
    %v1487 = vsub.s32 1, %v1486
    %v1488 = vrot.slane %v1479, %v1487
    %v1555 = vunpack.c.l.b16 %v1415
    %v1556 = vunpack.c.h.b16 %v1415
    %v1557 = vunpack.c.l.b16 %v1416
    %v1558 = vunpack.c.h.b16 %v1416
    %v1559 = vunpack.c.l.b16 %v1417
    %v1560 = vunpack.c.h.b16 %v1417
    %v1561 = vunpack.c.l.b16 %v1418
    %v1562 = vunpack.c.h.b16 %v1418
    %v1563 = vunpack.c.l.b16 %v1419
    %v1564 = vunpack.c.h.b16 %v1419
    %v1565 = vunpack.c.l.b16 %v1420
    %v1566 = vunpack.c.h.b16 %v1420
    %v1567 = vunpack.c.l.b16 %v1421
    %v1568 = vunpack.c.h.b16 %v1421
    %v1569 = vunpack.c.l.b16 %v1422
    %v1570 = vunpack.c.h.b16 %v1422
    %v1571 = vunpack.c.l.b16 %v1423
    %v1572 = vunpack.c.h.b16 %v1423
    %v1573 = vunpack.c.l.b16 %v1424
    %v1574 = vunpack.c.h.b16 %v1424
    %v1575 = vunpack.c.l.b16 %v1425
    %v1576 = vunpack.c.h.b16 %v1425
    %v1577 = vunpack.c.l.b16 %v1426
    %v1578 = vunpack.c.h.b16 %v1426
    %v1579 = vunpack.c.l.b16 %v1427
    %v1580 = vunpack.c.h.b16 %v1427
    %v1581 = vunpack.c.l.b16 %v1428
    %v1582 = vunpack.c.h.b16 %v1428
    %v1583 = vunpack.c.l.b16 %v1429
    %v1584 = vunpack.c.h.b16 %v1429
    %v1585 = vunpack.c.l.b16 %v1430
    %v1586 = vunpack.c.h.b16 %v1430
    %v1587 = vunpack.c.l.b16 %v1431
    %v1588 = vunpack.c.h.b16 %v1431
    %v1589 = vunpack.c.l.b16 %v1432
    %v1590 = vunpack.c.h.b16 %v1432
    %v1591 = vunpack.c.l.b16 %v1433
    %v1592 = vunpack.c.h.b16 %v1433
    %v1593 = vunpack.c.l.b16 %v1434
    %v1594 = vunpack.c.h.b16 %v1434
    %v1595 = vunpack.c.l.b16 %v1435
    %v1596 = vunpack.c.h.b16 %v1435
    %v1597 = vunpack.c.l.b16 %v1436
    %v1598 = vunpack.c.h.b16 %v1436
    %v1599 = vunpack.c.l.b16 %v1437
    %v1600 = vunpack.c.h.b16 %v1437
    %v1601 = vunpack.c.l.b16 %v1438
    %v1602 = vunpack.c.h.b16 %v1438
    %v1603 = vunpack.c.l.b16 %v1439
    %v1604 = vunpack.c.h.b16 %v1439
    %v1605 = vunpack.c.l.b16 %v1440
    %v1606 = vunpack.c.h.b16 %v1440
    %v1607 = vunpack.c.l.b16 %v1441
    %v1608 = vunpack.c.h.b16 %v1441
    %v1609 = vunpack.c.l.b16 %v1442
    %v1610 = vunpack.c.h.b16 %v1442
    %v1611 = vunpack.c.l.b16 %v1443
    %v1612 = vunpack.c.h.b16 %v1443
    %v1613 = vunpack.c.l.b16 %v1444
    %v1614 = vunpack.c.h.b16 %v1444
    %v1615 = vunpack.c.l.b16 %v1445
    %v1616 = vunpack.c.h.b16 %v1445
    %v1617 = vunpack.c.l.b16 %v1446
    %v1618 = vunpack.c.h.b16 %v1446
    %v1619 = vunpack.c.l.b16 %v1447
    %v1620 = vunpack.c.h.b16 %v1447
    %v1621 = vunpack.c.l.b16 %v1448
    %v1622 = vunpack.c.h.b16 %v1448
    %v1623 = vunpack.c.l.b16 %v1449
    %v1624 = vunpack.c.h.b16 %v1449
    %v1625 = vunpack.c.l.b16 %v1450
    %v1626 = vunpack.c.h.b16 %v1450
    %v1627 = vunpack.c.l.b16 %v1451
    %v1628 = vunpack.c.h.b16 %v1451
    %v1629 = vunpack.c.l.b16 %v1452
    %v1630 = vunpack.c.h.b16 %v1452
    %v1631 = vunpack.c.l.b16 %v1453
    %v1632 = vunpack.c.h.b16 %v1453
    %v1633 = vunpack.c.l.b16 %v1454
    %v1634 = vunpack.c.h.b16 %v1454
    %v1635 = vunpack.c.l.b16 %v1455
    %v1636 = vunpack.c.h.b16 %v1455
    %v1637 = vunpack.c.l.b16 %v1456
    %v1638 = vunpack.c.h.b16 %v1456
    %v1639 = vunpack.c.l.b16 %v1457
    %v1640 = vunpack.c.h.b16 %v1457
    %v1641 = vunpack.c.l.b16 %v1458
    %v1642 = vunpack.c.h.b16 %v1458
    %v1643 = vunpack.c.l.b16 %v1459
    %v1644 = vunpack.c.h.b16 %v1459
    %v1645 = vunpack.c.l.b16 %v1460
    %v1646 = vunpack.c.h.b16 %v1460
    %v1647 = vunpack.c.l.b16 %v1461
    %v1648 = vunpack.c.h.b16 %v1461
    %v1649 = vunpack.c.l.b16 %v1462
    %v1650 = vunpack.c.h.b16 %v1462
    %v1651 = vunpack.c.l.b16 %v1463
    %v1652 = vunpack.c.h.b16 %v1463
    %v1653 = vunpack.c.l.b16 %v1464
    %v1654 = vunpack.c.h.b16 %v1464
    %v1655 = vunpack.c.l.b16 %v1465
    %v1656 = vunpack.c.h.b16 %v1465
    %v1657 = vunpack.c.l.b16 %v1466
    %v1658 = vunpack.c.h.b16 %v1466
    %v1659 = vunpack.c.l.b16 %v1467
    %v1660 = vunpack.c.h.b16 %v1467
    %v1661 = vunpack.c.l.b16 %v1468
    %v1662 = vunpack.c.h.b16 %v1468
    %v1663 = vunpack.c.l.b16 %v1469
    %v1664 = vunpack.c.h.b16 %v1469
    %v1665 = vunpack.c.l.b16 %v1470
    %v1666 = vunpack.c.h.b16 %v1470
    %v1667 = vunpack.c.l.b16 %v1471
    %v1668 = vunpack.c.h.b16 %v1471
    %v1669 = vunpack.c.l.b16 %v1472
    %v1670 = vunpack.c.h.b16 %v1472
    %v1671 = vunpack.c.l.b16 %v1473
    %v1672 = vunpack.c.h.b16 %v1473
    %v1673 = vunpack.c.l.b16 %v1474
    %v1674 = vunpack.c.h.b16 %v1474
    %v1675 = vunpack.c.l.b16 %v1475
    %v1676 = vunpack.c.h.b16 %v1475
    %v1677 = vunpack.c.l.b16 %v1476
    %v1678 = vunpack.c.h.b16 %v1476
    %v1679 = vunpack.c.l.b16 %v1477
    %v1680 = vunpack.c.h.b16 %v1477
    %v1681 = vunpack.c.l.b16 %v1478
    %v1682 = vunpack.c.h.b16 %v1478
    %v1683 = vpack.c.b16 %v1557, %v1555
    %v1684 = vpack.c.b16 %v1558, %v1556
    %v1685 = vpack.c.b16 %v1561, %v1559
    %v1686 = vpack.c.b16 %v1562, %v1560
    %v1687 = vpack.c.b16 %v1565, %v1563
    %v1688 = vpack.c.b16 %v1566, %v1564
    %v1689 = vpack.c.b16 %v1569, %v1567
    %v1690 = vpack.c.b16 %v1570, %v1568
    %v1691 = vpack.c.b16 %v1573, %v1571
    %v1692 = vpack.c.b16 %v1574, %v1572
    %v1693 = vpack.c.b16 %v1577, %v1575
    %v1694 = vpack.c.b16 %v1578, %v1576
    %v1695 = vpack.c.b16 %v1581, %v1579
    %v1696 = vpack.c.b16 %v1582, %v1580
    %v1697 = vpack.c.b16 %v1585, %v1583
    %v1698 = vpack.c.b16 %v1586, %v1584
    %v1699 = vpack.c.b16 %v1589, %v1587
    %v1700 = vpack.c.b16 %v1590, %v1588
    %v1701 = vpack.c.b16 %v1593, %v1591
    %v1702 = vpack.c.b16 %v1594, %v1592
    %v1703 = vpack.c.b16 %v1597, %v1595
    %v1704 = vpack.c.b16 %v1598, %v1596
    %v1705 = vpack.c.b16 %v1601, %v1599
    %v1706 = vpack.c.b16 %v1602, %v1600
    %v1707 = vpack.c.b16 %v1605, %v1603
    %v1708 = vpack.c.b16 %v1606, %v1604
    %v1709 = vpack.c.b16 %v1609, %v1607
    %v1710 = vpack.c.b16 %v1610, %v1608
    %v1711 = vpack.c.b16 %v1613, %v1611
    %v1712 = vpack.c.b16 %v1614, %v1612
    %v1713 = vpack.c.b16 %v1617, %v1615
    %v1714 = vpack.c.b16 %v1618, %v1616
    %v1715 = vpack.c.b16 %v1621, %v1619
    %v1716 = vpack.c.b16 %v1622, %v1620
    %v1717 = vpack.c.b16 %v1625, %v1623
    %v1718 = vpack.c.b16 %v1626, %v1624
    %v1719 = vpack.c.b16 %v1629, %v1627
    %v1720 = vpack.c.b16 %v1630, %v1628
    %v1721 = vpack.c.b16 %v1633, %v1631
    %v1722 = vpack.c.b16 %v1634, %v1632
    %v1723 = vpack.c.b16 %v1637, %v1635
    %v1724 = vpack.c.b16 %v1638, %v1636
    %v1725 = vpack.c.b16 %v1641, %v1639
    %v1726 = vpack.c.b16 %v1642, %v1640
    %v1727 = vpack.c.b16 %v1645, %v1643
    %v1728 = vpack.c.b16 %v1646, %v1644
    %v1729 = vpack.c.b16 %v1649, %v1647
    %v1730 = vpack.c.b16 %v1650, %v1648
    %v1731 = vpack.c.b16 %v1653, %v1651
    %v1732 = vpack.c.b16 %v1654, %v1652
    %v1733 = vpack.c.b16 %v1657, %v1655
    %v1734 = vpack.c.b16 %v1658, %v1656
    %v1735 = vpack.c.b16 %v1661, %v1659
    %v1736 = vpack.c.b16 %v1662, %v1660
    %v1737 = vpack.c.b16 %v1665, %v1663
    %v1738 = vpack.c.b16 %v1666, %v1664
    %v1739 = vpack.c.b16 %v1669, %v1667
    %v1740 = vpack.c.b16 %v1670, %v1668
    %v1741 = vpack.c.b16 %v1673, %v1671
    %v1742 = vpack.c.b16 %v1674, %v1672
    %v1743 = vpack.c.b16 %v1677, %v1675
    %v1744 = vpack.c.b16 %v1678, %v1676
    %v1745 = vpack.c.b16 %v1681, %v1679
    %v1746 = vpack.c.b16 %v1682, %v1680
    %1811 = vmatprep.subr.bf16.mxu0 %v1698
    %1812 = vmatpush1.bf16.msra.mxu0 %v1697
    %1813 = vmatprep.subr.bf16.mxu0 %v1696
    %1814 = vmatpush1.bf16.msra.mxu0 %v1695
    %1815 = vmatprep.subr.bf16.mxu0 %v1694
    %1816 = vmatpush1.bf16.msra.mxu0 %v1693
    %1817 = vmatprep.subr.bf16.mxu0 %v1692
    %1818 = vmatpush1.bf16.msra.mxu0 %v1691
    %1819 = vmatprep.subr.bf16.mxu0 %v1690
    %1820 = vmatpush1.bf16.msra.mxu0 %v1689
    %1821 = vmatprep.subr.bf16.mxu0 %v1688
    %1822 = vmatpush1.bf16.msra.mxu0 %v1687
    %1823 = vmatprep.subr.bf16.mxu0 %v1686
    %1824 = vmatpush1.bf16.msra.mxu0 %v1685
    %1825 = vmatprep.subr.bf16.mxu0 %v1684
    %1826 = vmatpush1.bf16.msra.mxu0 %v1683
    %1827 = vmatprep.subr.bf16.mxu0 %v1714
    %1828 = vmatpush2.bf16.msra.mxu0 %v1713
    %1829 = vmatprep.subr.bf16.mxu0 %v1712
    %1830 = vmatpush2.bf16.msra.mxu0 %v1711
    %1831 = vmatprep.subr.bf16.mxu0 %v1710
    %1832 = vmatpush2.bf16.msra.mxu0 %v1709
    %1833 = vmatprep.subr.bf16.mxu0 %v1708
    %1834 = vmatpush2.bf16.msra.mxu0 %v1707
    %1835 = vmatprep.subr.bf16.mxu0 %v1706
    %1836 = vmatpush2.bf16.msra.mxu0 %v1705
    %1837 = vmatprep.subr.bf16.mxu0 %v1704
    %1838 = vmatpush2.bf16.msra.mxu0 %v1703
    %1839 = vmatprep.subr.bf16.mxu0 %v1702
    %1840 = vmatpush2.bf16.msra.mxu0 %v1701
    %1841 = vmatprep.subr.bf16.mxu0 %v1700
    %1842 = vmatpush2.bf16.msra.mxu0 %v1699
    %1843 = vmatprep.mubr.bf16.mxu0 %v1412
    %1844 = vmatmul.mubr.bf16.gmra.mxu0 %v1411
    %v1845 = vpop.f32.mrf.mxu0
    %v1846 = vadd.f32 %v1484, %v1845
    %v1847 = vpop.f32.mrf.mxu0
    %v1848 = vadd.f32 %v1488, %v1847
    %v1849 = vpop.f32.mrf.mxu0
    %v1850 = vadd.f32 %v1484, %v1849
    %v1851 = vpop.f32.mrf.mxu0
    %v1852 = vadd.f32 %v1488, %v1851
    %1853 = vdwg.mxu0
    %1854 = vmatprep.subr.bf16.mxu0 %v1730
    %1855 = vmatpush1.bf16.msra.mxu0 %v1729
    %1856 = vmatprep.subr.bf16.mxu0 %v1728
    %1857 = vmatpush1.bf16.msra.mxu0 %v1727
    %1858 = vmatprep.subr.bf16.mxu0 %v1726
    %1859 = vmatpush1.bf16.msra.mxu0 %v1725
    %1860 = vmatprep.subr.bf16.mxu0 %v1724
    %1861 = vmatpush1.bf16.msra.mxu0 %v1723
    %1862 = vmatprep.subr.bf16.mxu0 %v1722
    %1863 = vmatpush1.bf16.msra.mxu0 %v1721
    %1864 = vmatprep.subr.bf16.mxu0 %v1720
    %1865 = vmatpush1.bf16.msra.mxu0 %v1719
    %1866 = vmatprep.subr.bf16.mxu0 %v1718
    %1867 = vmatpush1.bf16.msra.mxu0 %v1717
    %1868 = vmatprep.subr.bf16.mxu0 %v1716
    %1869 = vmatpush1.bf16.msra.mxu0 %v1715
    %1870 = vmatprep.subr.bf16.mxu0 %v1746
    %1871 = vmatpush2.bf16.msra.mxu0 %v1745
    %1872 = vmatprep.subr.bf16.mxu0 %v1744
    %1873 = vmatpush2.bf16.msra.mxu0 %v1743
    %1874 = vmatprep.subr.bf16.mxu0 %v1742
    %1875 = vmatpush2.bf16.msra.mxu0 %v1741
    %1876 = vmatprep.subr.bf16.mxu0 %v1740
    %1877 = vmatpush2.bf16.msra.mxu0 %v1739
    %1878 = vmatprep.subr.bf16.mxu0 %v1738
    %1879 = vmatpush2.bf16.msra.mxu0 %v1737
    %1880 = vmatprep.subr.bf16.mxu0 %v1736
    %1881 = vmatpush2.bf16.msra.mxu0 %v1735
    %1882 = vmatprep.subr.bf16.mxu0 %v1734
    %1883 = vmatpush2.bf16.msra.mxu0 %v1733
    %1884 = vmatprep.subr.bf16.mxu0 %v1732
    %1885 = vmatpush2.bf16.msra.mxu0 %v1731
    %1886 = vmatprep.mubr.bf16.mxu0 %v1414
    %1887 = vmatmul.mubr.bf16.gmra.mxu0 %v1413
    %v1888 = vpop.f32.mrf.mxu0
    %v1889 = vadd.f32 %v1846, %v1888
    %v1890 = vpop.f32.mrf.mxu0
    %v1891 = vadd.f32 %v1848, %v1890
    %v1892 = vpop.f32.mrf.mxu0
    %v1893 = vadd.f32 %v1850, %v1892
    %v1894 = vpop.f32.mrf.mxu0
    %v1895 = vadd.f32 %v1852, %v1894
    %1896 = vdwg.mxu0
    %v1897 = vmax.f32 %v1889, 0.0
    %v1898 = vmax.f32 %v1891, 0.0
    %v1899 = vmax.f32 %v1893, 0.0
    %v1900 = vmax.f32 %v1895, 0.0
    %v1901 = vpack.c.bf16 %v1899, %v1897
    %v1902 = vpack.c.bf16 %v1900, %v1898
    %v1903 = vld [vmem:[#allocation10] sm:$0xf]
    %v1904 = vld [vmem:[#allocation10 + $0x4] sm:$0xf]
    %v1905 = vld [vmem:[#allocation10 + $0x8] sm:$0xf]
    %v1906 = vld [vmem:[#allocation10 + $0xc] sm:$0xf]
    %v1907 = vld [vmem:[#allocation10 + $0x10] sm:$0xf]
    %v1908 = vld [vmem:[#allocation10 + $0x14] sm:$0xf]
    %v1909 = vld [vmem:[#allocation10 + $0x18] sm:$0xf]
    %v1910 = vld [vmem:[#allocation10 + $0x1c] sm:$0xf]
    %v1911 = vld [vmem:[#allocation10 + $0x20] sm:$0xf]
    %v1912 = vld [vmem:[#allocation10 + $0x24] sm:$0xf]
    %v1913 = vld [vmem:[#allocation10 + $0x28] sm:$0xf]
    %v1914 = vld [vmem:[#allocation10 + $0x2c] sm:$0xf]
    %v1915 = vld [vmem:[#allocation10 + $0x30] sm:$0xf]
    %v1916 = vld [vmem:[#allocation10 + $0x34] sm:$0xf]
    %v1917 = vld [vmem:[#allocation10 + $0x38] sm:$0xf]
    %v1918 = vld [vmem:[#allocation10 + $0x3c] sm:$0xf]
    %v1919 = vld [vmem:[#allocation10 + $0x40] sm:$0xf]
    %v1920 = vld [vmem:[#allocation10 + $0x44] sm:$0xf]
    %v1921 = vld [vmem:[#allocation10 + $0x48] sm:$0xf]
    %v1922 = vld [vmem:[#allocation10 + $0x4c] sm:$0xf]
    %v1923 = vld [vmem:[#allocation10 + $0x50] sm:$0xf]
    %v1924 = vld [vmem:[#allocation10 + $0x54] sm:$0xf]
    %v1925 = vld [vmem:[#allocation10 + $0x58] sm:$0xf]
    %v1926 = vld [vmem:[#allocation10 + $0x5c] sm:$0xf]
    %v1927 = vld [vmem:[#allocation10 + $0x60] sm:$0xf]
    %v1928 = vld [vmem:[#allocation10 + $0x64] sm:$0xf]
    %v1929 = vld [vmem:[#allocation10 + $0x68] sm:$0xf]
    %v1930 = vld [vmem:[#allocation10 + $0x6c] sm:$0xf]
    %v1931 = vld [vmem:[#allocation10 + $0x70] sm:$0xf]
    %v1932 = vld [vmem:[#allocation10 + $0x74] sm:$0xf]
    %v1933 = vld [vmem:[#allocation10 + $0x78] sm:$0xf]
    %v1934 = vld [vmem:[#allocation10 + $0x7c] sm:$0xf]
    %v1935 = vld [vmem:[#allocation13 + $0xa] sm:$0x1]
    %v1937 = vlaneseq
    %v1938 = vshrl.u32 %v1937, 7
    %v1939 = vsub.s32 0, %v1938
    %v1940 = vrot.slane %v1935, %v1939
    %v1974 = vunpack.c.l.b16 %v1903
    %v1975 = vunpack.c.l.b16 %v1904
    %v1976 = vunpack.c.l.b16 %v1905
    %v1977 = vunpack.c.l.b16 %v1906
    %v1978 = vunpack.c.l.b16 %v1907
    %v1979 = vunpack.c.l.b16 %v1908
    %v1980 = vunpack.c.l.b16 %v1909
    %v1981 = vunpack.c.l.b16 %v1910
    %v1982 = vunpack.c.l.b16 %v1911
    %v1983 = vunpack.c.l.b16 %v1912
    %v1984 = vunpack.c.l.b16 %v1913
    %v1985 = vunpack.c.l.b16 %v1914
    %v1986 = vunpack.c.l.b16 %v1915
    %v1987 = vunpack.c.l.b16 %v1916
    %v1988 = vunpack.c.l.b16 %v1917
    %v1989 = vunpack.c.l.b16 %v1918
    %v1990 = vunpack.c.l.b16 %v1919
    %v1991 = vunpack.c.l.b16 %v1920
    %v1992 = vunpack.c.l.b16 %v1921
    %v1993 = vunpack.c.l.b16 %v1922
    %v1994 = vunpack.c.l.b16 %v1923
    %v1995 = vunpack.c.l.b16 %v1924
    %v1996 = vunpack.c.l.b16 %v1925
    %v1997 = vunpack.c.l.b16 %v1926
    %v1998 = vunpack.c.l.b16 %v1927
    %v1999 = vunpack.c.l.b16 %v1928
    %v2000 = vunpack.c.l.b16 %v1929
    %v2001 = vunpack.c.l.b16 %v1930
    %v2002 = vunpack.c.l.b16 %v1931
    %v2003 = vunpack.c.l.b16 %v1932
    %v2004 = vunpack.c.l.b16 %v1933
    %v2005 = vunpack.c.l.b16 %v1934
    %v2006 = vpack.c.b16 %v1975, %v1974
    %v2007 = vpack.c.b16 %v1977, %v1976
    %v2008 = vpack.c.b16 %v1979, %v1978
    %v2009 = vpack.c.b16 %v1981, %v1980
    %v2010 = vpack.c.b16 %v1983, %v1982
    %v2011 = vpack.c.b16 %v1985, %v1984
    %v2012 = vpack.c.b16 %v1987, %v1986
    %v2013 = vpack.c.b16 %v1989, %v1988
    %v2014 = vpack.c.b16 %v1991, %v1990
    %v2015 = vpack.c.b16 %v1993, %v1992
    %v2016 = vpack.c.b16 %v1995, %v1994
    %v2017 = vpack.c.b16 %v1997, %v1996
    %v2018 = vpack.c.b16 %v1999, %v1998
    %v2019 = vpack.c.b16 %v2001, %v2000
    %v2020 = vpack.c.b16 %v2003, %v2002
    %v2021 = vpack.c.b16 %v2005, %v2004
    %2038 = vmatprep.subr.bf16.mxu0 0
    %2039 = vmatpush1.bf16.msra.mxu0 %v2013
    %2040 = vmatprep.subr.bf16.mxu0 0
    %2041 = vmatpush1.bf16.msra.mxu0 %v2012
    %2042 = vmatprep.subr.bf16.mxu0 0
    %2043 = vmatpush1.bf16.msra.mxu0 %v2011
    %2044 = vmatprep.subr.bf16.mxu0 0
    %2045 = vmatpush1.bf16.msra.mxu0 %v2010
    %2046 = vmatprep.subr.bf16.mxu0 0
    %2047 = vmatpush1.bf16.msra.mxu0 %v2009
    %2048 = vmatprep.subr.bf16.mxu0 0
    %2049 = vmatpush1.bf16.msra.mxu0 %v2008
    %2050 = vmatprep.subr.bf16.mxu0 0
    %2051 = vmatpush1.bf16.msra.mxu0 %v2007
    %2052 = vmatprep.subr.bf16.mxu0 0
    %2053 = vmatpush1.bf16.msra.mxu0 %v2006
    %2054 = vmatprep.subr.bf16.mxu0 0
    %2055 = vmatpush2.bf16.msra.mxu0 %v2021
    %2056 = vmatprep.subr.bf16.mxu0 0
    %2057 = vmatpush2.bf16.msra.mxu0 %v2020
    %2058 = vmatprep.subr.bf16.mxu0 0
    %2059 = vmatpush2.bf16.msra.mxu0 %v2019
    %2060 = vmatprep.subr.bf16.mxu0 0
    %2061 = vmatpush2.bf16.msra.mxu0 %v2018
    %2062 = vmatprep.subr.bf16.mxu0 0
    %2063 = vmatpush2.bf16.msra.mxu0 %v2017
    %2064 = vmatprep.subr.bf16.mxu0 0
    %2065 = vmatpush2.bf16.msra.mxu0 %v2016
    %2066 = vmatprep.subr.bf16.mxu0 0
    %2067 = vmatpush2.bf16.msra.mxu0 %v2015
    %2068 = vmatprep.subr.bf16.mxu0 0
    %2069 = vmatpush2.bf16.msra.mxu0 %v2014
    %2070 = vmatprep.mubr.bf16.mxu0 %v1902
    %2071 = vmatmul.mubr.bf16.gmra.mxu0 %v1901
    %v2072 = vpop.f32.mrf.mxu0
    %v2073 = vadd.f32 %v1940, %v2072
    %v2074 = vpop.f32.mrf.mxu0
    %v2075 = vpop.f32.mrf.mxu0
    %v2076 = vadd.f32 %v1940, %v2075
    %v2077 = vpop.f32.mrf.mxu0
    %2078 = vdwg.mxu0
    %v2079 = vmax.f32 %v2073, 0.0
    %v2080 = vmax.f32 %v2076, 0.0
    %v2081 = vpack.c.bf16 %v2080, %v2079
    %v2082 = vld [vmem:[#allocation11] sm:$0xf]
    %v2083 = vld [vmem:[#allocation11 + $0x4] sm:$0xf]
    %v2084 = vld [vmem:[#allocation11 + $0x8] sm:$0xf]
    %v2085 = vld [vmem:[#allocation11 + $0xc] sm:$0xf]
    %v2086 = vld [vmem:[#allocation11 + $0x10] sm:$0xf]
    %v2087 = vld [vmem:[#allocation11 + $0x14] sm:$0xf]
    %v2088 = vld [vmem:[#allocation11 + $0x18] sm:$0xf]
    %v2089 = vld [vmem:[#allocation11 + $0x1c] sm:$0xf]
    %v2090 = vld [vmem:[#allocation11 + $0x20] sm:$0xf]
    %v2091 = vld [vmem:[#allocation11 + $0x24] sm:$0xf]
    %v2092 = vld [vmem:[#allocation11 + $0x28] sm:$0xf]
    %v2093 = vld [vmem:[#allocation11 + $0x2c] sm:$0xf]
    %v2094 = vld [vmem:[#allocation11 + $0x30] sm:$0xf]
    %v2095 = vld [vmem:[#allocation11 + $0x34] sm:$0xf]
    %v2096 = vld [vmem:[#allocation11 + $0x38] sm:$0xf]
    %v2097 = vld [vmem:[#allocation11 + $0x3c] sm:$0xf]
    %v2098 = vld [vmem:[#allocation13 + $0xb] sm:$0x1]
    %v2100 = vlaneseq
    %v2101 = vshrl.u32 %v2100, 7
    %v2102 = vsub.s32 0, %v2101
    %v2103 = vrot.slane %v2098, %v2102
    %v2121 = vunpack.c.l.b16 %v2082
    %v2122 = vunpack.c.l.b16 %v2083
    %v2123 = vunpack.c.l.b16 %v2084
    %v2124 = vunpack.c.l.b16 %v2085
    %v2125 = vunpack.c.l.b16 %v2086
    %v2126 = vunpack.c.l.b16 %v2087
    %v2127 = vunpack.c.l.b16 %v2088
    %v2128 = vunpack.c.l.b16 %v2089
    %v2129 = vunpack.c.l.b16 %v2090
    %v2130 = vunpack.c.l.b16 %v2091
    %v2131 = vunpack.c.l.b16 %v2092
    %v2132 = vunpack.c.l.b16 %v2093
    %v2133 = vunpack.c.l.b16 %v2094
    %v2134 = vunpack.c.l.b16 %v2095
    %v2135 = vunpack.c.l.b16 %v2096
    %v2136 = vunpack.c.l.b16 %v2097
    %v2137 = vpack.c.b16 %v2122, %v2121
    %v2138 = vpack.c.b16 %v2124, %v2123
    %v2139 = vpack.c.b16 %v2126, %v2125
    %v2140 = vpack.c.b16 %v2128, %v2127
    %v2141 = vpack.c.b16 %v2130, %v2129
    %v2142 = vpack.c.b16 %v2132, %v2131
    %v2143 = vpack.c.b16 %v2134, %v2133
    %v2144 = vpack.c.b16 %v2136, %v2135
    %2153 = vmatprep.subr.bf16.mxu0 0
    %2154 = vmatpush1.bf16.msra.mxu0 %v2144
    %2155 = vmatprep.subr.bf16.mxu0 0
    %2156 = vmatpush1.bf16.msra.mxu0 %v2143
    %2157 = vmatprep.subr.bf16.mxu0 0
    %2158 = vmatpush1.bf16.msra.mxu0 %v2142
    %2159 = vmatprep.subr.bf16.mxu0 0
    %2160 = vmatpush1.bf16.msra.mxu0 %v2141
    %2161 = vmatprep.subr.bf16.mxu0 0
    %2162 = vmatpush1.bf16.msra.mxu0 %v2140
    %2163 = vmatprep.subr.bf16.mxu0 0
    %2164 = vmatpush1.bf16.msra.mxu0 %v2139
    %2165 = vmatprep.subr.bf16.mxu0 0
    %2166 = vmatpush1.bf16.msra.mxu0 %v2138
    %2167 = vmatprep.subr.bf16.mxu0 0
    %2168 = vmatpush1.bf16.msra.mxu0 %v2137
    %2169 = vmatprep.subr.bf16.mxu0 0
    %2170 = vmatpush2.bf16.msra.mxu0 0
    %2171 = vmatprep.subr.bf16.mxu0 0
    %2172 = vmatpush2.bf16.msra.mxu0 0
    %2173 = vmatprep.subr.bf16.mxu0 0
    %2174 = vmatpush2.bf16.msra.mxu0 0
    %2175 = vmatprep.subr.bf16.mxu0 0
    %2176 = vmatpush2.bf16.msra.mxu0 0
    %2177 = vmatprep.subr.bf16.mxu0 0
    %2178 = vmatpush2.bf16.msra.mxu0 0
    %2179 = vmatprep.subr.bf16.mxu0 0
    %2180 = vmatpush2.bf16.msra.mxu0 0
    %2181 = vmatprep.subr.bf16.mxu0 0
    %2182 = vmatpush2.bf16.msra.mxu0 0
    %2183 = vmatprep.subr.bf16.mxu0 0
    %2184 = vmatpush2.bf16.msra.mxu0 0
    %2185 = vmatprep.mubr.bf16.mxu0 0
    %2186 = vmatmul.mubr.bf16.gmra.mxu0 %v2081
    %v2187 = vpop.f32.mrf.mxu0
    %v2188 = vadd.f32 %v2103, %v2187
    %v2189 = vpop.f32.mrf.mxu0
    %v2190 = vpop.f32.mrf.mxu0
    %v2191 = vadd.f32 %v2103, %v2190
    %v2192 = vpop.f32.mrf.mxu0
    %2193 = vdwg.mxu0
    %v2194 = vtanh.pop %v2188
    %v2195 = vtanh.pop %v2191
    %v2196 = vmul.f32 %v2194, 0.397
    %v2197 = vmul.f32 %v2195, 0.397
    %v2198 = vpack.c.bf16 %v2197, %v2196
    %v2200 = vunpack.c.l.b16 %v2198
    %v2201 = vunpack.c.h.b16 %v2198
    %v2202 = vpack.c.b16 %v2200, %v2200
    %v2203 = vpack.c.b16 %v2201, %v2201
    %2206 = vst [vmem:[#allocation14] sm:$0xf] %v2202
    %2207 = vst [vmem:[#allocation14 + $0x4] sm:$0xf] %v2203
    // Predicated region
    $region58: #{tpu_custom_call.1} parent=1 // pred_check
      _
    $region59: #{tpu_custom_call.1} parent=1 // pred_check_branch
      %2209 = sbr.rel (0) target = $region61
    $region60: #{tpu_custom_call.1} parent=1 // pred_region
      %s2211 = ssub.s32 128, 128
      %2212 = vsyncadd [#allocation4], %s2211
      %s2213 = sshll.u32 [#allocation14], 4
      %s2214 = int_to_ptr.vmem [resolvable:$true] %s2213
      %2219 = dma.vmem_to_hbm [thread:$0]  %s2214, 128, %s7, [#allocation4], 64, 64, 4
    $region61: #{tpu_custom_call.1} parent=1 // pred_fallthru
      _
    // Predicated region
    $region62: #{tpu_custom_call.1} parent=1 // pred_check
      _
    $region63: #{tpu_custom_call.1} parent=1 // pred_check_branch
      %2221 = sbr.rel (0) target = $region65
    $region64: #{tpu_custom_call.1} parent=1 // pred_region
      %2222 = dma.done [#allocation4], 128
    $region65: #{tpu_custom_call.1} parent=1 // pred_fallthru
      _
    %2223 = vsyncpa [#allocation3], 1
    %2224 = vsyncpa [#allocation6], 1
    %2225 = vsyncpa [#allocation9], 1
    %2226 = vsyncpa [#allocation12], 1
    %2227 = vsyncpa [#allocation4], 1

// kernel: tpu_custom_call.1
$region0: #{tpu_custom_call.1}
  #allocation0 [shape = 'u32[]', space=smem, size = 0x4, offset = 0x4, fixed_abs, tag = 'smem constant byte address 0x4 - core index']
  #allocation1 [shape = 'u32[144,128]{1,0:T(1,128)}', space=vmem, size = 0x12000, scoped, tag = 'internal scratch']
  %s0 = inlined_call_operand.hbm [shape: bf16[16,128], index: 0, kind: input, shape index: {}]
  %s1 = inlined_call_operand.hbm [shape: bf16[128,512], index: 1, kind: input, shape index: {}]
  %s2 = inlined_call_operand.hbm [shape: bf16[512,512], index: 2, kind: input, shape index: {}]
  %s3 = inlined_call_operand.hbm [shape: bf16[512,256], index: 3, kind: input, shape index: {}]
  %s4 = inlined_call_operand.hbm [shape: bf16[256,128], index: 4, kind: input, shape index: {}]
  %s5 = inlined_call_operand.hbm [shape: bf16[128,128], index: 5, kind: input, shape index: {}]
  %s6 = inlined_call_operand.hbm [shape: f32[1,1536], index: 6, kind: input, shape index: {}]
  %s7 = inlined_call_operand.hbm [shape: bf16[16,128], index: 7, kind: output, shape index: {}]
  %s8 = sld [smem:[#allocation0]]
  $region66: #{tpu_custom_call.1} parent=0
    _
  %s10 = ssub.s32 1, %s8
  %s11 = scalar_select 0, %s10, %s8
  $region1: #{tpu_custom_call.1} parent=0
    #allocation2 [shape = 'u8[4096]{0}', space=vmem, size = 0x1000, scoped, tag = 'input window, operand 0, single buffered']
    #allocation3 [shape = 's32[1]{0}', space=sflag, size = 0x4, scoped, tag = 'scoped memory for tpu_custom_call.1']
    #allocation4 [shape = 's32[1]{0}', space=sflag, size = 0x4, scoped, tag = 'scoped memory for tpu_custom_call.1']
    #allocation5 [shape = 'u8[131072]{0}', space=vmem, size = 0x20000, scoped, tag = 'input window, operand 1, single buffered']
    #allocation6 [shape = 's32[1]{0}', space=sflag, size = 0x4, scoped, tag = 'scoped memory for tpu_custom_call.1']
    #allocation7 [shape = 'u8[524288]{0}', space=vmem, size = 0x80000, scoped, tag = 'input window, operand 2, single buffered']
    #allocation8 [shape = 'u8[262144]{0}', space=vmem, size = 0x40000, scoped, tag = 'input window, operand 3, single buffered']
    #allocation9 [shape = 's32[1]{0}', space=sflag, size = 0x4, scoped, tag = 'scoped memory for tpu_custom_call.1']
    #allocation10 [shape = 'u8[65536]{0}', space=vmem, size = 0x10000, scoped, tag = 'input window, operand 4, single buffered']
    #allocation11 [shape = 'u8[32768]{0}', space=vmem, size = 0x8000, scoped, tag = 'input window, operand 5, single buffered']
    #allocation12 [shape = 's32[1]{0}', space=sflag, size = 0x4, scoped, tag = 'scoped memory for tpu_custom_call.1']
    #allocation13 [shape = 'u8[6144]{0}', space=vmem, size = 0x1800, scoped, tag = 'input window, operand 6, single buffered']
    #allocation14 [shape = 'u8[4096]{0}', space=vmem, size = 0x1000, scoped, tag = 'output window, operand 0, single buffered']
    %12 = vsyncpa [#allocation3], 0
    %13 = vsyncpa [#allocation6], 0
    %14 = vsyncpa [#allocation9], 0
    %15 = vsyncpa [#allocation12], 0
    %16 = vsyncpa [#allocation4], 0
    // Predicated region
    $region2: #{tpu_custom_call.1} parent=1 // pred_check
      _
    $region3: #{tpu_custom_call.1} parent=1 // pred_check_branch
      %18 = sbr.rel (0) target = $region5
    $region4: #{tpu_custom_call.1} parent=1 // pred_region
      %s20 = ssub.s32 128, 128
      %21 = vsyncadd [#allocation3], %s20
      %s22 = sshll.u32 [#allocation2], 4
      %s23 = int_to_ptr.vmem [resolvable:$true] %s22
      %28 = dma.hbm_to_vmem [thread:$0]  %s0, 128, %s23, [#allocation3], 64, 64, 4
    $region5: #{tpu_custom_call.1} parent=1 // pred_fallthru
      _
    // Predicated region
    $region6: #{tpu_custom_call.1} parent=1 // pred_check
      _
    $region7: #{tpu_custom_call.1} parent=1 // pred_check_branch
      %30 = sbr.rel (0) target = $region9
    $region8: #{tpu_custom_call.1} parent=1 // pred_region
      %s32 = ssub.s32 4096, 4096
      %33 = vsyncadd [#allocation6], %s32
      %s34 = sshll.u32 [#allocation5], 4
      %s35 = int_to_ptr.vmem [resolvable:$true] %s34
      %40 = dma.hbm_to_vmem [thread:$0]  %s1, 4096, %s35, [#allocation6], 256, 256, 16
    $region9: #{tpu_custom_call.1} parent=1 // pred_fallthru
      _
    // Predicated region
    $region10: #{tpu_custom_call.1} parent=1 // pred_check
      _
    $region11: #{tpu_custom_call.1} parent=1 // pred_check_branch
      %42 = sbr.rel (0) target = $region13
    $region12: #{tpu_custom_call.1} parent=1 // pred_region
      %s44 = ssub.s32 16384, 16384
      %45 = vsyncadd [#allocation6], %s44
      %s46 = sshll.u32 [#allocation7], 4
      %s47 = int_to_ptr.vmem [resolvable:$true] %s46
      %52 = dma.hbm_to_vmem [thread:$0]  %s2, 16384, %s47, [#allocation6], 256, 256, 16
    $region13: #{tpu_custom_call.1} parent=1 // pred_fallthru
      _
    // Predicated region
    $region14: #{tpu_custom_call.1} parent=1 // pred_check
      _
    $region15: #{tpu_custom_call.1} parent=1 // pred_check_branch
      %54 = sbr.rel (0) target = $region17
    $region16: #{tpu_custom_call.1} parent=1 // pred_region
      %s56 = ssub.s32 8192, 8192
      %57 = vsyncadd [#allocation9], %s56
      %s58 = sshll.u32 [#allocation8], 4
      %s59 = int_to_ptr.vmem [resolvable:$true] %s58
      %64 = dma.hbm_to_vmem [thread:$0]  %s3, 8192, %s59, [#allocation9], 128, 128, 8
    $region17: #{tpu_custom_call.1} parent=1 // pred_fallthru
      _
    // Predicated region
    $region18: #{tpu_custom_call.1} parent=1 // pred_check
      _
    $region19: #{tpu_custom_call.1} parent=1 // pred_check_branch
      %66 = sbr.rel (0) target = $region21
    $region20: #{tpu_custom_call.1} parent=1 // pred_region
      %s68 = ssub.s32 2048, 2048
      %69 = vsyncadd [#allocation9], %s68
      %s70 = sshll.u32 [#allocation10], 4
      %s71 = int_to_ptr.vmem [resolvable:$true] %s70
      %76 = dma.hbm_to_vmem [thread:$0]  %s4, 2048, %s71, [#allocation9], 64, 64, 4
    $region21: #{tpu_custom_call.1} parent=1 // pred_fallthru
      _
    // Predicated region
    $region22: #{tpu_custom_call.1} parent=1 // pred_check
      _
    $region23: #{tpu_custom_call.1} parent=1 // pred_check_branch
      %78 = sbr.rel (0) target = $region25
    $region24: #{tpu_custom_call.1} parent=1 // pred_region
      %s80 = ssub.s32 1024, 1024
      %81 = vsyncadd [#allocation12], %s80
      %s82 = sshll.u32 [#allocation11], 4
      %s83 = int_to_ptr.vmem [resolvable:$true] %s82
      %88 = dma.hbm_to_vmem [thread:$0]  %s5, 1024, %s83, [#allocation12], 64, 64, 4
    $region25: #{tpu_custom_call.1} parent=1 // pred_fallthru
      _
    // Predicated region
    $region26: #{tpu_custom_call.1} parent=1 // pred_check
      _
    $region27: #{tpu_custom_call.1} parent=1 // pred_check_branch
      %90 = sbr.rel (0) target = $region29
    $region28: #{tpu_custom_call.1} parent=1 // pred_region
      %s92 = ssub.s32 192, 192
      %93 = vsyncadd [#allocation12], %s92
      %s95 = sshll.u32 [#allocation13], 4
      %s96 = int_to_ptr.vmem [resolvable:$true] %s95
      %98 = dma.hbm_to_vmem [thread:$0]  %s6, 192, %s96, [#allocation12]
    $region29: #{tpu_custom_call.1} parent=1 // pred_fallthru
      _
    // Predicated region
    $region30: #{tpu_custom_call.1} parent=1 // pred_check
      _
    $region31: #{tpu_custom_call.1} parent=1 // pred_check_branch
      %100 = sbr.rel (0) target = $region33
    $region32: #{tpu_custom_call.1} parent=1 // pred_region
      %101 = dma.done [#allocation3], 128
    $region33: #{tpu_custom_call.1} parent=1 // pred_fallthru
      _
    // Predicated region
    $region34: #{tpu_custom_call.1} parent=1 // pred_check
      _
    $region35: #{tpu_custom_call.1} parent=1 // pred_check_branch
      %103 = sbr.rel (0) target = $region37
    $region36: #{tpu_custom_call.1} parent=1 // pred_region
      %104 = dma.done [#allocation6], 4096
    $region37: #{tpu_custom_call.1} parent=1 // pred_fallthru
      _
    // Predicated region
    $region38: #{tpu_custom_call.1} parent=1 // pred_check
      _
    $region39: #{tpu_custom_call.1} parent=1 // pred_check_branch
      %106 = sbr.rel (0) target = $region41
    $region40: #{tpu_custom_call.1} parent=1 // pred_region
      %107 = dma.done [#allocation6], 16384
    $region41: #{tpu_custom_call.1} parent=1 // pred_fallthru
      _
    // Predicated region
    $region42: #{tpu_custom_call.1} parent=1 // pred_check
      _
    $region43: #{tpu_custom_call.1} parent=1 // pred_check_branch
      %109 = sbr.rel (0) target = $region45
    $region44: #{tpu_custom_call.1} parent=1 // pred_region
      %110 = dma.done [#allocation9], 8192
    $region45: #{tpu_custom_call.1} parent=1 // pred_fallthru
      _
    // Predicated region
    $region46: #{tpu_custom_call.1} parent=1 // pred_check
      _
    $region47: #{tpu_custom_call.1} parent=1 // pred_check_branch
      %112 = sbr.rel (0) target = $region49
    $region48: #{tpu_custom_call.1} parent=1 // pred_region
      %113 = dma.done [#allocation9], 2048
    $region49: #{tpu_custom_call.1} parent=1 // pred_fallthru
      _
    // Predicated region
    $region50: #{tpu_custom_call.1} parent=1 // pred_check
      _
    $region51: #{tpu_custom_call.1} parent=1 // pred_check_branch
      %115 = sbr.rel (0) target = $region53
    $region52: #{tpu_custom_call.1} parent=1 // pred_region
      %116 = dma.done [#allocation12], 1024
    $region53: #{tpu_custom_call.1} parent=1 // pred_fallthru
      _
    // Predicated region
    $region54: #{tpu_custom_call.1} parent=1 // pred_check
      _
    $region55: #{tpu_custom_call.1} parent=1 // pred_check_branch
      %118 = sbr.rel (0) target = $region57
    $region56: #{tpu_custom_call.1} parent=1 // pred_region
      %119 = dma.done [#allocation12], 192
    $region57: #{tpu_custom_call.1} parent=1 // pred_fallthru
      _
    %v121 = vld [vmem:[#allocation2] sm:$0xf]
    %v122 = vld [vmem:[#allocation2 + $0x4] sm:$0xf]
    %v123 = vld [vmem:[#allocation5] sm:$0xff]
    %v124 = vld [vmem:[#allocation5 + $0x8] sm:$0xff]
    %v125 = vld [vmem:[#allocation5 + $0x10] sm:$0xff]
    %v126 = vld [vmem:[#allocation5 + $0x18] sm:$0xff]
    %v127 = vld [vmem:[#allocation5 + $0x20] sm:$0xff]
    %v128 = vld [vmem:[#allocation5 + $0x28] sm:$0xff]
    %v129 = vld [vmem:[#allocation5 + $0x30] sm:$0xff]
    %v130 = vld [vmem:[#allocation5 + $0x38] sm:$0xff]
    %v131 = vld [vmem:[#allocation5 + $0x40] sm:$0xff]
    %v132 = vld [vmem:[#allocation5 + $0x48] sm:$0xff]
    %v133 = vld [vmem:[#allocation5 + $0x50] sm:$0xff]
    %v134 = vld [vmem:[#allocation5 + $0x58] sm:$0xff]
    %v135 = vld [vmem:[#allocation5 + $0x60] sm:$0xff]
    %v136 = vld [vmem:[#allocation5 + $0x68] sm:$0xff]
    %v137 = vld [vmem:[#allocation5 + $0x70] sm:$0xff]
    %v138 = vld [vmem:[#allocation5 + $0x78] sm:$0xff]
    %v139 = vld [vmem:[#allocation5 + $0x80] sm:$0xff]
    %v140 = vld [vmem:[#allocation5 + $0x88] sm:$0xff]
    %v141 = vld [vmem:[#allocation5 + $0x90] sm:$0xff]
    %v142 = vld [vmem:[#allocation5 + $0x98] sm:$0xff]
    %v143 = vld [vmem:[#allocation5 + $0xa0] sm:$0xff]
    %v144 = vld [vmem:[#allocation5 + $0xa8] sm:$0xff]
    %v145 = vld [vmem:[#allocation5 + $0xb0] sm:$0xff]
    %v146 = vld [vmem:[#allocation5 + $0xb8] sm:$0xff]
    %v147 = vld [vmem:[#allocation5 + $0xc0] sm:$0xff]
    %v148 = vld [vmem:[#allocation5 + $0xc8] sm:$0xff]
    %v149 = vld [vmem:[#allocation5 + $0xd0] sm:$0xff]
    %v150 = vld [vmem:[#allocation5 + $0xd8] sm:$0xff]
    %v151 = vld [vmem:[#allocation5 + $0xe0] sm:$0xff]
    %v152 = vld [vmem:[#allocation5 + $0xe8] sm:$0xff]
    %v153 = vld [vmem:[#allocation5 + $0xf0] sm:$0xff]
    %v154 = vld [vmem:[#allocation5 + $0xf8] sm:$0xff]
    %v155 = vld [vmem:[#allocation13] sm:$0xf]
    %v157 = vlaneseq
    %v158 = vshrl.u32 %v157, 7
    %v159 = vsub.s32 0, %v158
    %v160 = vrot.slane %v155, %v159
    %v161 = vlaneseq
    %v162 = vshrl.u32 %v161, 7
    %v163 = vsub.s32 1, %v162
    %v164 = vrot.slane %v155, %v163
    %v165 = vlaneseq
    %v166 = vshrl.u32 %v165, 7
    %v167 = vsub.s32 2, %v166
    %v168 = vrot.slane %v155, %v167
    %v169 = vlaneseq
    %v170 = vshrl.u32 %v169, 7
    %v171 = vsub.s32 3, %v170
    %v172 = vrot.slane %v155, %v171
    %v179 = vunpack.c.l.b16 %v121
    %v180 = vunpack.c.l.b16 %v122
    %v181 = vpack.c.b16 %v180, %v179
    %v215 = vunpack.c.l.b16 %v123
    %v216 = vunpack.c.h.b16 %v123
    %v217 = vunpack.c.l.b16 %v124
    %v218 = vunpack.c.h.b16 %v124
    %v219 = vunpack.c.l.b16 %v125
    %v220 = vunpack.c.h.b16 %v125
    %v221 = vunpack.c.l.b16 %v126
    %v222 = vunpack.c.h.b16 %v126
    %v223 = vunpack.c.l.b16 %v127
    %v224 = vunpack.c.h.b16 %v127
    %v225 = vunpack.c.l.b16 %v128
    %v226 = vunpack.c.h.b16 %v128
    %v227 = vunpack.c.l.b16 %v129
    %v228 = vunpack.c.h.b16 %v129
    %v229 = vunpack.c.l.b16 %v130
    %v230 = vunpack.c.h.b16 %v130
    %v231 = vunpack.c.l.b16 %v131
    %v232 = vunpack.c.h.b16 %v131
    %v233 = vunpack.c.l.b16 %v132
    %v234 = vunpack.c.h.b16 %v132
    %v235 = vunpack.c.l.b16 %v133
    %v236 = vunpack.c.h.b16 %v133
    %v237 = vunpack.c.l.b16 %v134
    %v238 = vunpack.c.h.b16 %v134
    %v239 = vunpack.c.l.b16 %v135
    %v240 = vunpack.c.h.b16 %v135
    %v241 = vunpack.c.l.b16 %v136
    %v242 = vunpack.c.h.b16 %v136
    %v243 = vunpack.c.l.b16 %v137
    %v244 = vunpack.c.h.b16 %v137
    %v245 = vunpack.c.l.b16 %v138
    %v246 = vunpack.c.h.b16 %v138
    %v247 = vunpack.c.l.b16 %v139
    %v248 = vunpack.c.h.b16 %v139
    %v249 = vunpack.c.l.b16 %v140
    %v250 = vunpack.c.h.b16 %v140
    %v251 = vunpack.c.l.b16 %v141
    %v252 = vunpack.c.h.b16 %v141
    %v253 = vunpack.c.l.b16 %v142
    %v254 = vunpack.c.h.b16 %v142
    %v255 = vunpack.c.l.b16 %v143
    %v256 = vunpack.c.h.b16 %v143
    %v257 = vunpack.c.l.b16 %v144
    %v258 = vunpack.c.h.b16 %v144
    %v259 = vunpack.c.l.b16 %v145
    %v260 = vunpack.c.h.b16 %v145
    %v261 = vunpack.c.l.b16 %v146
    %v262 = vunpack.c.h.b16 %v146
    %v263 = vunpack.c.l.b16 %v147
    %v264 = vunpack.c.h.b16 %v147
    %v265 = vunpack.c.l.b16 %v148
    %v266 = vunpack.c.h.b16 %v148
    %v267 = vunpack.c.l.b16 %v149
    %v268 = vunpack.c.h.b16 %v149
    %v269 = vunpack.c.l.b16 %v150
    %v270 = vunpack.c.h.b16 %v150
    %v271 = vunpack.c.l.b16 %v151
    %v272 = vunpack.c.h.b16 %v151
    %v273 = vunpack.c.l.b16 %v152
    %v274 = vunpack.c.h.b16 %v152
    %v275 = vunpack.c.l.b16 %v153
    %v276 = vunpack.c.h.b16 %v153
    %v277 = vunpack.c.l.b16 %v154
    %v278 = vunpack.c.h.b16 %v154
    %v279 = vpack.c.b16 %v219, %v215
    %v280 = vpack.c.b16 %v220, %v216
    %v281 = vpack.c.b16 %v221, %v217
    %v282 = vpack.c.b16 %v222, %v218
    %v283 = vpack.c.b16 %v227, %v223
    %v284 = vpack.c.b16 %v228, %v224
    %v285 = vpack.c.b16 %v229, %v225
    %v286 = vpack.c.b16 %v230, %v226
    %v287 = vpack.c.b16 %v235, %v231
    %v288 = vpack.c.b16 %v236, %v232
    %v289 = vpack.c.b16 %v237, %v233
    %v290 = vpack.c.b16 %v238, %v234
    %v291 = vpack.c.b16 %v243, %v239
    %v292 = vpack.c.b16 %v244, %v240
    %v293 = vpack.c.b16 %v245, %v241
    %v294 = vpack.c.b16 %v246, %v242
    %v295 = vpack.c.b16 %v251, %v247
    %v296 = vpack.c.b16 %v252, %v248
    %v297 = vpack.c.b16 %v253, %v249
    %v298 = vpack.c.b16 %v254, %v250
    %v299 = vpack.c.b16 %v259, %v255
    %v300 = vpack.c.b16 %v260, %v256
    %v301 = vpack.c.b16 %v261, %v257
    %v302 = vpack.c.b16 %v262, %v258
    %v303 = vpack.c.b16 %v267, %v263
    %v304 = vpack.c.b16 %v268, %v264
    %v305 = vpack.c.b16 %v269, %v265
    %v306 = vpack.c.b16 %v270, %v266
    %v307 = vpack.c.b16 %v275, %v271
    %v308 = vpack.c.b16 %v276, %v272
    %v309 = vpack.c.b16 %v277, %v273
    %v310 = vpack.c.b16 %v278, %v274
    %343 = vmatprep.subr.bf16.mxu0 %v308
    %344 = vmatpush1.bf16.msra.mxu0 %v307
    %345 = vmatprep.subr.bf16.mxu0 %v304
    %346 = vmatpush1.bf16.msra.mxu0 %v303
    %347 = vmatprep.subr.bf16.mxu0 %v300
    %348 = vmatpush1.bf16.msra.mxu0 %v299
    %349 = vmatprep.subr.bf16.mxu0 %v296
    %350 = vmatpush1.bf16.msra.mxu0 %v295
    %351 = vmatprep.subr.bf16.mxu0 %v292
    %352 = vmatpush1.bf16.msra.mxu0 %v291
    %353 = vmatprep.subr.bf16.mxu0 %v288
    %354 = vmatpush1.bf16.msra.mxu0 %v287
    %355 = vmatprep.subr.bf16.mxu0 %v284
    %356 = vmatpush1.bf16.msra.mxu0 %v283
    %357 = vmatprep.subr.bf16.mxu0 %v280
    %358 = vmatpush1.bf16.msra.mxu0 %v279
    %359 = vmatprep.subr.bf16.mxu0 0
    %360 = vmatpush2.bf16.msra.mxu0 0
    %361 = vmatprep.subr.bf16.mxu0 0
    %362 = vmatpush2.bf16.msra.mxu0 0
    %363 = vmatprep.subr.bf16.mxu0 0
    %364 = vmatpush2.bf16.msra.mxu0 0
    %365 = vmatprep.subr.bf16.mxu0 0
    %366 = vmatpush2.bf16.msra.mxu0 0
    %367 = vmatprep.subr.bf16.mxu0 0
    %368 = vmatpush2.bf16.msra.mxu0 0
    %369 = vmatprep.subr.bf16.mxu0 0
    %370 = vmatpush2.bf16.msra.mxu0 0
    %371 = vmatprep.subr.bf16.mxu0 0
    %372 = vmatpush2.bf16.msra.mxu0 0
    %373 = vmatprep.subr.bf16.mxu0 0
    %374 = vmatpush2.bf16.msra.mxu0 0
    %375 = vmatprep.mubr.bf16.mxu0 0
    %376 = vmatmul.mubr.bf16.gmra.mxu0 %v181
    %v377 = vpop.f32.mrf.mxu0
    %v378 = vadd.f32 %v160, %v377
    %v379 = vpop.f32.mrf.mxu0
    %v380 = vadd.f32 %v164, %v379
    %v381 = vpop.f32.mrf.mxu0
    %v382 = vadd.f32 %v160, %v381
    %v383 = vpop.f32.mrf.mxu0
    %v384 = vadd.f32 %v164, %v383
    %385 = vdwg.mxu0
    %386 = vmatprep.subr.bf16.mxu0 %v310
    %387 = vmatpush1.bf16.msra.mxu0 %v309
    %388 = vmatprep.subr.bf16.mxu0 %v306
    %389 = vmatpush1.bf16.msra.mxu0 %v305
    %390 = vmatprep.subr.bf16.mxu0 %v302
    %391 = vmatpush1.bf16.msra.mxu0 %v301
    %392 = vmatprep.subr.bf16.mxu0 %v298
    %393 = vmatpush1.bf16.msra.mxu0 %v297
    %394 = vmatprep.subr.bf16.mxu0 %v294
    %395 = vmatpush1.bf16.msra.mxu0 %v293
    %396 = vmatprep.subr.bf16.mxu0 %v290
    %397 = vmatpush1.bf16.msra.mxu0 %v289
    %398 = vmatprep.subr.bf16.mxu0 %v286
    %399 = vmatpush1.bf16.msra.mxu0 %v285
    %400 = vmatprep.subr.bf16.mxu0 %v282
    %401 = vmatpush1.bf16.msra.mxu0 %v281
    %402 = vmatprep.subr.bf16.mxu0 0
    %403 = vmatpush2.bf16.msra.mxu0 0
    %404 = vmatprep.subr.bf16.mxu0 0
    %405 = vmatpush2.bf16.msra.mxu0 0
    %406 = vmatprep.subr.bf16.mxu0 0
    %407 = vmatpush2.bf16.msra.mxu0 0
    %408 = vmatprep.subr.bf16.mxu0 0
    %409 = vmatpush2.bf16.msra.mxu0 0
    %410 = vmatprep.subr.bf16.mxu0 0
    %411 = vmatpush2.bf16.msra.mxu0 0
    %412 = vmatprep.subr.bf16.mxu0 0
    %413 = vmatpush2.bf16.msra.mxu0 0
    %414 = vmatprep.subr.bf16.mxu0 0
    %415 = vmatpush2.bf16.msra.mxu0 0
    %416 = vmatprep.subr.bf16.mxu0 0
    %417 = vmatpush2.bf16.msra.mxu0 0
    %418 = vmatprep.mubr.bf16.mxu0 0
    %419 = vmatmul.mubr.bf16.gmra.mxu0 %v181
    %v420 = vpop.f32.mrf.mxu0
    %v421 = vadd.f32 %v168, %v420
    %v422 = vpop.f32.mrf.mxu0
    %v423 = vadd.f32 %v172, %v422
    %v424 = vpop.f32.mrf.mxu0
    %v425 = vadd.f32 %v168, %v424
    %v426 = vpop.f32.mrf.mxu0
    %v427 = vadd.f32 %v172, %v426
    %428 = vdwg.mxu0
    %v429 = vmax.f32 %v378, 0.0
    %v430 = vmax.f32 %v380, 0.0
    %v431 = vmax.f32 %v421, 0.0
    %v432 = vmax.f32 %v423, 0.0
    %v433 = vmax.f32 %v382, 0.0
    %v434 = vmax.f32 %v384, 0.0
    %v435 = vmax.f32 %v425, 0.0
    %v436 = vmax.f32 %v427, 0.0
    %v437 = vpack.c.bf16 %v433, %v429
    %v438 = vpack.c.bf16 %v434, %v430
    %v439 = vpack.c.bf16 %v435, %v431
    %v440 = vpack.c.bf16 %v436, %v432
    %v441 = vld [vmem:[#allocation7] sm:$0xff]
    %v442 = vld [vmem:[#allocation7 + $0x8] sm:$0xff]
    %v443 = vld [vmem:[#allocation7 + $0x10] sm:$0xff]
    %v444 = vld [vmem:[#allocation7 + $0x18] sm:$0xff]
    %v445 = vld [vmem:[#allocation7 + $0x20] sm:$0xff]
    %v446 = vld [vmem:[#allocation7 + $0x28] sm:$0xff]
    %v447 = vld [vmem:[#allocation7 + $0x30] sm:$0xff]
    %v448 = vld [vmem:[#allocation7 + $0x38] sm:$0xff]
    %v449 = vld [vmem:[#allocation7 + $0x40] sm:$0xff]
    %v450 = vld [vmem:[#allocation7 + $0x48] sm:$0xff]
    %v451 = vld [vmem:[#allocation7 + $0x50] sm:$0xff]
    %v452 = vld [vmem:[#allocation7 + $0x58] sm:$0xff]
    %v453 = vld [vmem:[#allocation7 + $0x60] sm:$0xff]
    %v454 = vld [vmem:[#allocation7 + $0x68] sm:$0xff]
    %v455 = vld [vmem:[#allocation7 + $0x70] sm:$0xff]
    %v456 = vld [vmem:[#allocation7 + $0x78] sm:$0xff]
    %v457 = vld [vmem:[#allocation7 + $0x80] sm:$0xff]
    %v458 = vld [vmem:[#allocation7 + $0x88] sm:$0xff]
    %v459 = vld [vmem:[#allocation7 + $0x90] sm:$0xff]
    %v460 = vld [vmem:[#allocation7 + $0x98] sm:$0xff]
    %v461 = vld [vmem:[#allocation7 + $0xa0] sm:$0xff]
    %v462 = vld [vmem:[#allocation7 + $0xa8] sm:$0xff]
    %v463 = vld [vmem:[#allocation7 + $0xb0] sm:$0xff]
    %v464 = vld [vmem:[#allocation7 + $0xb8] sm:$0xff]
    %v465 = vld [vmem:[#allocation7 + $0xc0] sm:$0xff]
    %v466 = vld [vmem:[#allocation7 + $0xc8] sm:$0xff]
    %v467 = vld [vmem:[#allocation7 + $0xd0] sm:$0xff]
    %v468 = vld [vmem:[#allocation7 + $0xd8] sm:$0xff]
    %v469 = vld [vmem:[#allocation7 + $0xe0] sm:$0xff]
    %v470 = vld [vmem:[#allocation7 + $0xe8] sm:$0xff]
    %v471 = vld [vmem:[#allocation7 + $0xf0] sm:$0xff]
    %v472 = vld [vmem:[#allocation7 + $0xf8] sm:$0xff]
    %v473 = vld [vmem:[#allocation7 + $0x100] sm:$0xff]
    %v474 = vld [vmem:[#allocation7 + $0x108] sm:$0xff]
    %v475 = vld [vmem:[#allocation7 + $0x110] sm:$0xff]
    %v476 = vld [vmem:[#allocation7 + $0x118] sm:$0xff]
    %v477 = vld [vmem:[#allocation7 + $0x120] sm:$0xff]
    %v478 = vld [vmem:[#allocation7 + $0x128] sm:$0xff]
    %v479 = vld [vmem:[#allocation7 + $0x130] sm:$0xff]
    %v480 = vld [vmem:[#allocation7 + $0x138] sm:$0xff]
    %v481 = vld [vmem:[#allocation7 + $0x140] sm:$0xff]
    %v482 = vld [vmem:[#allocation7 + $0x148] sm:$0xff]
    %v483 = vld [vmem:[#allocation7 + $0x150] sm:$0xff]
    %v484 = vld [vmem:[#allocation7 + $0x158] sm:$0xff]
    %v485 = vld [vmem:[#allocation7 + $0x160] sm:$0xff]
    %v486 = vld [vmem:[#allocation7 + $0x168] sm:$0xff]
    %v487 = vld [vmem:[#allocation7 + $0x170] sm:$0xff]
    %v488 = vld [vmem:[#allocation7 + $0x178] sm:$0xff]
    %v489 = vld [vmem:[#allocation7 + $0x180] sm:$0xff]
    %v490 = vld [vmem:[#allocation7 + $0x188] sm:$0xff]
    %v491 = vld [vmem:[#allocation7 + $0x190] sm:$0xff]
    %v492 = vld [vmem:[#allocation7 + $0x198] sm:$0xff]
    %v493 = vld [vmem:[#allocation7 + $0x1a0] sm:$0xff]
    %v494 = vld [vmem:[#allocation7 + $0x1a8] sm:$0xff]
    %v495 = vld [vmem:[#allocation7 + $0x1b0] sm:$0xff]
    %v496 = vld [vmem:[#allocation7 + $0x1b8] sm:$0xff]
    %v497 = vld [vmem:[#allocation7 + $0x1c0] sm:$0xff]
    %v498 = vld [vmem:[#allocation7 + $0x1c8] sm:$0xff]
    %v499 = vld [vmem:[#allocation7 + $0x1d0] sm:$0xff]
    %v500 = vld [vmem:[#allocation7 + $0x1d8] sm:$0xff]
    %v501 = vld [vmem:[#allocation7 + $0x1e0] sm:$0xff]
    %v502 = vld [vmem:[#allocation7 + $0x1e8] sm:$0xff]
    %v503 = vld [vmem:[#allocation7 + $0x1f0] sm:$0xff]
    %v504 = vld [vmem:[#allocation7 + $0x1f8] sm:$0xff]
    %v505 = vld [vmem:[#allocation7 + $0x200] sm:$0xff]
    %v506 = vld [vmem:[#allocation7 + $0x208] sm:$0xff]
    %v507 = vld [vmem:[#allocation7 + $0x210] sm:$0xff]
    %v508 = vld [vmem:[#allocation7 + $0x218] sm:$0xff]
    %v509 = vld [vmem:[#allocation7 + $0x220] sm:$0xff]
    %v510 = vld [vmem:[#allocation7 + $0x228] sm:$0xff]
    %v511 = vld [vmem:[#allocation7 + $0x230] sm:$0xff]
    %v512 = vld [vmem:[#allocation7 + $0x238] sm:$0xff]
    %v513 = vld [vmem:[#allocation7 + $0x240] sm:$0xff]
    %v514 = vld [vmem:[#allocation7 + $0x248] sm:$0xff]
    %v515 = vld [vmem:[#allocation7 + $0x250] sm:$0xff]
    %v516 = vld [vmem:[#allocation7 + $0x258] sm:$0xff]
    %v517 = vld [vmem:[#allocation7 + $0x260] sm:$0xff]
    %v518 = vld [vmem:[#allocation7 + $0x268] sm:$0xff]
    %v519 = vld [vmem:[#allocation7 + $0x270] sm:$0xff]
    %v520 = vld [vmem:[#allocation7 + $0x278] sm:$0xff]
    %v521 = vld [vmem:[#allocation7 + $0x280] sm:$0xff]
    %v522 = vld [vmem:[#allocation7 + $0x288] sm:$0xff]
    %v523 = vld [vmem:[#allocation7 + $0x290] sm:$0xff]
    %v524 = vld [vmem:[#allocation7 + $0x298] sm:$0xff]
    %v525 = vld [vmem:[#allocation7 + $0x2a0] sm:$0xff]
    %v526 = vld [vmem:[#allocation7 + $0x2a8] sm:$0xff]
    %v527 = vld [vmem:[#allocation7 + $0x2b0] sm:$0xff]
    %v528 = vld [vmem:[#allocation7 + $0x2b8] sm:$0xff]
    %v529 = vld [vmem:[#allocation7 + $0x2c0] sm:$0xff]
    %v530 = vld [vmem:[#allocation7 + $0x2c8] sm:$0xff]
    %v531 = vld [vmem:[#allocation7 + $0x2d0] sm:$0xff]
    %v532 = vld [vmem:[#allocation7 + $0x2d8] sm:$0xff]
    %v533 = vld [vmem:[#allocation7 + $0x2e0] sm:$0xff]
    %v534 = vld [vmem:[#allocation7 + $0x2e8] sm:$0xff]
    %v535 = vld [vmem:[#allocation7 + $0x2f0] sm:$0xff]
    %v536 = vld [vmem:[#allocation7 + $0x2f8] sm:$0xff]
    %v537 = vld [vmem:[#allocation7 + $0x300] sm:$0xff]
    %v538 = vld [vmem:[#allocation7 + $0x308] sm:$0xff]
    %v539 = vld [vmem:[#allocation7 + $0x310] sm:$0xff]
    %v540 = vld [vmem:[#allocation7 + $0x318] sm:$0xff]
    %v541 = vld [vmem:[#allocation7 + $0x320] sm:$0xff]
    %v542 = vld [vmem:[#allocation7 + $0x328] sm:$0xff]
    %v543 = vld [vmem:[#allocation7 + $0x330] sm:$0xff]
    %v544 = vld [vmem:[#allocation7 + $0x338] sm:$0xff]
    %v545 = vld [vmem:[#allocation7 + $0x340] sm:$0xff]
    %v546 = vld [vmem:[#allocation7 + $0x348] sm:$0xff]
    %v547 = vld [vmem:[#allocation7 + $0x350] sm:$0xff]
    %v548 = vld [vmem:[#allocation7 + $0x358] sm:$0xff]
    %v549 = vld [vmem:[#allocation7 + $0x360] sm:$0xff]
    %v550 = vld [vmem:[#allocation7 + $0x368] sm:$0xff]
    %v551 = vld [vmem:[#allocation7 + $0x370] sm:$0xff]
    %v552 = vld [vmem:[#allocation7 + $0x378] sm:$0xff]
    %v553 = vld [vmem:[#allocation7 + $0x380] sm:$0xff]
    %v554 = vld [vmem:[#allocation7 + $0x388] sm:$0xff]
    %v555 = vld [vmem:[#allocation7 + $0x390] sm:$0xff]
    %v556 = vld [vmem:[#allocation7 + $0x398] sm:$0xff]
    %v557 = vld [vmem:[#allocation7 + $0x3a0] sm:$0xff]
    %v558 = vld [vmem:[#allocation7 + $0x3a8] sm:$0xff]
    %v559 = vld [vmem:[#allocation7 + $0x3b0] sm:$0xff]
    %v560 = vld [vmem:[#allocation7 + $0x3b8] sm:$0xff]
    %v561 = vld [vmem:[#allocation7 + $0x3c0] sm:$0xff]
    %v562 = vld [vmem:[#allocation7 + $0x3c8] sm:$0xff]
    %v563 = vld [vmem:[#allocation7 + $0x3d0] sm:$0xff]
    %v564 = vld [vmem:[#allocation7 + $0x3d8] sm:$0xff]
    %v565 = vld [vmem:[#allocation7 + $0x3e0] sm:$0xff]
    %v566 = vld [vmem:[#allocation7 + $0x3e8] sm:$0xff]
    %v567 = vld [vmem:[#allocation7 + $0x3f0] sm:$0xff]
    %v568 = vld [vmem:[#allocation7 + $0x3f8] sm:$0xff]
    %v569 = vld [vmem:[#allocation13 + $0x4] sm:$0xf]
    %v571 = vlaneseq
    %v572 = vshrl.u32 %v571, 7
    %v573 = vsub.s32 0, %v572
    %v574 = vrot.slane %v569, %v573
    %v575 = vlaneseq
    %v576 = vshrl.u32 %v575, 7
    %v577 = vsub.s32 1, %v576
    %v578 = vrot.slane %v569, %v577
    %v579 = vlaneseq
    %v580 = vshrl.u32 %v579, 7
    %v581 = vsub.s32 2, %v580
    %v582 = vrot.slane %v569, %v581
    %v583 = vlaneseq
    %v584 = vshrl.u32 %v583, 7
    %v585 = vsub.s32 3, %v584
    %v586 = vrot.slane %v569, %v585
    %v719 = vunpack.c.l.b16 %v441
    %v720 = vunpack.c.h.b16 %v441
    %v721 = vunpack.c.l.b16 %v442
    %v722 = vunpack.c.h.b16 %v442
    %v723 = vunpack.c.l.b16 %v443
    %v724 = vunpack.c.h.b16 %v443
    %v725 = vunpack.c.l.b16 %v444
    %v726 = vunpack.c.h.b16 %v444
    %v727 = vunpack.c.l.b16 %v445
    %v728 = vunpack.c.h.b16 %v445
    %v729 = vunpack.c.l.b16 %v446
    %v730 = vunpack.c.h.b16 %v446
    %v731 = vunpack.c.l.b16 %v447
    %v732 = vunpack.c.h.b16 %v447
    %v733 = vunpack.c.l.b16 %v448
    %v734 = vunpack.c.h.b16 %v448
    %v735 = vunpack.c.l.b16 %v449
    %v736 = vunpack.c.h.b16 %v449
    %v737 = vunpack.c.l.b16 %v450
    %v738 = vunpack.c.h.b16 %v450
    %v739 = vunpack.c.l.b16 %v451
    %v740 = vunpack.c.h.b16 %v451
    %v741 = vunpack.c.l.b16 %v452
    %v742 = vunpack.c.h.b16 %v452
    %v743 = vunpack.c.l.b16 %v453
    %v744 = vunpack.c.h.b16 %v453
    %v745 = vunpack.c.l.b16 %v454
    %v746 = vunpack.c.h.b16 %v454
    %v747 = vunpack.c.l.b16 %v455
    %v748 = vunpack.c.h.b16 %v455
    %v749 = vunpack.c.l.b16 %v456
    %v750 = vunpack.c.h.b16 %v456
    %v751 = vunpack.c.l.b16 %v457
    %v752 = vunpack.c.h.b16 %v457
    %v753 = vunpack.c.l.b16 %v458
    %v754 = vunpack.c.h.b16 %v458
    %v755 = vunpack.c.l.b16 %v459
    %v756 = vunpack.c.h.b16 %v459
    %v757 = vunpack.c.l.b16 %v460
    %v758 = vunpack.c.h.b16 %v460
    %v759 = vunpack.c.l.b16 %v461
    %v760 = vunpack.c.h.b16 %v461
    %v761 = vunpack.c.l.b16 %v462
    %v762 = vunpack.c.h.b16 %v462
    %v763 = vunpack.c.l.b16 %v463
    %v764 = vunpack.c.h.b16 %v463
    %v765 = vunpack.c.l.b16 %v464
    %v766 = vunpack.c.h.b16 %v464
    %v767 = vunpack.c.l.b16 %v465
    %v768 = vunpack.c.h.b16 %v465
    %v769 = vunpack.c.l.b16 %v466
    %v770 = vunpack.c.h.b16 %v466
    %v771 = vunpack.c.l.b16 %v467
    %v772 = vunpack.c.h.b16 %v467
    %v773 = vunpack.c.l.b16 %v468
    %v774 = vunpack.c.h.b16 %v468
    %v775 = vunpack.c.l.b16 %v469
    %v776 = vunpack.c.h.b16 %v469
    %v777 = vunpack.c.l.b16 %v470
    %v778 = vunpack.c.h.b16 %v470
    %v779 = vunpack.c.l.b16 %v471
    %v780 = vunpack.c.h.b16 %v471
    %v781 = vunpack.c.l.b16 %v472
    %v782 = vunpack.c.h.b16 %v472
    %v783 = vunpack.c.l.b16 %v473
    %v784 = vunpack.c.h.b16 %v473
    %v785 = vunpack.c.l.b16 %v474
    %v786 = vunpack.c.h.b16 %v474
    %v787 = vunpack.c.l.b16 %v475
    %v788 = vunpack.c.h.b16 %v475
    %v789 = vunpack.c.l.b16 %v476
    %v790 = vunpack.c.h.b16 %v476
    %v791 = vunpack.c.l.b16 %v477
    %v792 = vunpack.c.h.b16 %v477
    %v793 = vunpack.c.l.b16 %v478
    %v794 = vunpack.c.h.b16 %v478
    %v795 = vunpack.c.l.b16 %v479
    %v796 = vunpack.c.h.b16 %v479
    %v797 = vunpack.c.l.b16 %v480
    %v798 = vunpack.c.h.b16 %v480
    %v799 = vunpack.c.l.b16 %v481
    %v800 = vunpack.c.h.b16 %v481
    %v801 = vunpack.c.l.b16 %v482
    %v802 = vunpack.c.h.b16 %v482
    %v803 = vunpack.c.l.b16 %v483
    %v804 = vunpack.c.h.b16 %v483
    %v805 = vunpack.c.l.b16 %v484
    %v806 = vunpack.c.h.b16 %v484
    %v807 = vunpack.c.l.b16 %v485
    %v808 = vunpack.c.h.b16 %v485
    %v809 = vunpack.c.l.b16 %v486
    %v810 = vunpack.c.h.b16 %v486
    %v811 = vunpack.c.l.b16 %v487
    %v812 = vunpack.c.h.b16 %v487
    %v813 = vunpack.c.l.b16 %v488
    %v814 = vunpack.c.h.b16 %v488
    %v815 = vunpack.c.l.b16 %v489
    %v816 = vunpack.c.h.b16 %v489
    %v817 = vunpack.c.l.b16 %v490
    %v818 = vunpack.c.h.b16 %v490
    %v819 = vunpack.c.l.b16 %v491
    %v820 = vunpack.c.h.b16 %v491
    %v821 = vunpack.c.l.b16 %v492
    %v822 = vunpack.c.h.b16 %v492
    %v823 = vunpack.c.l.b16 %v493
    %v824 = vunpack.c.h.b16 %v493
    %v825 = vunpack.c.l.b16 %v494
    %v826 = vunpack.c.h.b16 %v494
    %v827 = vunpack.c.l.b16 %v495
    %v828 = vunpack.c.h.b16 %v495
    %v829 = vunpack.c.l.b16 %v496
    %v830 = vunpack.c.h.b16 %v496
    %v831 = vunpack.c.l.b16 %v497
    %v832 = vunpack.c.h.b16 %v497
    %v833 = vunpack.c.l.b16 %v498
    %v834 = vunpack.c.h.b16 %v498
    %v835 = vunpack.c.l.b16 %v499
    %v836 = vunpack.c.h.b16 %v499
    %v837 = vunpack.c.l.b16 %v500
    %v838 = vunpack.c.h.b16 %v500
    %v839 = vunpack.c.l.b16 %v501
    %v840 = vunpack.c.h.b16 %v501
    %v841 = vunpack.c.l.b16 %v502
    %v842 = vunpack.c.h.b16 %v502
    %v843 = vunpack.c.l.b16 %v503
    %v844 = vunpack.c.h.b16 %v503
    %v845 = vunpack.c.l.b16 %v504
    %v846 = vunpack.c.h.b16 %v504
    %v847 = vunpack.c.l.b16 %v505
    %v848 = vunpack.c.h.b16 %v505
    %v849 = vunpack.c.l.b16 %v506
    %v850 = vunpack.c.h.b16 %v506
    %v851 = vunpack.c.l.b16 %v507
    %v852 = vunpack.c.h.b16 %v507
    %v853 = vunpack.c.l.b16 %v508
    %v854 = vunpack.c.h.b16 %v508
    %v855 = vunpack.c.l.b16 %v509
    %v856 = vunpack.c.h.b16 %v509
    %v857 = vunpack.c.l.b16 %v510
    %v858 = vunpack.c.h.b16 %v510
    %v859 = vunpack.c.l.b16 %v511
    %v860 = vunpack.c.h.b16 %v511
    %v861 = vunpack.c.l.b16 %v512
    %v862 = vunpack.c.h.b16 %v512
    %v863 = vunpack.c.l.b16 %v513
    %v864 = vunpack.c.h.b16 %v513
    %v865 = vunpack.c.l.b16 %v514
    %v866 = vunpack.c.h.b16 %v514
    %v867 = vunpack.c.l.b16 %v515
    %v868 = vunpack.c.h.b16 %v515
    %v869 = vunpack.c.l.b16 %v516
    %v870 = vunpack.c.h.b16 %v516
    %v871 = vunpack.c.l.b16 %v517
    %v872 = vunpack.c.h.b16 %v517
    %v873 = vunpack.c.l.b16 %v518
    %v874 = vunpack.c.h.b16 %v518
    %v875 = vunpack.c.l.b16 %v519
    %v876 = vunpack.c.h.b16 %v519
    %v877 = vunpack.c.l.b16 %v520
    %v878 = vunpack.c.h.b16 %v520
    %v879 = vunpack.c.l.b16 %v521
    %v880 = vunpack.c.h.b16 %v521
    %v881 = vunpack.c.l.b16 %v522
    %v882 = vunpack.c.h.b16 %v522
    %v883 = vunpack.c.l.b16 %v523
    %v884 = vunpack.c.h.b16 %v523
    %v885 = vunpack.c.l.b16 %v524
    %v886 = vunpack.c.h.b16 %v524
    %v887 = vunpack.c.l.b16 %v525
    %v888 = vunpack.c.h.b16 %v525
    %v889 = vunpack.c.l.b16 %v526
    %v890 = vunpack.c.h.b16 %v526
    %v891 = vunpack.c.l.b16 %v527
    %v892 = vunpack.c.h.b16 %v527
    %v893 = vunpack.c.l.b16 %v528
    %v894 = vunpack.c.h.b16 %v528
    %v895 = vunpack.c.l.b16 %v529
    %v896 = vunpack.c.h.b16 %v529
    %v897 = vunpack.c.l.b16 %v530
    %v898 = vunpack.c.h.b16 %v530
    %v899 = vunpack.c.l.b16 %v531
    %v900 = vunpack.c.h.b16 %v531
    %v901 = vunpack.c.l.b16 %v532
    %v902 = vunpack.c.h.b16 %v532
    %v903 = vunpack.c.l.b16 %v533
    %v904 = vunpack.c.h.b16 %v533
    %v905 = vunpack.c.l.b16 %v534
    %v906 = vunpack.c.h.b16 %v534
    %v907 = vunpack.c.l.b16 %v535
    %v908 = vunpack.c.h.b16 %v535
    %v909 = vunpack.c.l.b16 %v536
    %v910 = vunpack.c.h.b16 %v536
    %v911 = vunpack.c.l.b16 %v537
    %v912 = vunpack.c.h.b16 %v537
    %v913 = vunpack.c.l.b16 %v538
    %v914 = vunpack.c.h.b16 %v538
    %v915 = vunpack.c.l.b16 %v539
    %v916 = vunpack.c.h.b16 %v539
    %v917 = vunpack.c.l.b16 %v540
    %v918 = vunpack.c.h.b16 %v540
    %v919 = vunpack.c.l.b16 %v541
    %v920 = vunpack.c.h.b16 %v541
    %v921 = vunpack.c.l.b16 %v542
    %v922 = vunpack.c.h.b16 %v542
    %v923 = vunpack.c.l.b16 %v543
    %v924 = vunpack.c.h.b16 %v543
    %v925 = vunpack.c.l.b16 %v544
    %v926 = vunpack.c.h.b16 %v544
    %v927 = vunpack.c.l.b16 %v545
    %v928 = vunpack.c.h.b16 %v545
    %v929 = vunpack.c.l.b16 %v546
    %v930 = vunpack.c.h.b16 %v546
    %v931 = vunpack.c.l.b16 %v547
    %v932 = vunpack.c.h.b16 %v547
    %v933 = vunpack.c.l.b16 %v548
    %v934 = vunpack.c.h.b16 %v548
    %v935 = vunpack.c.l.b16 %v549
    %v936 = vunpack.c.h.b16 %v549
    %v937 = vunpack.c.l.b16 %v550
    %v938 = vunpack.c.h.b16 %v550
    %v939 = vunpack.c.l.b16 %v551
    %v940 = vunpack.c.h.b16 %v551
    %v941 = vunpack.c.l.b16 %v552
    %v942 = vunpack.c.h.b16 %v552
    %v943 = vunpack.c.l.b16 %v553
    %v944 = vunpack.c.h.b16 %v553
    %v945 = vunpack.c.l.b16 %v554
    %v946 = vunpack.c.h.b16 %v554
    %v947 = vunpack.c.l.b16 %v555
    %v948 = vunpack.c.h.b16 %v555
    %v949 = vunpack.c.l.b16 %v556
    %v950 = vunpack.c.h.b16 %v556
    %v951 = vunpack.c.l.b16 %v557
    %v952 = vunpack.c.h.b16 %v557
    %v953 = vunpack.c.l.b16 %v558
    %v954 = vunpack.c.h.b16 %v558
    %v955 = vunpack.c.l.b16 %v559
    %v956 = vunpack.c.h.b16 %v559
    %v957 = vunpack.c.l.b16 %v560
    %v958 = vunpack.c.h.b16 %v560
    %v959 = vunpack.c.l.b16 %v561
    %v960 = vunpack.c.h.b16 %v561
    %v961 = vunpack.c.l.b16 %v562
    %v962 = vunpack.c.h.b16 %v562
    %v963 = vunpack.c.l.b16 %v563
    %v964 = vunpack.c.h.b16 %v563
    %v965 = vunpack.c.l.b16 %v564
    %v966 = vunpack.c.h.b16 %v564
    %v967 = vunpack.c.l.b16 %v565
    %v968 = vunpack.c.h.b16 %v565
    %v969 = vunpack.c.l.b16 %v566
    %v970 = vunpack.c.h.b16 %v566
    %v971 = vunpack.c.l.b16 %v567
    %v972 = vunpack.c.h.b16 %v567
    %v973 = vunpack.c.l.b16 %v568
    %v974 = vunpack.c.h.b16 %v568
    %v975 = vpack.c.b16 %v723, %v719
    %v976 = vpack.c.b16 %v724, %v720
    %v977 = vpack.c.b16 %v725, %v721
    %v978 = vpack.c.b16 %v726, %v722
    %v979 = vpack.c.b16 %v731, %v727
    %v980 = vpack.c.b16 %v732, %v728
    %v981 = vpack.c.b16 %v733, %v729
    %v982 = vpack.c.b16 %v734, %v730
    %v983 = vpack.c.b16 %v739, %v735
    %v984 = vpack.c.b16 %v740, %v736
    %v985 = vpack.c.b16 %v741, %v737
    %v986 = vpack.c.b16 %v742, %v738
    %v987 = vpack.c.b16 %v747, %v743
    %v988 = vpack.c.b16 %v748, %v744
    %v989 = vpack.c.b16 %v749, %v745
    %v990 = vpack.c.b16 %v750, %v746
    %v991 = vpack.c.b16 %v755, %v751
    %v992 = vpack.c.b16 %v756, %v752
    %v993 = vpack.c.b16 %v757, %v753
    %v994 = vpack.c.b16 %v758, %v754
    %v995 = vpack.c.b16 %v763, %v759
    %v996 = vpack.c.b16 %v764, %v760
    %v997 = vpack.c.b16 %v765, %v761
    %v998 = vpack.c.b16 %v766, %v762
    %v999 = vpack.c.b16 %v771, %v767
    %v1000 = vpack.c.b16 %v772, %v768
    %v1001 = vpack.c.b16 %v773, %v769
    %v1002 = vpack.c.b16 %v774, %v770
    %v1003 = vpack.c.b16 %v779, %v775
    %v1004 = vpack.c.b16 %v780, %v776
    %v1005 = vpack.c.b16 %v781, %v777
    %v1006 = vpack.c.b16 %v782, %v778
    %v1007 = vpack.c.b16 %v787, %v783
    %v1008 = vpack.c.b16 %v788, %v784
    %v1009 = vpack.c.b16 %v789, %v785
    %v1010 = vpack.c.b16 %v790, %v786
    %v1011 = vpack.c.b16 %v795, %v791
    %v1012 = vpack.c.b16 %v796, %v792
    %v1013 = vpack.c.b16 %v797, %v793
    %v1014 = vpack.c.b16 %v798, %v794
    %v1015 = vpack.c.b16 %v803, %v799
    %v1016 = vpack.c.b16 %v804, %v800
    %v1017 = vpack.c.b16 %v805, %v801
    %v1018 = vpack.c.b16 %v806, %v802
    %v1019 = vpack.c.b16 %v811, %v807
    %v1020 = vpack.c.b16 %v812, %v808
    %v1021 = vpack.c.b16 %v813, %v809
    %v1022 = vpack.c.b16 %v814, %v810
    %v1023 = vpack.c.b16 %v819, %v815
    %v1024 = vpack.c.b16 %v820, %v816
    %v1025 = vpack.c.b16 %v821, %v817
    %v1026 = vpack.c.b16 %v822, %v818
    %v1027 = vpack.c.b16 %v827, %v823
    %v1028 = vpack.c.b16 %v828, %v824
    %v1029 = vpack.c.b16 %v829, %v825
    %v1030 = vpack.c.b16 %v830, %v826
    %v1031 = vpack.c.b16 %v835, %v831
    %v1032 = vpack.c.b16 %v836, %v832
    %v1033 = vpack.c.b16 %v837, %v833
    %v1034 = vpack.c.b16 %v838, %v834
    %v1035 = vpack.c.b16 %v843, %v839
    %v1036 = vpack.c.b16 %v844, %v840
    %v1037 = vpack.c.b16 %v845, %v841
    %v1038 = vpack.c.b16 %v846, %v842
    %v1039 = vpack.c.b16 %v851, %v847
    %v1040 = vpack.c.b16 %v852, %v848
    %v1041 = vpack.c.b16 %v853, %v849
    %v1042 = vpack.c.b16 %v854, %v850
    %v1043 = vpack.c.b16 %v859, %v855
    %v1044 = vpack.c.b16 %v860, %v856
    %v1045 = vpack.c.b16 %v861, %v857
    %v1046 = vpack.c.b16 %v862, %v858
    %v1047 = vpack.c.b16 %v867, %v863
    %v1048 = vpack.c.b16 %v868, %v864
    %v1049 = vpack.c.b16 %v869, %v865
    %v1050 = vpack.c.b16 %v870, %v866
    %v1051 = vpack.c.b16 %v875, %v871
    %v1052 = vpack.c.b16 %v876, %v872
    %v1053 = vpack.c.b16 %v877, %v873
    %v1054 = vpack.c.b16 %v878, %v874
    %v1055 = vpack.c.b16 %v883, %v879
    %v1056 = vpack.c.b16 %v884, %v880
    %v1057 = vpack.c.b16 %v885, %v881
    %v1058 = vpack.c.b16 %v886, %v882
    %v1059 = vpack.c.b16 %v891, %v887
    %v1060 = vpack.c.b16 %v892, %v888
    %v1061 = vpack.c.b16 %v893, %v889
    %v1062 = vpack.c.b16 %v894, %v890
    %v1063 = vpack.c.b16 %v899, %v895
    %v1064 = vpack.c.b16 %v900, %v896
    %v1065 = vpack.c.b16 %v901, %v897
    %v1066 = vpack.c.b16 %v902, %v898
    %v1067 = vpack.c.b16 %v907, %v903
    %v1068 = vpack.c.b16 %v908, %v904
    %v1069 = vpack.c.b16 %v909, %v905
    %v1070 = vpack.c.b16 %v910, %v906
    %v1071 = vpack.c.b16 %v915, %v911
    %v1072 = vpack.c.b16 %v916, %v912
    %v1073 = vpack.c.b16 %v917, %v913
    %v1074 = vpack.c.b16 %v918, %v914
    %v1075 = vpack.c.b16 %v923, %v919
    %v1076 = vpack.c.b16 %v924, %v920
    %v1077 = vpack.c.b16 %v925, %v921
    %v1078 = vpack.c.b16 %v926, %v922
    %v1079 = vpack.c.b16 %v931, %v927
    %v1080 = vpack.c.b16 %v932, %v928
    %v1081 = vpack.c.b16 %v933, %v929
    %v1082 = vpack.c.b16 %v934, %v930
    %v1083 = vpack.c.b16 %v939, %v935
    %v1084 = vpack.c.b16 %v940, %v936
    %v1085 = vpack.c.b16 %v941, %v937
    %v1086 = vpack.c.b16 %v942, %v938
    %v1087 = vpack.c.b16 %v947, %v943
    %v1088 = vpack.c.b16 %v948, %v944
    %v1089 = vpack.c.b16 %v949, %v945
    %v1090 = vpack.c.b16 %v950, %v946
    %v1091 = vpack.c.b16 %v955, %v951
    %v1092 = vpack.c.b16 %v956, %v952
    %v1093 = vpack.c.b16 %v957, %v953
    %v1094 = vpack.c.b16 %v958, %v954
    %v1095 = vpack.c.b16 %v963, %v959
    %v1096 = vpack.c.b16 %v964, %v960
    %v1097 = vpack.c.b16 %v965, %v961
    %v1098 = vpack.c.b16 %v966, %v962
    %v1099 = vpack.c.b16 %v971, %v967
    %v1100 = vpack.c.b16 %v972, %v968
    %v1101 = vpack.c.b16 %v973, %v969
    %v1102 = vpack.c.b16 %v974, %v970
    %1231 = vmatprep.subr.bf16.mxu0 %v1004
    %1232 = vmatpush1.bf16.msra.mxu0 %v1003
    %1233 = vmatprep.subr.bf16.mxu0 %v1000
    %1234 = vmatpush1.bf16.msra.mxu0 %v999
    %1235 = vmatprep.subr.bf16.mxu0 %v996
    %1236 = vmatpush1.bf16.msra.mxu0 %v995
    %1237 = vmatprep.subr.bf16.mxu0 %v992
    %1238 = vmatpush1.bf16.msra.mxu0 %v991
    %1239 = vmatprep.subr.bf16.mxu0 %v988
    %1240 = vmatpush1.bf16.msra.mxu0 %v987
    %1241 = vmatprep.subr.bf16.mxu0 %v984
    %1242 = vmatpush1.bf16.msra.mxu0 %v983
    %1243 = vmatprep.subr.bf16.mxu0 %v980
    %1244 = vmatpush1.bf16.msra.mxu0 %v979
    %1245 = vmatprep.subr.bf16.mxu0 %v976
    %1246 = vmatpush1.bf16.msra.mxu0 %v975
    %1247 = vmatprep.subr.bf16.mxu0 %v1036
    %1248 = vmatpush2.bf16.msra.mxu0 %v1035
    %1249 = vmatprep.subr.bf16.mxu0 %v1032
    %1250 = vmatpush2.bf16.msra.mxu0 %v1031
    %1251 = vmatprep.subr.bf16.mxu0 %v1028
    %1252 = vmatpush2.bf16.msra.mxu0 %v1027
    %1253 = vmatprep.subr.bf16.mxu0 %v1024
    %1254 = vmatpush2.bf16.msra.mxu0 %v1023
    %1255 = vmatprep.subr.bf16.mxu0 %v1020
    %1256 = vmatpush2.bf16.msra.mxu0 %v1019
    %1257 = vmatprep.subr.bf16.mxu0 %v1016
    %1258 = vmatpush2.bf16.msra.mxu0 %v1015
    %1259 = vmatprep.subr.bf16.mxu0 %v1012
    %1260 = vmatpush2.bf16.msra.mxu0 %v1011
    %1261 = vmatprep.subr.bf16.mxu0 %v1008
    %1262 = vmatpush2.bf16.msra.mxu0 %v1007
    %1263 = vmatprep.mubr.bf16.mxu0 %v438
    %1264 = vmatmul.mubr.bf16.gmra.mxu0 %v437
    %v1265 = vpop.f32.mrf.mxu0
    %v1266 = vadd.f32 %v574, %v1265
    %v1267 = vpop.f32.mrf.mxu0
    %v1268 = vadd.f32 %v578, %v1267
    %v1269 = vpop.f32.mrf.mxu0
    %v1270 = vadd.f32 %v574, %v1269
    %v1271 = vpop.f32.mrf.mxu0
    %v1272 = vadd.f32 %v578, %v1271
    %1273 = vdwg.mxu0
    %1274 = vmatprep.subr.bf16.mxu0 %v1068
    %1275 = vmatpush1.bf16.msra.mxu0 %v1067
    %1276 = vmatprep.subr.bf16.mxu0 %v1064
    %1277 = vmatpush1.bf16.msra.mxu0 %v1063
    %1278 = vmatprep.subr.bf16.mxu0 %v1060
    %1279 = vmatpush1.bf16.msra.mxu0 %v1059
    %1280 = vmatprep.subr.bf16.mxu0 %v1056
    %1281 = vmatpush1.bf16.msra.mxu0 %v1055
    %1282 = vmatprep.subr.bf16.mxu0 %v1052
    %1283 = vmatpush1.bf16.msra.mxu0 %v1051
    %1284 = vmatprep.subr.bf16.mxu0 %v1048
    %1285 = vmatpush1.bf16.msra.mxu0 %v1047
    %1286 = vmatprep.subr.bf16.mxu0 %v1044
    %1287 = vmatpush1.bf16.msra.mxu0 %v1043
    %1288 = vmatprep.subr.bf16.mxu0 %v1040
    %1289 = vmatpush1.bf16.msra.mxu0 %v1039
    %1290 = vmatprep.subr.bf16.mxu0 %v1100
    %1291 = vmatpush2.bf16.msra.mxu0 %v1099
    %1292 = vmatprep.subr.bf16.mxu0 %v1096
    %1293 = vmatpush2.bf16.msra.mxu0 %v1095
    %1294 = vmatprep.subr.bf16.mxu0 %v1092
    %1295 = vmatpush2.bf16.msra.mxu0 %v1091
    %1296 = vmatprep.subr.bf16.mxu0 %v1088
    %1297 = vmatpush2.bf16.msra.mxu0 %v1087
    %1298 = vmatprep.subr.bf16.mxu0 %v1084
    %1299 = vmatpush2.bf16.msra.mxu0 %v1083
    %1300 = vmatprep.subr.bf16.mxu0 %v1080
    %1301 = vmatpush2.bf16.msra.mxu0 %v1079
    %1302 = vmatprep.subr.bf16.mxu0 %v1076
    %1303 = vmatpush2.bf16.msra.mxu0 %v1075
    %1304 = vmatprep.subr.bf16.mxu0 %v1072
    %1305 = vmatpush2.bf16.msra.mxu0 %v1071
    %1306 = vmatprep.mubr.bf16.mxu0 %v440
    %1307 = vmatmul.mubr.bf16.gmra.mxu0 %v439
    %v1308 = vpop.f32.mrf.mxu0
    %v1309 = vadd.f32 %v1266, %v1308
    %v1310 = vpop.f32.mrf.mxu0
    %v1311 = vadd.f32 %v1268, %v1310
    %v1312 = vpop.f32.mrf.mxu0
    %v1313 = vadd.f32 %v1270, %v1312
    %v1314 = vpop.f32.mrf.mxu0
    %v1315 = vadd.f32 %v1272, %v1314
    %1316 = vdwg.mxu0
    %1317 = vmatprep.subr.bf16.mxu0 %v1006
    %1318 = vmatpush1.bf16.msra.mxu0 %v1005
    %1319 = vmatprep.subr.bf16.mxu0 %v1002
    %1320 = vmatpush1.bf16.msra.mxu0 %v1001
    %1321 = vmatprep.subr.bf16.mxu0 %v998
    %1322 = vmatpush1.bf16.msra.mxu0 %v997
    %1323 = vmatprep.subr.bf16.mxu0 %v994
    %1324 = vmatpush1.bf16.msra.mxu0 %v993
    %1325 = vmatprep.subr.bf16.mxu0 %v990
    %1326 = vmatpush1.bf16.msra.mxu0 %v989
    %1327 = vmatprep.subr.bf16.mxu0 %v986
    %1328 = vmatpush1.bf16.msra.mxu0 %v985
    %1329 = vmatprep.subr.bf16.mxu0 %v982
    %1330 = vmatpush1.bf16.msra.mxu0 %v981
    %1331 = vmatprep.subr.bf16.mxu0 %v978
    %1332 = vmatpush1.bf16.msra.mxu0 %v977
    %1333 = vmatprep.subr.bf16.mxu0 %v1038
    %1334 = vmatpush2.bf16.msra.mxu0 %v1037
    %1335 = vmatprep.subr.bf16.mxu0 %v1034
    %1336 = vmatpush2.bf16.msra.mxu0 %v1033
    %1337 = vmatprep.subr.bf16.mxu0 %v1030
    %1338 = vmatpush2.bf16.msra.mxu0 %v1029
    %1339 = vmatprep.subr.bf16.mxu0 %v1026
    %1340 = vmatpush2.bf16.msra.mxu0 %v1025
    %1341 = vmatprep.subr.bf16.mxu0 %v1022
    %1342 = vmatpush2.bf16.msra.mxu0 %v1021
    %1343 = vmatprep.subr.bf16.mxu0 %v1018
    %1344 = vmatpush2.bf16.msra.mxu0 %v1017
    %1345 = vmatprep.subr.bf16.mxu0 %v1014
    %1346 = vmatpush2.bf16.msra.mxu0 %v1013
    %1347 = vmatprep.subr.bf16.mxu0 %v1010
    %1348 = vmatpush2.bf16.msra.mxu0 %v1009
    %1349 = vmatprep.mubr.bf16.mxu0 %v438
    %1350 = vmatmul.mubr.bf16.gmra.mxu0 %v437
    %v1351 = vpop.f32.mrf.mxu0
    %v1352 = vadd.f32 %v582, %v1351
    %v1353 = vpop.f32.mrf.mxu0
    %v1354 = vadd.f32 %v586, %v1353
    %v1355 = vpop.f32.mrf.mxu0
    %v1356 = vadd.f32 %v582, %v1355
    %v1357 = vpop.f32.mrf.mxu0
    %v1358 = vadd.f32 %v586, %v1357
    %1359 = vdwg.mxu0
    %1360 = vmatprep.subr.bf16.mxu0 %v1070
    %1361 = vmatpush1.bf16.msra.mxu0 %v1069
    %1362 = vmatprep.subr.bf16.mxu0 %v1066
    %1363 = vmatpush1.bf16.msra.mxu0 %v1065
    %1364 = vmatprep.subr.bf16.mxu0 %v1062
    %1365 = vmatpush1.bf16.msra.mxu0 %v1061
    %1366 = vmatprep.subr.bf16.mxu0 %v1058
    %1367 = vmatpush1.bf16.msra.mxu0 %v1057
    %1368 = vmatprep.subr.bf16.mxu0 %v1054
    %1369 = vmatpush1.bf16.msra.mxu0 %v1053
    %1370 = vmatprep.subr.bf16.mxu0 %v1050
    %1371 = vmatpush1.bf16.msra.mxu0 %v1049
    %1372 = vmatprep.subr.bf16.mxu0 %v1046
    %1373 = vmatpush1.bf16.msra.mxu0 %v1045
    %1374 = vmatprep.subr.bf16.mxu0 %v1042
    %1375 = vmatpush1.bf16.msra.mxu0 %v1041
    %1376 = vmatprep.subr.bf16.mxu0 %v1102
    %1377 = vmatpush2.bf16.msra.mxu0 %v1101
    %1378 = vmatprep.subr.bf16.mxu0 %v1098
    %1379 = vmatpush2.bf16.msra.mxu0 %v1097
    %1380 = vmatprep.subr.bf16.mxu0 %v1094
    %1381 = vmatpush2.bf16.msra.mxu0 %v1093
    %1382 = vmatprep.subr.bf16.mxu0 %v1090
    %1383 = vmatpush2.bf16.msra.mxu0 %v1089
    %1384 = vmatprep.subr.bf16.mxu0 %v1086
    %1385 = vmatpush2.bf16.msra.mxu0 %v1085
    %1386 = vmatprep.subr.bf16.mxu0 %v1082
    %1387 = vmatpush2.bf16.msra.mxu0 %v1081
    %1388 = vmatprep.subr.bf16.mxu0 %v1078
    %1389 = vmatpush2.bf16.msra.mxu0 %v1077
    %1390 = vmatprep.subr.bf16.mxu0 %v1074
    %1391 = vmatpush2.bf16.msra.mxu0 %v1073
    %1392 = vmatprep.mubr.bf16.mxu0 %v440
    %1393 = vmatmul.mubr.bf16.gmra.mxu0 %v439
    %v1394 = vpop.f32.mrf.mxu0
    %v1395 = vadd.f32 %v1352, %v1394
    %v1396 = vpop.f32.mrf.mxu0
    %v1397 = vadd.f32 %v1354, %v1396
    %v1398 = vpop.f32.mrf.mxu0
    %v1399 = vadd.f32 %v1356, %v1398
    %v1400 = vpop.f32.mrf.mxu0
    %v1401 = vadd.f32 %v1358, %v1400
    %1402 = vdwg.mxu0
    %v1403 = vmax.f32 %v1309, 0.0
    %v1404 = vmax.f32 %v1311, 0.0
    %v1405 = vmax.f32 %v1395, 0.0
    %v1406 = vmax.f32 %v1397, 0.0
    %v1407 = vmax.f32 %v1313, 0.0
    %v1408 = vmax.f32 %v1315, 0.0
    %v1409 = vmax.f32 %v1399, 0.0
    %v1410 = vmax.f32 %v1401, 0.0
    %v1411 = vpack.c.bf16 %v1407, %v1403
    %v1412 = vpack.c.bf16 %v1408, %v1404
    %v1413 = vpack.c.bf16 %v1409, %v1405
    %v1414 = vpack.c.bf16 %v1410, %v1406
    %v1415 = vld [vmem:[#allocation8] sm:$0xff]
    %v1416 = vld [vmem:[#allocation8 + $0x8] sm:$0xff]
    %v1417 = vld [vmem:[#allocation8 + $0x10] sm:$0xff]
    %v1418 = vld [vmem:[#allocation8 + $0x18] sm:$0xff]
    %v1419 = vld [vmem:[#allocation8 + $0x20] sm:$0xff]
    %v1420 = vld [vmem:[#allocation8 + $0x28] sm:$0xff]
    %v1421 = vld [vmem:[#allocation8 + $0x30] sm:$0xff]
    %v1422 = vld [vmem:[#allocation8 + $0x38] sm:$0xff]
    %v1423 = vld [vmem:[#allocation8 + $0x40] sm:$0xff]
    %v1424 = vld [vmem:[#allocation8 + $0x48] sm:$0xff]
    %v1425 = vld [vmem:[#allocation8 + $0x50] sm:$0xff]
    %v1426 = vld [vmem:[#allocation8 + $0x58] sm:$0xff]
    %v1427 = vld [vmem:[#allocation8 + $0x60] sm:$0xff]
    %v1428 = vld [vmem:[#allocation8 + $0x68] sm:$0xff]
    %v1429 = vld [vmem:[#allocation8 + $0x70] sm:$0xff]
    %v1430 = vld [vmem:[#allocation8 + $0x78] sm:$0xff]
    %v1431 = vld [vmem:[#allocation8 + $0x80] sm:$0xff]
    %v1432 = vld [vmem:[#allocation8 + $0x88] sm:$0xff]
    %v1433 = vld [vmem:[#allocation8 + $0x90] sm:$0xff]
    %v1434 = vld [vmem:[#allocation8 + $0x98] sm:$0xff]
    %v1435 = vld [vmem:[#allocation8 + $0xa0] sm:$0xff]
    %v1436 = vld [vmem:[#allocation8 + $0xa8] sm:$0xff]
    %v1437 = vld [vmem:[#allocation8 + $0xb0] sm:$0xff]
    %v1438 = vld [vmem:[#allocation8 + $0xb8] sm:$0xff]
    %v1439 = vld [vmem:[#allocation8 + $0xc0] sm:$0xff]
    %v1440 = vld [vmem:[#allocation8 + $0xc8] sm:$0xff]
    %v1441 = vld [vmem:[#allocation8 + $0xd0] sm:$0xff]
    %v1442 = vld [vmem:[#allocation8 + $0xd8] sm:$0xff]
    %v1443 = vld [vmem:[#allocation8 + $0xe0] sm:$0xff]
    %v1444 = vld [vmem:[#allocation8 + $0xe8] sm:$0xff]
    %v1445 = vld [vmem:[#allocation8 + $0xf0] sm:$0xff]
    %v1446 = vld [vmem:[#allocation8 + $0xf8] sm:$0xff]
    %v1447 = vld [vmem:[#allocation8 + $0x100] sm:$0xff]
    %v1448 = vld [vmem:[#allocation8 + $0x108] sm:$0xff]
    %v1449 = vld [vmem:[#allocation8 + $0x110] sm:$0xff]
    %v1450 = vld [vmem:[#allocation8 + $0x118] sm:$0xff]
    %v1451 = vld [vmem:[#allocation8 + $0x120] sm:$0xff]
    %v1452 = vld [vmem:[#allocation8 + $0x128] sm:$0xff]
    %v1453 = vld [vmem:[#allocation8 + $0x130] sm:$0xff]
    %v1454 = vld [vmem:[#allocation8 + $0x138] sm:$0xff]
    %v1455 = vld [vmem:[#allocation8 + $0x140] sm:$0xff]
    %v1456 = vld [vmem:[#allocation8 + $0x148] sm:$0xff]
    %v1457 = vld [vmem:[#allocation8 + $0x150] sm:$0xff]
    %v1458 = vld [vmem:[#allocation8 + $0x158] sm:$0xff]
    %v1459 = vld [vmem:[#allocation8 + $0x160] sm:$0xff]
    %v1460 = vld [vmem:[#allocation8 + $0x168] sm:$0xff]
    %v1461 = vld [vmem:[#allocation8 + $0x170] sm:$0xff]
    %v1462 = vld [vmem:[#allocation8 + $0x178] sm:$0xff]
    %v1463 = vld [vmem:[#allocation8 + $0x180] sm:$0xff]
    %v1464 = vld [vmem:[#allocation8 + $0x188] sm:$0xff]
    %v1465 = vld [vmem:[#allocation8 + $0x190] sm:$0xff]
    %v1466 = vld [vmem:[#allocation8 + $0x198] sm:$0xff]
    %v1467 = vld [vmem:[#allocation8 + $0x1a0] sm:$0xff]
    %v1468 = vld [vmem:[#allocation8 + $0x1a8] sm:$0xff]
    %v1469 = vld [vmem:[#allocation8 + $0x1b0] sm:$0xff]
    %v1470 = vld [vmem:[#allocation8 + $0x1b8] sm:$0xff]
    %v1471 = vld [vmem:[#allocation8 + $0x1c0] sm:$0xff]
    %v1472 = vld [vmem:[#allocation8 + $0x1c8] sm:$0xff]
    %v1473 = vld [vmem:[#allocation8 + $0x1d0] sm:$0xff]
    %v1474 = vld [vmem:[#allocation8 + $0x1d8] sm:$0xff]
    %v1475 = vld [vmem:[#allocation8 + $0x1e0] sm:$0xff]
    %v1476 = vld [vmem:[#allocation8 + $0x1e8] sm:$0xff]
    %v1477 = vld [vmem:[#allocation8 + $0x1f0] sm:$0xff]
    %v1478 = vld [vmem:[#allocation8 + $0x1f8] sm:$0xff]
    %v1479 = vld [vmem:[#allocation13 + $0x8] sm:$0x3]
    %v1481 = vlaneseq
    %v1482 = vshrl.u32 %v1481, 7
    %v1483 = vsub.s32 0, %v1482
    %v1484 = vrot.slane %v1479, %v1483
    %v1485 = vlaneseq
    %v1486 = vshrl.u32 %v1485, 7
    %v1487 = vsub.s32 1, %v1486
    %v1488 = vrot.slane %v1479, %v1487
    %v1555 = vunpack.c.l.b16 %v1415
    %v1556 = vunpack.c.h.b16 %v1415
    %v1557 = vunpack.c.l.b16 %v1416
    %v1558 = vunpack.c.h.b16 %v1416
    %v1559 = vunpack.c.l.b16 %v1417
    %v1560 = vunpack.c.h.b16 %v1417
    %v1561 = vunpack.c.l.b16 %v1418
    %v1562 = vunpack.c.h.b16 %v1418
    %v1563 = vunpack.c.l.b16 %v1419
    %v1564 = vunpack.c.h.b16 %v1419
    %v1565 = vunpack.c.l.b16 %v1420
    %v1566 = vunpack.c.h.b16 %v1420
    %v1567 = vunpack.c.l.b16 %v1421
    %v1568 = vunpack.c.h.b16 %v1421
    %v1569 = vunpack.c.l.b16 %v1422
    %v1570 = vunpack.c.h.b16 %v1422
    %v1571 = vunpack.c.l.b16 %v1423
    %v1572 = vunpack.c.h.b16 %v1423
    %v1573 = vunpack.c.l.b16 %v1424
    %v1574 = vunpack.c.h.b16 %v1424
    %v1575 = vunpack.c.l.b16 %v1425
    %v1576 = vunpack.c.h.b16 %v1425
    %v1577 = vunpack.c.l.b16 %v1426
    %v1578 = vunpack.c.h.b16 %v1426
    %v1579 = vunpack.c.l.b16 %v1427
    %v1580 = vunpack.c.h.b16 %v1427
    %v1581 = vunpack.c.l.b16 %v1428
    %v1582 = vunpack.c.h.b16 %v1428
    %v1583 = vunpack.c.l.b16 %v1429
    %v1584 = vunpack.c.h.b16 %v1429
    %v1585 = vunpack.c.l.b16 %v1430
    %v1586 = vunpack.c.h.b16 %v1430
    %v1587 = vunpack.c.l.b16 %v1431
    %v1588 = vunpack.c.h.b16 %v1431
    %v1589 = vunpack.c.l.b16 %v1432
    %v1590 = vunpack.c.h.b16 %v1432
    %v1591 = vunpack.c.l.b16 %v1433
    %v1592 = vunpack.c.h.b16 %v1433
    %v1593 = vunpack.c.l.b16 %v1434
    %v1594 = vunpack.c.h.b16 %v1434
    %v1595 = vunpack.c.l.b16 %v1435
    %v1596 = vunpack.c.h.b16 %v1435
    %v1597 = vunpack.c.l.b16 %v1436
    %v1598 = vunpack.c.h.b16 %v1436
    %v1599 = vunpack.c.l.b16 %v1437
    %v1600 = vunpack.c.h.b16 %v1437
    %v1601 = vunpack.c.l.b16 %v1438
    %v1602 = vunpack.c.h.b16 %v1438
    %v1603 = vunpack.c.l.b16 %v1439
    %v1604 = vunpack.c.h.b16 %v1439
    %v1605 = vunpack.c.l.b16 %v1440
    %v1606 = vunpack.c.h.b16 %v1440
    %v1607 = vunpack.c.l.b16 %v1441
    %v1608 = vunpack.c.h.b16 %v1441
    %v1609 = vunpack.c.l.b16 %v1442
    %v1610 = vunpack.c.h.b16 %v1442
    %v1611 = vunpack.c.l.b16 %v1443
    %v1612 = vunpack.c.h.b16 %v1443
    %v1613 = vunpack.c.l.b16 %v1444
    %v1614 = vunpack.c.h.b16 %v1444
    %v1615 = vunpack.c.l.b16 %v1445
    %v1616 = vunpack.c.h.b16 %v1445
    %v1617 = vunpack.c.l.b16 %v1446
    %v1618 = vunpack.c.h.b16 %v1446
    %v1619 = vunpack.c.l.b16 %v1447
    %v1620 = vunpack.c.h.b16 %v1447
    %v1621 = vunpack.c.l.b16 %v1448
    %v1622 = vunpack.c.h.b16 %v1448
    %v1623 = vunpack.c.l.b16 %v1449
    %v1624 = vunpack.c.h.b16 %v1449
    %v1625 = vunpack.c.l.b16 %v1450
    %v1626 = vunpack.c.h.b16 %v1450
    %v1627 = vunpack.c.l.b16 %v1451
    %v1628 = vunpack.c.h.b16 %v1451
    %v1629 = vunpack.c.l.b16 %v1452
    %v1630 = vunpack.c.h.b16 %v1452
    %v1631 = vunpack.c.l.b16 %v1453
    %v1632 = vunpack.c.h.b16 %v1453
    %v1633 = vunpack.c.l.b16 %v1454
    %v1634 = vunpack.c.h.b16 %v1454
    %v1635 = vunpack.c.l.b16 %v1455
    %v1636 = vunpack.c.h.b16 %v1455
    %v1637 = vunpack.c.l.b16 %v1456
    %v1638 = vunpack.c.h.b16 %v1456
    %v1639 = vunpack.c.l.b16 %v1457
    %v1640 = vunpack.c.h.b16 %v1457
    %v1641 = vunpack.c.l.b16 %v1458
    %v1642 = vunpack.c.h.b16 %v1458
    %v1643 = vunpack.c.l.b16 %v1459
    %v1644 = vunpack.c.h.b16 %v1459
    %v1645 = vunpack.c.l.b16 %v1460
    %v1646 = vunpack.c.h.b16 %v1460
    %v1647 = vunpack.c.l.b16 %v1461
    %v1648 = vunpack.c.h.b16 %v1461
    %v1649 = vunpack.c.l.b16 %v1462
    %v1650 = vunpack.c.h.b16 %v1462
    %v1651 = vunpack.c.l.b16 %v1463
    %v1652 = vunpack.c.h.b16 %v1463
    %v1653 = vunpack.c.l.b16 %v1464
    %v1654 = vunpack.c.h.b16 %v1464
    %v1655 = vunpack.c.l.b16 %v1465
    %v1656 = vunpack.c.h.b16 %v1465
    %v1657 = vunpack.c.l.b16 %v1466
    %v1658 = vunpack.c.h.b16 %v1466
    %v1659 = vunpack.c.l.b16 %v1467
    %v1660 = vunpack.c.h.b16 %v1467
    %v1661 = vunpack.c.l.b16 %v1468
    %v1662 = vunpack.c.h.b16 %v1468
    %v1663 = vunpack.c.l.b16 %v1469
    %v1664 = vunpack.c.h.b16 %v1469
    %v1665 = vunpack.c.l.b16 %v1470
    %v1666 = vunpack.c.h.b16 %v1470
    %v1667 = vunpack.c.l.b16 %v1471
    %v1668 = vunpack.c.h.b16 %v1471
    %v1669 = vunpack.c.l.b16 %v1472
    %v1670 = vunpack.c.h.b16 %v1472
    %v1671 = vunpack.c.l.b16 %v1473
    %v1672 = vunpack.c.h.b16 %v1473
    %v1673 = vunpack.c.l.b16 %v1474
    %v1674 = vunpack.c.h.b16 %v1474
    %v1675 = vunpack.c.l.b16 %v1475
    %v1676 = vunpack.c.h.b16 %v1475
    %v1677 = vunpack.c.l.b16 %v1476
    %v1678 = vunpack.c.h.b16 %v1476
    %v1679 = vunpack.c.l.b16 %v1477
    %v1680 = vunpack.c.h.b16 %v1477
    %v1681 = vunpack.c.l.b16 %v1478
    %v1682 = vunpack.c.h.b16 %v1478
    %v1683 = vpack.c.b16 %v1557, %v1555
    %v1684 = vpack.c.b16 %v1558, %v1556
    %v1685 = vpack.c.b16 %v1561, %v1559
    %v1686 = vpack.c.b16 %v1562, %v1560
    %v1687 = vpack.c.b16 %v1565, %v1563
    %v1688 = vpack.c.b16 %v1566, %v1564
    %v1689 = vpack.c.b16 %v1569, %v1567
    %v1690 = vpack.c.b16 %v1570, %v1568
    %v1691 = vpack.c.b16 %v1573, %v1571
    %v1692 = vpack.c.b16 %v1574, %v1572
    %v1693 = vpack.c.b16 %v1577, %v1575
    %v1694 = vpack.c.b16 %v1578, %v1576
    %v1695 = vpack.c.b16 %v1581, %v1579
    %v1696 = vpack.c.b16 %v1582, %v1580
    %v1697 = vpack.c.b16 %v1585, %v1583
    %v1698 = vpack.c.b16 %v1586, %v1584
    %v1699 = vpack.c.b16 %v1589, %v1587
    %v1700 = vpack.c.b16 %v1590, %v1588
    %v1701 = vpack.c.b16 %v1593, %v1591
    %v1702 = vpack.c.b16 %v1594, %v1592
    %v1703 = vpack.c.b16 %v1597, %v1595
    %v1704 = vpack.c.b16 %v1598, %v1596
    %v1705 = vpack.c.b16 %v1601, %v1599
    %v1706 = vpack.c.b16 %v1602, %v1600
    %v1707 = vpack.c.b16 %v1605, %v1603
    %v1708 = vpack.c.b16 %v1606, %v1604
    %v1709 = vpack.c.b16 %v1609, %v1607
    %v1710 = vpack.c.b16 %v1610, %v1608
    %v1711 = vpack.c.b16 %v1613, %v1611
    %v1712 = vpack.c.b16 %v1614, %v1612
    %v1713 = vpack.c.b16 %v1617, %v1615
    %v1714 = vpack.c.b16 %v1618, %v1616
    %v1715 = vpack.c.b16 %v1621, %v1619
    %v1716 = vpack.c.b16 %v1622, %v1620
    %v1717 = vpack.c.b16 %v1625, %v1623
    %v1718 = vpack.c.b16 %v1626, %v1624
    %v1719 = vpack.c.b16 %v1629, %v1627
    %v1720 = vpack.c.b16 %v1630, %v1628
    %v1721 = vpack.c.b16 %v1633, %v1631
    %v1722 = vpack.c.b16 %v1634, %v1632
    %v1723 = vpack.c.b16 %v1637, %v1635
    %v1724 = vpack.c.b16 %v1638, %v1636
    %v1725 = vpack.c.b16 %v1641, %v1639
    %v1726 = vpack.c.b16 %v1642, %v1640
    %v1727 = vpack.c.b16 %v1645, %v1643
    %v1728 = vpack.c.b16 %v1646, %v1644
    %v1729 = vpack.c.b16 %v1649, %v1647
    %v1730 = vpack.c.b16 %v1650, %v1648
    %v1731 = vpack.c.b16 %v1653, %v1651
    %v1732 = vpack.c.b16 %v1654, %v1652
    %v1733 = vpack.c.b16 %v1657, %v1655
    %v1734 = vpack.c.b16 %v1658, %v1656
    %v1735 = vpack.c.b16 %v1661, %v1659
    %v1736 = vpack.c.b16 %v1662, %v1660
    %v1737 = vpack.c.b16 %v1665, %v1663
    %v1738 = vpack.c.b16 %v1666, %v1664
    %v1739 = vpack.c.b16 %v1669, %v1667
    %v1740 = vpack.c.b16 %v1670, %v1668
    %v1741 = vpack.c.b16 %v1673, %v1671
    %v1742 = vpack.c.b16 %v1674, %v1672
    %v1743 = vpack.c.b16 %v1677, %v1675
    %v1744 = vpack.c.b16 %v1678, %v1676
    %v1745 = vpack.c.b16 %v1681, %v1679
    %v1746 = vpack.c.b16 %v1682, %v1680
    %1811 = vmatprep.subr.bf16.mxu0 %v1698
    %1812 = vmatpush1.bf16.msra.mxu0 %v1697
    %1813 = vmatprep.subr.bf16.mxu0 %v1696
    %1814 = vmatpush1.bf16.msra.mxu0 %v1695
    %1815 = vmatprep.subr.bf16.mxu0 %v1694
    %1816 = vmatpush1.bf16.msra.mxu0 %v1693
    %1817 = vmatprep.subr.bf16.mxu0 %v1692
    %1818 = vmatpush1.bf16.msra.mxu0 %v1691
    %1819 = vmatprep.subr.bf16.mxu0 %v1690
    %1820 = vmatpush1.bf16.msra.mxu0 %v1689
    %1821 = vmatprep.subr.bf16.mxu0 %v1688
    %1822 = vmatpush1.bf16.msra.mxu0 %v1687
    %1823 = vmatprep.subr.bf16.mxu0 %v1686
    %1824 = vmatpush1.bf16.msra.mxu0 %v1685
    %1825 = vmatprep.subr.bf16.mxu0 %v1684
    %1826 = vmatpush1.bf16.msra.mxu0 %v1683
    %1827 = vmatprep.subr.bf16.mxu0 %v1714
    %1828 = vmatpush2.bf16.msra.mxu0 %v1713
    %1829 = vmatprep.subr.bf16.mxu0 %v1712
    %1830 = vmatpush2.bf16.msra.mxu0 %v1711
    %1831 = vmatprep.subr.bf16.mxu0 %v1710
    %1832 = vmatpush2.bf16.msra.mxu0 %v1709
    %1833 = vmatprep.subr.bf16.mxu0 %v1708
    %1834 = vmatpush2.bf16.msra.mxu0 %v1707
    %1835 = vmatprep.subr.bf16.mxu0 %v1706
    %1836 = vmatpush2.bf16.msra.mxu0 %v1705
    %1837 = vmatprep.subr.bf16.mxu0 %v1704
    %1838 = vmatpush2.bf16.msra.mxu0 %v1703
    %1839 = vmatprep.subr.bf16.mxu0 %v1702
    %1840 = vmatpush2.bf16.msra.mxu0 %v1701
    %1841 = vmatprep.subr.bf16.mxu0 %v1700
    %1842 = vmatpush2.bf16.msra.mxu0 %v1699
    %1843 = vmatprep.mubr.bf16.mxu0 %v1412
    %1844 = vmatmul.mubr.bf16.gmra.mxu0 %v1411
    %v1845 = vpop.f32.mrf.mxu0
    %v1846 = vadd.f32 %v1484, %v1845
    %v1847 = vpop.f32.mrf.mxu0
    %v1848 = vadd.f32 %v1488, %v1847
    %v1849 = vpop.f32.mrf.mxu0
    %v1850 = vadd.f32 %v1484, %v1849
    %v1851 = vpop.f32.mrf.mxu0
    %v1852 = vadd.f32 %v1488, %v1851
    %1853 = vdwg.mxu0
    %1854 = vmatprep.subr.bf16.mxu0 %v1730
    %1855 = vmatpush1.bf16.msra.mxu0 %v1729
    %1856 = vmatprep.subr.bf16.mxu0 %v1728
    %1857 = vmatpush1.bf16.msra.mxu0 %v1727
    %1858 = vmatprep.subr.bf16.mxu0 %v1726
    %1859 = vmatpush1.bf16.msra.mxu0 %v1725
    %1860 = vmatprep.subr.bf16.mxu0 %v1724
    %1861 = vmatpush1.bf16.msra.mxu0 %v1723
    %1862 = vmatprep.subr.bf16.mxu0 %v1722
    %1863 = vmatpush1.bf16.msra.mxu0 %v1721
    %1864 = vmatprep.subr.bf16.mxu0 %v1720
    %1865 = vmatpush1.bf16.msra.mxu0 %v1719
    %1866 = vmatprep.subr.bf16.mxu0 %v1718
    %1867 = vmatpush1.bf16.msra.mxu0 %v1717
    %1868 = vmatprep.subr.bf16.mxu0 %v1716
    %1869 = vmatpush1.bf16.msra.mxu0 %v1715
    %1870 = vmatprep.subr.bf16.mxu0 %v1746
    %1871 = vmatpush2.bf16.msra.mxu0 %v1745
    %1872 = vmatprep.subr.bf16.mxu0 %v1744
    %1873 = vmatpush2.bf16.msra.mxu0 %v1743
    %1874 = vmatprep.subr.bf16.mxu0 %v1742
    %1875 = vmatpush2.bf16.msra.mxu0 %v1741
    %1876 = vmatprep.subr.bf16.mxu0 %v1740
    %1877 = vmatpush2.bf16.msra.mxu0 %v1739
    %1878 = vmatprep.subr.bf16.mxu0 %v1738
    %1879 = vmatpush2.bf16.msra.mxu0 %v1737
    %1880 = vmatprep.subr.bf16.mxu0 %v1736
    %1881 = vmatpush2.bf16.msra.mxu0 %v1735
    %1882 = vmatprep.subr.bf16.mxu0 %v1734
    %1883 = vmatpush2.bf16.msra.mxu0 %v1733
    %1884 = vmatprep.subr.bf16.mxu0 %v1732
    %1885 = vmatpush2.bf16.msra.mxu0 %v1731
    %1886 = vmatprep.mubr.bf16.mxu0 %v1414
    %1887 = vmatmul.mubr.bf16.gmra.mxu0 %v1413
    %v1888 = vpop.f32.mrf.mxu0
    %v1889 = vadd.f32 %v1846, %v1888
    %v1890 = vpop.f32.mrf.mxu0
    %v1891 = vadd.f32 %v1848, %v1890
    %v1892 = vpop.f32.mrf.mxu0
    %v1893 = vadd.f32 %v1850, %v1892
    %v1894 = vpop.f32.mrf.mxu0
    %v1895 = vadd.f32 %v1852, %v1894
    %1896 = vdwg.mxu0
    %v1897 = vmax.f32 %v1889, 0.0
    %v1898 = vmax.f32 %v1891, 0.0
    %v1899 = vmax.f32 %v1893, 0.0
    %v1900 = vmax.f32 %v1895, 0.0
    %v1901 = vpack.c.bf16 %v1899, %v1897
    %v1902 = vpack.c.bf16 %v1900, %v1898
    %v1903 = vld [vmem:[#allocation10] sm:$0xf]
    %v1904 = vld [vmem:[#allocation10 + $0x4] sm:$0xf]
    %v1905 = vld [vmem:[#allocation10 + $0x8] sm:$0xf]
    %v1906 = vld [vmem:[#allocation10 + $0xc] sm:$0xf]
    %v1907 = vld [vmem:[#allocation10 + $0x10] sm:$0xf]
    %v1908 = vld [vmem:[#allocation10 + $0x14] sm:$0xf]
    %v1909 = vld [vmem:[#allocation10 + $0x18] sm:$0xf]
    %v1910 = vld [vmem:[#allocation10 + $0x1c] sm:$0xf]
    %v1911 = vld [vmem:[#allocation10 + $0x20] sm:$0xf]
    %v1912 = vld [vmem:[#allocation10 + $0x24] sm:$0xf]
    %v1913 = vld [vmem:[#allocation10 + $0x28] sm:$0xf]
    %v1914 = vld [vmem:[#allocation10 + $0x2c] sm:$0xf]
    %v1915 = vld [vmem:[#allocation10 + $0x30] sm:$0xf]
    %v1916 = vld [vmem:[#allocation10 + $0x34] sm:$0xf]
    %v1917 = vld [vmem:[#allocation10 + $0x38] sm:$0xf]
    %v1918 = vld [vmem:[#allocation10 + $0x3c] sm:$0xf]
    %v1919 = vld [vmem:[#allocation10 + $0x40] sm:$0xf]
    %v1920 = vld [vmem:[#allocation10 + $0x44] sm:$0xf]
    %v1921 = vld [vmem:[#allocation10 + $0x48] sm:$0xf]
    %v1922 = vld [vmem:[#allocation10 + $0x4c] sm:$0xf]
    %v1923 = vld [vmem:[#allocation10 + $0x50] sm:$0xf]
    %v1924 = vld [vmem:[#allocation10 + $0x54] sm:$0xf]
    %v1925 = vld [vmem:[#allocation10 + $0x58] sm:$0xf]
    %v1926 = vld [vmem:[#allocation10 + $0x5c] sm:$0xf]
    %v1927 = vld [vmem:[#allocation10 + $0x60] sm:$0xf]
    %v1928 = vld [vmem:[#allocation10 + $0x64] sm:$0xf]
    %v1929 = vld [vmem:[#allocation10 + $0x68] sm:$0xf]
    %v1930 = vld [vmem:[#allocation10 + $0x6c] sm:$0xf]
    %v1931 = vld [vmem:[#allocation10 + $0x70] sm:$0xf]
    %v1932 = vld [vmem:[#allocation10 + $0x74] sm:$0xf]
    %v1933 = vld [vmem:[#allocation10 + $0x78] sm:$0xf]
    %v1934 = vld [vmem:[#allocation10 + $0x7c] sm:$0xf]
    %v1935 = vld [vmem:[#allocation13 + $0xa] sm:$0x1]
    %v1937 = vlaneseq
    %v1938 = vshrl.u32 %v1937, 7
    %v1939 = vsub.s32 0, %v1938
    %v1940 = vrot.slane %v1935, %v1939
    %v1974 = vunpack.c.l.b16 %v1903
    %v1975 = vunpack.c.l.b16 %v1904
    %v1976 = vunpack.c.l.b16 %v1905
    %v1977 = vunpack.c.l.b16 %v1906
    %v1978 = vunpack.c.l.b16 %v1907
    %v1979 = vunpack.c.l.b16 %v1908
    %v1980 = vunpack.c.l.b16 %v1909
    %v1981 = vunpack.c.l.b16 %v1910
    %v1982 = vunpack.c.l.b16 %v1911
    %v1983 = vunpack.c.l.b16 %v1912
    %v1984 = vunpack.c.l.b16 %v1913
    %v1985 = vunpack.c.l.b16 %v1914
    %v1986 = vunpack.c.l.b16 %v1915
    %v1987 = vunpack.c.l.b16 %v1916
    %v1988 = vunpack.c.l.b16 %v1917
    %v1989 = vunpack.c.l.b16 %v1918
    %v1990 = vunpack.c.l.b16 %v1919
    %v1991 = vunpack.c.l.b16 %v1920
    %v1992 = vunpack.c.l.b16 %v1921
    %v1993 = vunpack.c.l.b16 %v1922
    %v1994 = vunpack.c.l.b16 %v1923
    %v1995 = vunpack.c.l.b16 %v1924
    %v1996 = vunpack.c.l.b16 %v1925
    %v1997 = vunpack.c.l.b16 %v1926
    %v1998 = vunpack.c.l.b16 %v1927
    %v1999 = vunpack.c.l.b16 %v1928
    %v2000 = vunpack.c.l.b16 %v1929
    %v2001 = vunpack.c.l.b16 %v1930
    %v2002 = vunpack.c.l.b16 %v1931
    %v2003 = vunpack.c.l.b16 %v1932
    %v2004 = vunpack.c.l.b16 %v1933
    %v2005 = vunpack.c.l.b16 %v1934
    %v2006 = vpack.c.b16 %v1975, %v1974
    %v2007 = vpack.c.b16 %v1977, %v1976
    %v2008 = vpack.c.b16 %v1979, %v1978
    %v2009 = vpack.c.b16 %v1981, %v1980
    %v2010 = vpack.c.b16 %v1983, %v1982
    %v2011 = vpack.c.b16 %v1985, %v1984
    %v2012 = vpack.c.b16 %v1987, %v1986
    %v2013 = vpack.c.b16 %v1989, %v1988
    %v2014 = vpack.c.b16 %v1991, %v1990
    %v2015 = vpack.c.b16 %v1993, %v1992
    %v2016 = vpack.c.b16 %v1995, %v1994
    %v2017 = vpack.c.b16 %v1997, %v1996
    %v2018 = vpack.c.b16 %v1999, %v1998
    %v2019 = vpack.c.b16 %v2001, %v2000
    %v2020 = vpack.c.b16 %v2003, %v2002
    %v2021 = vpack.c.b16 %v2005, %v2004
    %2038 = vmatprep.subr.bf16.mxu0 0
    %2039 = vmatpush1.bf16.msra.mxu0 %v2013
    %2040 = vmatprep.subr.bf16.mxu0 0
    %2041 = vmatpush1.bf16.msra.mxu0 %v2012
    %2042 = vmatprep.subr.bf16.mxu0 0
    %2043 = vmatpush1.bf16.msra.mxu0 %v2011
    %2044 = vmatprep.subr.bf16.mxu0 0
    %2045 = vmatpush1.bf16.msra.mxu0 %v2010
    %2046 = vmatprep.subr.bf16.mxu0 0
    %2047 = vmatpush1.bf16.msra.mxu0 %v2009
    %2048 = vmatprep.subr.bf16.mxu0 0
    %2049 = vmatpush1.bf16.msra.mxu0 %v2008
    %2050 = vmatprep.subr.bf16.mxu0 0
    %2051 = vmatpush1.bf16.msra.mxu0 %v2007
    %2052 = vmatprep.subr.bf16.mxu0 0
    %2053 = vmatpush1.bf16.msra.mxu0 %v2006
    %2054 = vmatprep.subr.bf16.mxu0 0
    %2055 = vmatpush2.bf16.msra.mxu0 %v2021
    %2056 = vmatprep.subr.bf16.mxu0 0
    %2057 = vmatpush2.bf16.msra.mxu0 %v2020
    %2058 = vmatprep.subr.bf16.mxu0 0
    %2059 = vmatpush2.bf16.msra.mxu0 %v2019
    %2060 = vmatprep.subr.bf16.mxu0 0
    %2061 = vmatpush2.bf16.msra.mxu0 %v2018
    %2062 = vmatprep.subr.bf16.mxu0 0
    %2063 = vmatpush2.bf16.msra.mxu0 %v2017
    %2064 = vmatprep.subr.bf16.mxu0 0
    %2065 = vmatpush2.bf16.msra.mxu0 %v2016
    %2066 = vmatprep.subr.bf16.mxu0 0
    %2067 = vmatpush2.bf16.msra.mxu0 %v2015
    %2068 = vmatprep.subr.bf16.mxu0 0
    %2069 = vmatpush2.bf16.msra.mxu0 %v2014
    %2070 = vmatprep.mubr.bf16.mxu0 %v1902
    %2071 = vmatmul.mubr.bf16.gmra.mxu0 %v1901
    %v2072 = vpop.f32.mrf.mxu0
    %v2073 = vadd.f32 %v1940, %v2072
    %v2074 = vpop.f32.mrf.mxu0
    %v2075 = vpop.f32.mrf.mxu0
    %v2076 = vadd.f32 %v1940, %v2075
    %v2077 = vpop.f32.mrf.mxu0
    %2078 = vdwg.mxu0
    %v2079 = vmax.f32 %v2073, 0.0
    %v2080 = vmax.f32 %v2076, 0.0
    %v2081 = vpack.c.bf16 %v2080, %v2079
    %v2082 = vld [vmem:[#allocation11] sm:$0xf]
    %v2083 = vld [vmem:[#allocation11 + $0x4] sm:$0xf]
    %v2084 = vld [vmem:[#allocation11 + $0x8] sm:$0xf]
    %v2085 = vld [vmem:[#allocation11 + $0xc] sm:$0xf]
    %v2086 = vld [vmem:[#allocation11 + $0x10] sm:$0xf]
    %v2087 = vld [vmem:[#allocation11 + $0x14] sm:$0xf]
    %v2088 = vld [vmem:[#allocation11 + $0x18] sm:$0xf]
    %v2089 = vld [vmem:[#allocation11 + $0x1c] sm:$0xf]
    %v2090 = vld [vmem:[#allocation11 + $0x20] sm:$0xf]
    %v2091 = vld [vmem:[#allocation11 + $0x24] sm:$0xf]
    %v2092 = vld [vmem:[#allocation11 + $0x28] sm:$0xf]
    %v2093 = vld [vmem:[#allocation11 + $0x2c] sm:$0xf]
    %v2094 = vld [vmem:[#allocation11 + $0x30] sm:$0xf]
    %v2095 = vld [vmem:[#allocation11 + $0x34] sm:$0xf]
    %v2096 = vld [vmem:[#allocation11 + $0x38] sm:$0xf]
    %v2097 = vld [vmem:[#allocation11 + $0x3c] sm:$0xf]
    %v2098 = vld [vmem:[#allocation13 + $0xb] sm:$0x1]
    %v2100 = vlaneseq
    %v2101 = vshrl.u32 %v2100, 7
    %v2102 = vsub.s32 0, %v2101
    %v2103 = vrot.slane %v2098, %v2102
    %v2121 = vunpack.c.l.b16 %v2082
    %v2122 = vunpack.c.l.b16 %v2083
    %v2123 = vunpack.c.l.b16 %v2084
    %v2124 = vunpack.c.l.b16 %v2085
    %v2125 = vunpack.c.l.b16 %v2086
    %v2126 = vunpack.c.l.b16 %v2087
    %v2127 = vunpack.c.l.b16 %v2088
    %v2128 = vunpack.c.l.b16 %v2089
    %v2129 = vunpack.c.l.b16 %v2090
    %v2130 = vunpack.c.l.b16 %v2091
    %v2131 = vunpack.c.l.b16 %v2092
    %v2132 = vunpack.c.l.b16 %v2093
    %v2133 = vunpack.c.l.b16 %v2094
    %v2134 = vunpack.c.l.b16 %v2095
    %v2135 = vunpack.c.l.b16 %v2096
    %v2136 = vunpack.c.l.b16 %v2097
    %v2137 = vpack.c.b16 %v2122, %v2121
    %v2138 = vpack.c.b16 %v2124, %v2123
    %v2139 = vpack.c.b16 %v2126, %v2125
    %v2140 = vpack.c.b16 %v2128, %v2127
    %v2141 = vpack.c.b16 %v2130, %v2129
    %v2142 = vpack.c.b16 %v2132, %v2131
    %v2143 = vpack.c.b16 %v2134, %v2133
    %v2144 = vpack.c.b16 %v2136, %v2135
    %2153 = vmatprep.subr.bf16.mxu0 0
    %2154 = vmatpush1.bf16.msra.mxu0 %v2144
    %2155 = vmatprep.subr.bf16.mxu0 0
    %2156 = vmatpush1.bf16.msra.mxu0 %v2143
    %2157 = vmatprep.subr.bf16.mxu0 0
    %2158 = vmatpush1.bf16.msra.mxu0 %v2142
    %2159 = vmatprep.subr.bf16.mxu0 0
    %2160 = vmatpush1.bf16.msra.mxu0 %v2141
    %2161 = vmatprep.subr.bf16.mxu0 0
    %2162 = vmatpush1.bf16.msra.mxu0 %v2140
    %2163 = vmatprep.subr.bf16.mxu0 0
    %2164 = vmatpush1.bf16.msra.mxu0 %v2139
    %2165 = vmatprep.subr.bf16.mxu0 0
    %2166 = vmatpush1.bf16.msra.mxu0 %v2138
    %2167 = vmatprep.subr.bf16.mxu0 0
    %2168 = vmatpush1.bf16.msra.mxu0 %v2137
    %2169 = vmatprep.subr.bf16.mxu0 0
    %2170 = vmatpush2.bf16.msra.mxu0 0
    %2171 = vmatprep.subr.bf16.mxu0 0
    %2172 = vmatpush2.bf16.msra.mxu0 0
    %2173 = vmatprep.subr.bf16.mxu0 0
    %2174 = vmatpush2.bf16.msra.mxu0 0
    %2175 = vmatprep.subr.bf16.mxu0 0
    %2176 = vmatpush2.bf16.msra.mxu0 0
    %2177 = vmatprep.subr.bf16.mxu0 0
    %2178 = vmatpush2.bf16.msra.mxu0 0
    %2179 = vmatprep.subr.bf16.mxu0 0
    %2180 = vmatpush2.bf16.msra.mxu0 0
    %2181 = vmatprep.subr.bf16.mxu0 0
    %2182 = vmatpush2.bf16.msra.mxu0 0
    %2183 = vmatprep.subr.bf16.mxu0 0
    %2184 = vmatpush2.bf16.msra.mxu0 0
    %2185 = vmatprep.mubr.bf16.mxu0 0
    %2186 = vmatmul.mubr.bf16.gmra.mxu0 %v2081
    %v2187 = vpop.f32.mrf.mxu0
    %v2188 = vadd.f32 %v2103, %v2187
    %v2189 = vpop.f32.mrf.mxu0
    %v2190 = vpop.f32.mrf.mxu0
    %v2191 = vadd.f32 %v2103, %v2190
    %v2192 = vpop.f32.mrf.mxu0
    %2193 = vdwg.mxu0
    %v2194 = vtanh.pop %v2188
    %v2195 = vtanh.pop %v2191
    %v2196 = vmul.f32 %v2194, 0.397
    %v2197 = vmul.f32 %v2195, 0.397
    %v2198 = vpack.c.bf16 %v2197, %v2196
    %v2200 = vunpack.c.l.b16 %v2198
    %v2201 = vunpack.c.h.b16 %v2198
    %v2202 = vpack.c.b16 %v2200, %v2200
    %v2203 = vpack.c.b16 %v2201, %v2201
    %2206 = vst [vmem:[#allocation14] sm:$0xf] %v2202
    %2207 = vst [vmem:[#allocation14 + $0x4] sm:$0xf] %v2203
    // Predicated region
    $region58: #{tpu_custom_call.1} parent=1 // pred_check
      _
    $region59: #{tpu_custom_call.1} parent=1 // pred_check_branch
      %2209 = sbr.rel (0) target = $region61
    $region60: #{tpu_custom_call.1} parent=1 // pred_region
      %s2211 = ssub.s32 128, 128
      %2212 = vsyncadd [#allocation4], %s2211
      %s2213 = sshll.u32 [#allocation14], 4
      %s2214 = int_to_ptr.vmem [resolvable:$true] %s2213
      %2219 = dma.vmem_to_hbm [thread:$0]  %s2214, 128, %s7, [#allocation4], 64, 64, 4
    $region61: #{tpu_custom_call.1} parent=1 // pred_fallthru
      _
    // Predicated region
    $region62: #{tpu_custom_call.1} parent=1 // pred_check
      _
    $region63: #{tpu_custom_call.1} parent=1 // pred_check_branch
      %2221 = sbr.rel (0) target = $region65
    $region64: #{tpu_custom_call.1} parent=1 // pred_region
      %2222 = dma.done [#allocation4], 128
    $region65: #{tpu_custom_call.1} parent=1 // pred_fallthru
      _
    %2223 = vsyncpa [#allocation3], 1
    %2224 = vsyncpa [#allocation6], 1
    %2225 = vsyncpa [#allocation9], 1
    %2226 = vsyncpa [#allocation12], 1
    %2227 = vsyncpa [#allocation4], 1

</llo_original>
